<compile_context>
chip_gen: v6e
topology: v6e:2x2x1
jax: 0.10.0
libtpu: 0.0.40
codegen_flags: <defaults>
</compile_context>

<pallas_src>
import numpy as np
import jax
import jax.numpy as jnp
from jax import lax
from jax.experimental import pallas as pl
from jax.experimental.pallas import tpu as pltpu


def _full_spec(shape):
    nd = len(shape)
    return pl.BlockSpec(shape, lambda b, _n=nd: (0,) * _n)


def relation_score_forward(support_x, query_x, support_label,
                           conv_w, conv_b, rel_w1, rel_b1, rel_w2, rel_b2):
    """support_x:[Ns,C,H,W] f32, query_x:[Nq,C,H,W] f32, support_label:[Ns] int."""
    ns, c, hgt, wid = support_x.shape
    nq = query_x.shape[0]
    co = conv_w.shape[0]
    hw = hgt * wid
    d = co * hw                       # embedding dim (torch flatten of [Co,H,W])
    hh = rel_w1.shape[0]              # relation-net hidden width
    btot = ns + nq

    # n_class from support_label.unique() -- data-dependent, resolved at trace time
    # on the host (changing the label set requires a retrace).
    lab = np.asarray(support_label)
    classes = np.unique(lab)                                        # sorted, like torch.unique
    nc = int(classes.size)
    oh = (lab[None, :] == classes[:, None]).astype(np.float32)      # [Nc, Ns]
    a_mat = jnp.asarray(oh / oh.sum(axis=1, keepdims=True))         # means = A @ support_emb

    # im2col (XLA glue): [B, C*9, H*W]; row ordering (c, kh, kw) matches
    # conv_w.reshape(Co, C*9); lane axis = H*W so the in-kernel GEMM output is lane-dense.
    x_all = jnp.concatenate([support_x, query_x], axis=0)
    xp = jnp.pad(x_all, ((0, 0), (0, 0), (1, 1), (1, 1)))
    taps = [xp[:, :, i:i + hgt, j:j + wid] for i in range(3) for j in range(3)]
    patches = jnp.stack(taps, axis=2).reshape(btot, c * 9, hw).astype(jnp.bfloat16)

    # One-time weight layout prep (bf16 MXU operands, lane-dense [D, Hh] layouts,
    # NCHW flatten ordering folded in here -- zero per-call cost).
    w_col = conv_w.reshape(co, c * 9).astype(jnp.bfloat16)           # [Co, C*9]
    cb = conv_b.reshape(co, 1).astype(jnp.float32)                   # [Co, 1]
    w1q = rel_w1[:, :d].T.astype(jnp.bfloat16)                       # [D, Hh] (query half)
    w1m = rel_w1[:, d:].T.astype(jnp.bfloat16)                       # [D, Hh] (class-mean half)
    b1 = rel_b1.reshape(1, hh).astype(jnp.float32)
    w2 = rel_w2.reshape(1, hh).astype(jnp.float32)
    b2 = rel_b2.reshape(1, 1).astype(jnp.float32)

    def kernel(p_ref, wc_ref, cb_ref, a_ref, w1q_ref, w1m_ref, b1_ref, w2_ref,
               b2_ref, o_ref, emb_ref):
        b = pl.program_id(0)

        # ---- backbone: conv-as-GEMM (lane-dense [Co, H*W]) + bias + ReLU ----
        conv = jnp.dot(wc_ref[...], p_ref[0],
                       preferred_element_type=jnp.float32)            # [Co, HW] f32
        conv = jnp.maximum(conv + cb_ref[...], 0.0)

        # Flatten (co, hw) into the D lane axis of the resident embedding scratch
        # (torch NCHW flatten order); each chunk is a 128-aligned 256-lane store.
        for ch in range(co):
            emb_ref[pl.ds(b, 1), pl.ds(ch * hw, hw)] = conv[ch:ch + 1, :]

        # ---- relation head: once, after the last embedding is VMEM-resident ----
        @pl.when(b == pl.num_programs(0) - 1)
        def _():
            sup = emb_ref[pl.ds(0, ns), :]                             # [Ns, D]
            qry = emb_ref[pl.ds(ns, nq), :]                            # [Nq, D]
            means = jnp.dot(a_ref[...], sup,
                            preferred_element_type=jnp.float32)        # [Nc, D]
            q1 = jnp.dot(qry.astype(jnp.bfloat16), w1q_ref[...],
                         preferred_element_type=jnp.float32)            # [Nq, Hh]
            m1 = jnp.dot(means.astype(jnp.bfloat16), w1m_ref[...],
                         preferred_element_type=jnp.float32)            # [Nc, Hh]
            b1v = b1_ref[...]                                           # [1, Hh]
            w2v = w2_ref[...]                                           # [1, Hh]
            cols = []
            for cls in range(nc):                                       # static unroll
                h = jnp.maximum(q1 + m1[cls:cls + 1, :] + b1v, 0.0)     # [Nq, Hh]
                s = jnp.sum(h * w2v, axis=-1, keepdims=True) + b2_ref[...]
                cols.append(s)                                          # [Nq, 1]
            logits = jnp.concatenate(cols, axis=1)                      # [Nq, Nc]
            # sigmoid; divide uses the EUP slot via approx reciprocal
            o_ref[...] = pl.reciprocal(1.0 + jnp.exp(-logits), approx=True)

    scores = pl.pallas_call(
        kernel,
        grid=(btot,),
        in_specs=[
            pl.BlockSpec((1, c * 9, hw), lambda b: (b, 0, 0)),   # per-image im2col patches
            _full_spec((co, c * 9)),                             # conv weight (bf16)
            _full_spec((co, 1)),                                 # conv bias
            _full_spec((nc, ns)),                                # normalized class-mean matrix
            _full_spec((d, hh)),                                 # W1 query half (bf16)
            _full_spec((d, hh)),                                 # W1 class-mean half (bf16)
            _full_spec((1, hh)),                                 # b1
            _full_spec((1, hh)),                                 # w2
            _full_spec((1, 1)),                                  # b2
        ],
        out_specs=_full_spec((nq, nc)),
        out_shape=jax.ShapeDtypeStruct((nq, nc), jnp.float32),
        scratch_shapes=[pltpu.VMEM((btot, d), jnp.float32)],     # resident embeddings (never hit HBM)
        compiler_params=pltpu.CompilerParams(
            dimension_semantics=("arbitrary",),                  # scratch/output carried across steps
            vmem_limit_bytes=32 * 1024 * 1024,
        ),
    )(patches, w_col, cb, a_mat, w1q, w1m, b1, w2, b2)

    return scores.reshape(nq, nc, 1, 1)   # torch.stack twice -> [Nq, Nc, 1, 1]


def reference_forward(support_x, query_x, support_label,
                      conv_w, conv_b, rel_w1, rel_b1, rel_w2, rel_b2):
    """Pure-JAX f32 mirror of the PyTorch forward (loops and all)."""
    def backbone(x):
        out = lax.conv_general_dilated(
            x, conv_w, window_strides=(1, 1), padding="SAME",
            dimension_numbers=("NCHW", "OIHW", "NCHW"))
        out = jnp.maximum(out + conv_b[None, :, None, None], 0.0)
        return out.reshape(out.shape[0], -1)

    se = backbone(support_x)
    qe = backbone(query_x)
    lab = np.asarray(support_label)
    classes = np.unique(lab)
    means = jnp.stack([se[np.nonzero(lab == cl)[0]].mean(axis=0) for cl in classes])
    all_scores = []
    for q in range(qe.shape[0]):
        row = []
        for cidx in range(means.shape[0]):
            v = jnp.concatenate([qe[q], means[cidx]])[None, :]          # [1, 2D]
            h = jnp.maximum(v @ rel_w1.T + rel_b1, 0.0)                 # Linear + ReLU
            s = jax.nn.sigmoid(h @ rel_w2.T + rel_b2)                   # Linear(Hh,1) + Sigmoid
            row.append(s)                                               # [1, 1]
        all_scores.append(jnp.stack(row))                               # [Nc, 1, 1]
    return jnp.stack(all_scores)                                        # [Nq, Nc, 1, 1]


if __name__ == "__main__":
    key = jax.random.PRNGKey(0)
    kxs, kxq, kcw, kcb, kw1, kb1, kw2, kb2 = jax.random.split(key, 8)

    # Small few-shot episode: 2-way / 2-shot support, 3 queries.
    C, H, W = 4, 16, 16
    Co = 8
    HIDDEN = 128                     # relation-net hidden width (lane-dense: 128)
    NS, NQ = 4, 3
    D = Co * H * W

    support_x = jax.random.normal(kxs, (NS, C, H, W), dtype=jnp.float32)
    query_x = jax.random.normal(kxq, (NQ, C, H, W), dtype=jnp.float32)
    support_label = jnp.array([1, 0, 0, 1], dtype=jnp.int32)

    conv_w = 0.1 * jax.random.normal(kcw, (Co, C, 3, 3), dtype=jnp.float32)
    conv_b = 0.1 * jax.random.normal(kcb, (Co,), dtype=jnp.float32)
    rel_w1 = 0.02 * jax.random.normal(kw1, (HIDDEN, 2 * D), dtype=jnp.float32)
    rel_b1 = 0.1 * jax.random.normal(kb1, (HIDDEN,), dtype=jnp.float32)
    rel_w2 = 0.05 * jax.random.normal(kw2, (1, HIDDEN), dtype=jnp.float32)
    rel_b2 = 0.05 * jax.random.normal(kb2, (1,), dtype=jnp.float32)

    out = relation_score_forward(support_x, query_x, support_label,
                                 conv_w, conv_b, rel_w1, rel_b1, rel_w2, rel_b2)
    out = jax.block_until_ready(out)

    n_class = int(np.unique(np.asarray(support_label)).size)
    assert out.shape == (NQ, n_class, 1, 1)
    assert bool(jnp.all(jnp.isfinite(out)))

    ref = reference_forward(support_x, query_x, support_label,
                            conv_w, conv_b, rel_w1, rel_b1, rel_w2, rel_b2)
    np.testing.assert_allclose(np.asarray(out), np.asarray(ref), atol=2e-2, rtol=0)
    print("KERNEL_OK")
</pallas_src>

<mosaic_0001>
module attributes {stable_mosaic.version = 11 : i64} {
  func.func @kernel(%arg0: i32, %arg1: memref<1x36x256xbf16, #tpu.memory_space<vmem>>, %arg2: memref<8x36xbf16, #tpu.memory_space<vmem>>, %arg3: memref<8x1xf32, #tpu.memory_space<vmem>>, %arg4: memref<2x4xf32, #tpu.memory_space<vmem>>, %arg5: memref<2048x128xbf16, #tpu.memory_space<vmem>>, %arg6: memref<2048x128xbf16, #tpu.memory_space<vmem>>, %arg7: memref<1x128xf32, #tpu.memory_space<vmem>>, %arg8: memref<1x128xf32, #tpu.memory_space<vmem>>, %arg9: memref<1x1xf32, #tpu.memory_space<vmem>>, %arg10: memref<3x2xf32, #tpu.memory_space<vmem>>, %arg11: memref<7x2048xf32, #tpu.memory_space<vmem>>) attributes {dimension_semantics = [#tpu.dimension_semantics<arbitrary>], iteration_bounds = array<i64: 7>, scalar_prefetch = 0 : i64, scratch_operands = 1 : i64, tpu.core_type = #tpu.core_type<tc>, window_params = [{transform_indices = @transform_0, window_bounds = array<i64: 1, 36, 256>}, {pipeline_mode = #tpu.pipeline_mode<synchronous>, transform_indices = @transform_1, window_bounds = array<i64: 8, 36>}, {pipeline_mode = #tpu.pipeline_mode<synchronous>, transform_indices = @transform_2, window_bounds = array<i64: 8, 1>}, {pipeline_mode = #tpu.pipeline_mode<synchronous>, transform_indices = @transform_3, window_bounds = array<i64: 2, 4>}, {pipeline_mode = #tpu.pipeline_mode<synchronous>, transform_indices = @transform_4, window_bounds = array<i64: 2048, 128>}, {pipeline_mode = #tpu.pipeline_mode<synchronous>, transform_indices = @transform_5, window_bounds = array<i64: 2048, 128>}, {pipeline_mode = #tpu.pipeline_mode<synchronous>, transform_indices = @transform_6, window_bounds = array<i64: 1, 128>}, {pipeline_mode = #tpu.pipeline_mode<synchronous>, transform_indices = @transform_7, window_bounds = array<i64: 1, 128>}, {pipeline_mode = #tpu.pipeline_mode<synchronous>, transform_indices = @transform_8, window_bounds = array<i64: 1, 1>}, {pipeline_mode = #tpu.pipeline_mode<synchronous>, transform_indices = @transform_9, window_bounds = array<i64: 3, 2>}]} {
    %c0 = arith.constant 0 : index
    %c0_0 = arith.constant 0 : index
    %0 = vector.load %arg2[%c0, %c0_0] : memref<8x36xbf16, #tpu.memory_space<vmem>>, vector<8x36xbf16>
    %c0_1 = arith.constant 0 : index
    %c0_2 = arith.constant 0 : index
    %c0_3 = arith.constant 0 : index
    %1 = vector.load %arg1[%c0_1, %c0_2, %c0_3] : memref<1x36x256xbf16, #tpu.memory_space<vmem>>, vector<1x36x256xbf16>
    %2 = vector.shape_cast %1 : vector<1x36x256xbf16> to vector<36x256xbf16>
    %cst = arith.constant dense<0.000000e+00> : vector<8x256xf32>
    %3 = tpu.matmul %0, %2, %cst {dimension_numbers = #tpu.dot_dimension_numbers<[1], [0], [0], [1], [0, 0, 1, 1], [], []>} : vector<8x36xbf16>, vector<36x256xbf16>, vector<8x256xf32> -> vector<8x256xf32>
    %c0_4 = arith.constant 0 : index
    %c0_5 = arith.constant 0 : index
    %4 = vector.load %arg3[%c0_4, %c0_5] : memref<8x1xf32, #tpu.memory_space<vmem>>, vector<8x1xf32>
    %5 = vector.broadcast %4 : vector<8x1xf32> to vector<8x256xf32>
    %6 = arith.addf %3, %5 : vector<8x256xf32>
    %cst_6 = arith.constant 0.000000e+00 : f32
    %7 = vector.broadcast %cst_6 : f32 to vector<8x256xf32>
    %8 = arith.maximumf %6, %7 : vector<8x256xf32>
    %9 = vector.extract_strided_slice %8 {offsets = [0, 0], sizes = [1, 256], strides = [1, 1]} : vector<8x256xf32> to vector<1x256xf32>
    %10 = arith.index_cast %arg0 : i32 to index
    %c0_7 = arith.constant 0 : index
    %11 = vector.load %arg11[%10, %c0_7] : memref<7x2048xf32, #tpu.memory_space<vmem>>, vector<1x256xf32>
    tpu.vector_store %arg11[%10, %c0_7], %9 {strides = array<i32>} : memref<7x2048xf32, #tpu.memory_space<vmem>>, vector<1x256xf32>,
    %12 = vector.extract_strided_slice %8 {offsets = [1, 0], sizes = [1, 256], strides = [1, 1]} : vector<8x256xf32> to vector<1x256xf32>
    %13 = arith.index_cast %arg0 : i32 to index
    %c256 = arith.constant 256 : index
    %14 = vector.load %arg11[%13, %c256] : memref<7x2048xf32, #tpu.memory_space<vmem>>, vector<1x256xf32>
    tpu.vector_store %arg11[%13, %c256], %12 {strides = array<i32>} : memref<7x2048xf32, #tpu.memory_space<vmem>>, vector<1x256xf32>,
    %15 = vector.extract_strided_slice %8 {offsets = [2, 0], sizes = [1, 256], strides = [1, 1]} : vector<8x256xf32> to vector<1x256xf32>
    %16 = arith.index_cast %arg0 : i32 to index
    %c512 = arith.constant 512 : index
    %17 = vector.load %arg11[%16, %c512] : memref<7x2048xf32, #tpu.memory_space<vmem>>, vector<1x256xf32>
    tpu.vector_store %arg11[%16, %c512], %15 {strides = array<i32>} : memref<7x2048xf32, #tpu.memory_space<vmem>>, vector<1x256xf32>,
    %18 = vector.extract_strided_slice %8 {offsets = [3, 0], sizes = [1, 256], strides = [1, 1]} : vector<8x256xf32> to vector<1x256xf32>
    %19 = arith.index_cast %arg0 : i32 to index
    %c768 = arith.constant 768 : index
    %20 = vector.load %arg11[%19, %c768] : memref<7x2048xf32, #tpu.memory_space<vmem>>, vector<1x256xf32>
    tpu.vector_store %arg11[%19, %c768], %18 {strides = array<i32>} : memref<7x2048xf32, #tpu.memory_space<vmem>>, vector<1x256xf32>,
    %21 = vector.extract_strided_slice %8 {offsets = [4, 0], sizes = [1, 256], strides = [1, 1]} : vector<8x256xf32> to vector<1x256xf32>
    %22 = arith.index_cast %arg0 : i32 to index
    %c1024 = arith.constant 1024 : index
    %23 = vector.load %arg11[%22, %c1024] : memref<7x2048xf32, #tpu.memory_space<vmem>>, vector<1x256xf32>
    tpu.vector_store %arg11[%22, %c1024], %21 {strides = array<i32>} : memref<7x2048xf32, #tpu.memory_space<vmem>>, vector<1x256xf32>,
    %24 = vector.extract_strided_slice %8 {offsets = [5, 0], sizes = [1, 256], strides = [1, 1]} : vector<8x256xf32> to vector<1x256xf32>
    %25 = arith.index_cast %arg0 : i32 to index
    %c1280 = arith.constant 1280 : index
    %26 = vector.load %arg11[%25, %c1280] : memref<7x2048xf32, #tpu.memory_space<vmem>>, vector<1x256xf32>
    tpu.vector_store %arg11[%25, %c1280], %24 {strides = array<i32>} : memref<7x2048xf32, #tpu.memory_space<vmem>>, vector<1x256xf32>,
    %27 = vector.extract_strided_slice %8 {offsets = [6, 0], sizes = [1, 256], strides = [1, 1]} : vector<8x256xf32> to vector<1x256xf32>
    %28 = arith.index_cast %arg0 : i32 to index
    %c1536 = arith.constant 1536 : index
    %29 = vector.load %arg11[%28, %c1536] : memref<7x2048xf32, #tpu.memory_space<vmem>>, vector<1x256xf32>
    tpu.vector_store %arg11[%28, %c1536], %27 {strides = array<i32>} : memref<7x2048xf32, #tpu.memory_space<vmem>>, vector<1x256xf32>,
    %30 = vector.extract_strided_slice %8 {offsets = [7, 0], sizes = [1, 256], strides = [1, 1]} : vector<8x256xf32> to vector<1x256xf32>
    %31 = arith.index_cast %arg0 : i32 to index
    %c1792 = arith.constant 1792 : index
    %32 = vector.load %arg11[%31, %c1792] : memref<7x2048xf32, #tpu.memory_space<vmem>>, vector<1x256xf32>
    tpu.vector_store %arg11[%31, %c1792], %30 {strides = array<i32>} : memref<7x2048xf32, #tpu.memory_space<vmem>>, vector<1x256xf32>,
    %c6_i32 = arith.constant 6 : i32
    %33 = arith.cmpi eq, %arg0, %c6_i32 : i32
    %34 = arith.extui %33 : i1 to i32
    %c0_i32 = arith.constant 0 : i32
    %35 = arith.cmpi ne, %34, %c0_i32 : i32
    scf.if %35 {
      %c0_8 = arith.constant 0 : index
      %c0_9 = arith.constant 0 : index
      %36 = vector.load %arg11[%c0_8, %c0_9] : memref<7x2048xf32, #tpu.memory_space<vmem>>, vector<4x2048xf32>
      %c4 = arith.constant 4 : index
      %c0_10 = arith.constant 0 : index
      %37 = vector.load %arg11[%c4, %c0_10] : memref<7x2048xf32, #tpu.memory_space<vmem>>, vector<3x2048xf32>
      %c0_11 = arith.constant 0 : index
      %c0_12 = arith.constant 0 : index
      %38 = vector.load %arg4[%c0_11, %c0_12] : memref<2x4xf32, #tpu.memory_space<vmem>>, vector<2x4xf32>
      %cst_13 = arith.constant dense<0.000000e+00> : vector<2x2048xf32>
      %39 = tpu.matmul %38, %36, %cst_13 {dimension_numbers = #tpu.dot_dimension_numbers<[1], [0], [0], [1], [0, 0, 1, 1], [], []>} : vector<2x4xf32>, vector<4x2048xf32>, vector<2x2048xf32> -> vector<2x2048xf32>
      %40 = arith.truncf %37 : vector<3x2048xf32> to vector<3x2048xbf16>
      %c0_14 = arith.constant 0 : index
      %c0_15 = arith.constant 0 : index
      %41 = vector.load %arg5[%c0_14, %c0_15] : memref<2048x128xbf16, #tpu.memory_space<vmem>>, vector<2048x128xbf16>
      %cst_16 = arith.constant dense<0.000000e+00> : vector<3x128xf32>
      %42 = tpu.matmul %40, %41, %cst_16 {dimension_numbers = #tpu.dot_dimension_numbers<[1], [0], [0], [1], [0, 0, 1, 1], [], []>} : vector<3x2048xbf16>, vector<2048x128xbf16>, vector<3x128xf32> -> vector<3x128xf32>
      %43 = arith.truncf %39 : vector<2x2048xf32> to vector<2x2048xbf16>
      %c0_17 = arith.constant 0 : index
      %c0_18 = arith.constant 0 : index
      %44 = vector.load %arg6[%c0_17, %c0_18] : memref<2048x128xbf16, #tpu.memory_space<vmem>>, vector<2048x128xbf16>
      %cst_19 = arith.constant dense<0.000000e+00> : vector<2x128xf32>
      %45 = tpu.matmul %43, %44, %cst_19 {dimension_numbers = #tpu.dot_dimension_numbers<[1], [0], [0], [1], [0, 0, 1, 1], [], []>} : vector<2x2048xbf16>, vector<2048x128xbf16>, vector<2x128xf32> -> vector<2x128xf32>
      %c0_20 = arith.constant 0 : index
      %c0_21 = arith.constant 0 : index
      %46 = vector.load %arg7[%c0_20, %c0_21] : memref<1x128xf32, #tpu.memory_space<vmem>>, vector<1x128xf32>
      %c0_22 = arith.constant 0 : index
      %c0_23 = arith.constant 0 : index
      %47 = vector.load %arg8[%c0_22, %c0_23] : memref<1x128xf32, #tpu.memory_space<vmem>>, vector<1x128xf32>
      %48 = vector.extract_strided_slice %45 {offsets = [0, 0], sizes = [1, 128], strides = [1, 1]} : vector<2x128xf32> to vector<1x128xf32>
      %49 = vector.broadcast %48 : vector<1x128xf32> to vector<3x128xf32>
      %50 = arith.addf %42, %49 : vector<3x128xf32>
      %51 = vector.broadcast %46 : vector<1x128xf32> to vector<3x128xf32>
      %52 = arith.addf %50, %51 : vector<3x128xf32>
      %cst_24 = arith.constant 0.000000e+00 : f32
      %53 = vector.broadcast %cst_24 : f32 to vector<3x128xf32>
      %54 = arith.maximumf %52, %53 : vector<3x128xf32>
      %55 = vector.broadcast %47 : vector<1x128xf32> to vector<3x128xf32>
      %56 = arith.mulf %54, %55 : vector<3x128xf32>
      %cst_25 = arith.constant dense<0.000000e+00> : vector<3xf32>
      %57 = vector.multi_reduction <add>, %56, %cst_25 [1] : vector<3x128xf32> to vector<3xf32>
      %58 = vector.shape_cast %57 : vector<3xf32> to vector<3x1xf32>
      %c0_26 = arith.constant 0 : index
      %c0_27 = arith.constant 0 : index
      %59 = vector.load %arg9[%c0_26, %c0_27] : memref<1x1xf32, #tpu.memory_space<vmem>>, vector<1x1xf32>
      %60 = vector.broadcast %59 : vector<1x1xf32> to vector<3x1xf32>
      %61 = arith.addf %58, %60 : vector<3x1xf32>
      %62 = vector.extract_strided_slice %45 {offsets = [1, 0], sizes = [1, 128], strides = [1, 1]} : vector<2x128xf32> to vector<1x128xf32>
      %63 = vector.broadcast %62 : vector<1x128xf32> to vector<3x128xf32>
      %64 = arith.addf %42, %63 : vector<3x128xf32>
      %65 = vector.broadcast %46 : vector<1x128xf32> to vector<3x128xf32>
      %66 = arith.addf %64, %65 : vector<3x128xf32>
      %cst_28 = arith.constant 0.000000e+00 : f32
      %67 = vector.broadcast %cst_28 : f32 to vector<3x128xf32>
      %68 = arith.maximumf %66, %67 : vector<3x128xf32>
      %69 = vector.broadcast %47 : vector<1x128xf32> to vector<3x128xf32>
      %70 = arith.mulf %68, %69 : vector<3x128xf32>
      %cst_29 = arith.constant dense<0.000000e+00> : vector<3xf32>
      %71 = vector.multi_reduction <add>, %70, %cst_29 [1] : vector<3x128xf32> to vector<3xf32>
      %72 = vector.shape_cast %71 : vector<3xf32> to vector<3x1xf32>
      %c0_30 = arith.constant 0 : index
      %c0_31 = arith.constant 0 : index
      %73 = vector.load %arg9[%c0_30, %c0_31] : memref<1x1xf32, #tpu.memory_space<vmem>>, vector<1x1xf32>
      %74 = vector.broadcast %73 : vector<1x1xf32> to vector<3x1xf32>
      %75 = arith.addf %72, %74 : vector<3x1xf32>
      %76 = tpu.concatenate %61, %75 in 1 : vector<3x1xf32>, vector<3x1xf32> -> vector<3x2xf32>
      %cst_32 = arith.constant 0.000000e+00 : f32
      %77 = vector.broadcast %cst_32 : f32 to vector<3x2xf32>
      %78 = arith.subf %77, %76 : vector<3x2xf32>
      %79 = math.exp %78 : vector<3x2xf32>
      %cst_33 = arith.constant 1.000000e+00 : f32
      %80 = vector.broadcast %cst_33 : f32 to vector<3x2xf32>
      %81 = arith.addf %80, %79 : vector<3x2xf32>
      %82 = tpu.reciprocal %81 {approx = true} : vector<3x2xf32> -> vector<3x2xf32>
      %c0_34 = arith.constant 0 : index
      %c0_35 = arith.constant 0 : index
      %83 = vector.load %arg10[%c0_34, %c0_35] : memref<3x2xf32, #tpu.memory_space<vmem>>, vector<3x2xf32>
      tpu.vector_store %arg10[%c0_34, %c0_35], %82 {strides = array<i32>} : memref<3x2xf32, #tpu.memory_space<vmem>>, vector<3x2xf32>,
    } else {
    }
    return
  }
  func.func @transform_0(%arg0: i32) -> (i32, i32, i32) {
    %c0_i32 = arith.constant 0 : i32
    %c0_i32_0 = arith.constant 0 : i32
    %c0_i32_1 = arith.constant 0 : i32
    return %arg0, %c0_i32, %c0_i32_0 : i32, i32, i32
  }
  func.func @transform_1(%arg0: i32) -> (i32, i32) {
    %c0_i32 = arith.constant 0 : i32
    %c0_i32_0 = arith.constant 0 : i32
    %c0_i32_1 = arith.constant 0 : i32
    return %c0_i32, %c0_i32_0 : i32, i32
  }
  func.func @transform_2(%arg0: i32) -> (i32, i32) {
    %c0_i32 = arith.constant 0 : i32
    %c0_i32_0 = arith.constant 0 : i32
    %c0_i32_1 = arith.constant 0 : i32
    return %c0_i32, %c0_i32_0 : i32, i32
  }
  func.func @transform_3(%arg0: i32) -> (i32, i32) {
    %c0_i32 = arith.constant 0 : i32
    %c0_i32_0 = arith.constant 0 : i32
    %c0_i32_1 = arith.constant 0 : i32
    return %c0_i32, %c0_i32_0 : i32, i32
  }
  func.func @transform_4(%arg0: i32) -> (i32, i32) {
    %c0_i32 = arith.constant 0 : i32
    %c0_i32_0 = arith.constant 0 : i32
    %c0_i32_1 = arith.constant 0 : i32
    return %c0_i32, %c0_i32_0 : i32, i32
  }
  func.func @transform_5(%arg0: i32) -> (i32, i32) {
    %c0_i32 = arith.constant 0 : i32
    %c0_i32_0 = arith.constant 0 : i32
    %c0_i32_1 = arith.constant 0 : i32
    return %c0_i32, %c0_i32_0 : i32, i32
  }
  func.func @transform_6(%arg0: i32) -> (i32, i32) {
    %c0_i32 = arith.constant 0 : i32
    %c0_i32_0 = arith.constant 0 : i32
    %c0_i32_1 = arith.constant 0 : i32
    return %c0_i32, %c0_i32_0 : i32, i32
  }
  func.func @transform_7(%arg0: i32) -> (i32, i32) {
    %c0_i32 = arith.constant 0 : i32
    %c0_i32_0 = arith.constant 0 : i32
    %c0_i32_1 = arith.constant 0 : i32
    return %c0_i32, %c0_i32_0 : i32, i32
  }
  func.func @transform_8(%arg0: i32) -> (i32, i32) {
    %c0_i32 = arith.constant 0 : i32
    %c0_i32_0 = arith.constant 0 : i32
    %c0_i32_1 = arith.constant 0 : i32
    return %c0_i32, %c0_i32_0 : i32, i32
  }
  func.func @transform_9(%arg0: i32) -> (i32, i32) {
    %c0_i32 = arith.constant 0 : i32
    %c0_i32_0 = arith.constant 0 : i32
    %c0_i32_1 = arith.constant 0 : i32
    return %c0_i32, %c0_i32_0 : i32, i32
  }
}

</mosaic_0001>

<llo_original>
// kernel: tpu_custom_call.1
$region0: #{tpu_custom_call.1}
  #allocation0 [shape = 'u32[]', space=smem, size = 0x4, offset = 0x4, fixed_abs, tag = 'smem constant byte address 0x4 - core index']
  #allocation1 [shape = 'u32[144,128]{1,0:T(1,128)}', space=vmem, size = 0x12000, scoped, tag = 'internal scratch']
  #allocation2 [shape = 'f32[7,2048]{1,0:T(8,128)}', space=vmem, size = 0x10000, scoped, tag = 'scratch operand']
  #allocation3 [shape = 'f32[1,1]{1,0:T(1,128)S(1)}', space=vmem, size = 0x200, scoped, tag = 'scoped memory for tpu_custom_call.1']
  %s0 = inlined_call_operand.hbm [shape: bf16[7,36,256], index: 0, kind: input, shape index: {}]
  %s1 = inlined_call_operand.vmem [shape: bf16[8,36], index: 1, kind: input, shape index: {}]
  %s2 = inlined_call_operand.vmem [shape: f32[8,1], index: 2, kind: input, shape index: {}]
  %s3 = inlined_call_operand.vmem [shape: f32[2,4], index: 3, kind: input, shape index: {}]
  %s4 = inlined_call_operand.hbm [shape: bf16[2048,128], index: 4, kind: input, shape index: {}]
  %s5 = inlined_call_operand.hbm [shape: bf16[2048,128], index: 5, kind: input, shape index: {}]
  %s6 = inlined_call_operand.vmem [shape: f32[1,128], index: 6, kind: input, shape index: {}]
  %s7 = inlined_call_operand.vmem [shape: f32[1,128], index: 7, kind: input, shape index: {}]
  %s8 = inlined_call_operand.<no memory space> [shape: f32[1,1], index: 8, kind: input, shape index: {}]
  %s9 = inlined_call_operand.vmem [shape: f32[3,2], index: 9, kind: output, shape index: {}]
  %s10 = sld [smem:[#allocation0]]
  $region85: #{tpu_custom_call.1} parent=0
    _
  %s12 = ssub.s32 1, %s10
  %s13 = scalar_select 0, %s12, %s10
  %v14 = vstv %s8
  %15 = vst [vmem:[#allocation3] sm:$0x1] %v14
  $region1: #{tpu_custom_call.1} parent=0
    #allocation4 [shape = 'u8[40960]{0}', space=vmem, size = 0xa000, scoped, tag = 'input window, operand 0']
    #allocation5 [shape = 's32[2]{0}', space=sflag, size = 0x8, scoped, tag = 'scoped memory for tpu_custom_call.1']
    #allocation6 [shape = 'u8[524288]{0}', space=vmem, size = 0x80000, scoped, tag = 'input window, operand 4, single buffered']
    #allocation7 [shape = 's32[1]{0}', space=sflag, size = 0x4, scoped, tag = 'scoped memory for tpu_custom_call.1']
    #allocation8 [shape = 'u8[524288]{0}', space=vmem, size = 0x80000, scoped, tag = 'input window, operand 5, single buffered']
    %16 = vsyncpa [#allocation5], 0
    %s17 = scalar_lea.sflag [#allocation5], 1
    %18 = vsyncpa %s17, 0
    %19 = vsyncpa [#allocation7], 0
    loop: start=0, step=1, limit=9
    $region2: #{tpu_custom_call.1} parent=1 // loop_pre_header
      _
    $region3: #{tpu_custom_call.1} parent=1 // loop_header
      %s21 = sphi 0, %s25
      %p22 = scmp.ge.s32.totalorder %s21, 9
      %s31 = sphi 0, %s33
      %s34 = sphi 0, %s31
      %s35 = sphi 0, %s34
      %s51 = sphi 0, %s35
      %s55 = sphi 0, %s55
      %s57 = sphi 0, %s55
      %s58 = sphi 0, %s57
      %s72 = sphi 0, %s58
      %s76 = sphi 0, %s76
      %s78 = sphi 0, %s76
      %s79 = sphi 0, %s78
      %s93 = sphi 0, %s79
      %s97 = sphi 0, %s97
      %s99 = sphi 0, %s97
      %s100 = sphi 0, %s99
      %s114 = sphi 0, %s100
      %s118 = sphi 0, %s118
      %s120 = sphi 0, %s118
      %s121 = sphi 0, %s120
      %s135 = sphi 0, %s121
      %s139 = sphi 0, %s139
      %s141 = sphi 0, %s139
      %s142 = sphi 0, %s141
      %s156 = sphi 0, %s142
      %s160 = sphi 0, %s160
      %s162 = sphi 0, %s160
      %s163 = sphi 0, %s162
      %s177 = sphi 0, %s163
      %s181 = sphi 0, %s181
      %s183 = sphi 0, %s181
      %s184 = sphi 0, %s183
      %s198 = sphi 0, %s184
      %s202 = sphi 0, %s202
      %s204 = sphi 0, %s202
      %s205 = sphi 0, %s204
      %s219 = sphi 0, %s205
      %s223 = sphi 0, %s223
      %s225 = sphi 0, %s223
      %s226 = sphi 0, %s225
      %s240 = sphi 0, %s226
    $region4: #{tpu_custom_call.1} parent=1 // loop_header_branch
      %24 = sbr.rel (%p22) target = $region8
    $region5: #{tpu_custom_call.1} parent=1 // loop_body
      %s26 = ssub.s32 %s21, 1
      %s27 = ssub.s32 %s21, 2
      %s28 = sadd.s32 %s21, 1
      %s29 = ssub.s32 %s21, %s28
      %p30 = scmp.eq.s32.totalorder %s29, 0
      %s32 = sadd.s32 %s31, 1
      %s33 = scalar_select %p30, %s31, %s32
      %p36 = pneg %p30
      %p37 = scmp.eq.s32.totalorder %s21, 6
      %p38 = por %p36, %p37
      %p39 = scmp.ne.s32.totalorder %s31, %s34
      %p40 = scmp.eq.s32.totalorder %s21, 0
      %p41 = por %p39, %p40
      %p42 = scmp.ne.s32.totalorder %s31, %s34
      %p43 = scmp.eq.s32.totalorder %s26, 6
      %p44 = por %p42, %p43
      %p45 = scmp.ne.s32.totalorder %s34, %s35
      %p46 = scmp.eq.s32.totalorder %s26, 0
      %p47 = por %p45, %p46
      %p48 = scmp.ne.s32.totalorder %s34, %s35
      %p49 = scmp.eq.s32.totalorder %s27, 6
      %p50 = por %p48, %p49
      %p52 = scmp.ne.s32.totalorder %s35, %s51
      %p53 = scmp.eq.s32.totalorder %s27, 0
      %p54 = por %p52, %p53
      %s56 = sadd.s32 %s55, 1
      %p59 = scmp.eq.s32.totalorder %s21, 6
      %p60 = scmp.ne.s32.totalorder %s55, %s57
      %p61 = scmp.eq.s32.totalorder %s21, 0
      %p62 = por %p60, %p61
      %p63 = scmp.ne.s32.totalorder %s55, %s57
      %p64 = scmp.eq.s32.totalorder %s26, 6
      %p65 = por %p63, %p64
      %p66 = scmp.ne.s32.totalorder %s57, %s58
      %p67 = scmp.eq.s32.totalorder %s26, 0
      %p68 = por %p66, %p67
      %p69 = scmp.ne.s32.totalorder %s57, %s58
      %p70 = scmp.eq.s32.totalorder %s27, 6
      %p71 = por %p69, %p70
      %p73 = scmp.ne.s32.totalorder %s58, %s72
      %p74 = scmp.eq.s32.totalorder %s27, 0
      %p75 = por %p73, %p74
      %s77 = sadd.s32 %s76, 1
      %p80 = scmp.eq.s32.totalorder %s21, 6
      %p81 = scmp.ne.s32.totalorder %s76, %s78
      %p82 = scmp.eq.s32.totalorder %s21, 0
      %p83 = por %p81, %p82
      %p84 = scmp.ne.s32.totalorder %s76, %s78
      %p85 = scmp.eq.s32.totalorder %s26, 6
      %p86 = por %p84, %p85
      %p87 = scmp.ne.s32.totalorder %s78, %s79
      %p88 = scmp.eq.s32.totalorder %s26, 0
      %p89 = por %p87, %p88
      %p90 = scmp.ne.s32.totalorder %s78, %s79
      %p91 = scmp.eq.s32.totalorder %s27, 6
      %p92 = por %p90, %p91
      %p94 = scmp.ne.s32.totalorder %s79, %s93
      %p95 = scmp.eq.s32.totalorder %s27, 0
      %p96 = por %p94, %p95
      %s98 = sadd.s32 %s97, 1
      %p101 = scmp.eq.s32.totalorder %s21, 6
      %p102 = scmp.ne.s32.totalorder %s97, %s99
      %p103 = scmp.eq.s32.totalorder %s21, 0
      %p104 = por %p102, %p103
      %p105 = scmp.ne.s32.totalorder %s97, %s99
      %p106 = scmp.eq.s32.totalorder %s26, 6
      %p107 = por %p105, %p106
      %p108 = scmp.ne.s32.totalorder %s99, %s100
      %p109 = scmp.eq.s32.totalorder %s26, 0
      %p110 = por %p108, %p109
      %p111 = scmp.ne.s32.totalorder %s99, %s100
      %p112 = scmp.eq.s32.totalorder %s27, 6
      %p113 = por %p111, %p112
      %p115 = scmp.ne.s32.totalorder %s100, %s114
      %p116 = scmp.eq.s32.totalorder %s27, 0
      %p117 = por %p115, %p116
      %s119 = sadd.s32 %s118, 1
      %p122 = scmp.eq.s32.totalorder %s21, 6
      %p123 = scmp.ne.s32.totalorder %s118, %s120
      %p124 = scmp.eq.s32.totalorder %s21, 0
      %p125 = por %p123, %p124
      %p126 = scmp.ne.s32.totalorder %s118, %s120
      %p127 = scmp.eq.s32.totalorder %s26, 6
      %p128 = por %p126, %p127
      %p129 = scmp.ne.s32.totalorder %s120, %s121
      %p130 = scmp.eq.s32.totalorder %s26, 0
      %p131 = por %p129, %p130
      %p132 = scmp.ne.s32.totalorder %s120, %s121
      %p133 = scmp.eq.s32.totalorder %s27, 6
      %p134 = por %p132, %p133
      %p136 = scmp.ne.s32.totalorder %s121, %s135
      %p137 = scmp.eq.s32.totalorder %s27, 0
      %p138 = por %p136, %p137
      %s140 = sadd.s32 %s139, 1
      %p143 = scmp.eq.s32.totalorder %s21, 6
      %p144 = scmp.ne.s32.totalorder %s139, %s141
      %p145 = scmp.eq.s32.totalorder %s21, 0
      %p146 = por %p144, %p145
      %p147 = scmp.ne.s32.totalorder %s139, %s141
      %p148 = scmp.eq.s32.totalorder %s26, 6
      %p149 = por %p147, %p148
      %p150 = scmp.ne.s32.totalorder %s141, %s142
      %p151 = scmp.eq.s32.totalorder %s26, 0
      %p152 = por %p150, %p151
      %p153 = scmp.ne.s32.totalorder %s141, %s142
      %p154 = scmp.eq.s32.totalorder %s27, 6
      %p155 = por %p153, %p154
      %p157 = scmp.ne.s32.totalorder %s142, %s156
      %p158 = scmp.eq.s32.totalorder %s27, 0
      %p159 = por %p157, %p158
      %s161 = sadd.s32 %s160, 1
      %p164 = scmp.eq.s32.totalorder %s21, 6
      %p165 = scmp.ne.s32.totalorder %s160, %s162
      %p166 = scmp.eq.s32.totalorder %s21, 0
      %p167 = por %p165, %p166
      %p168 = scmp.ne.s32.totalorder %s160, %s162
      %p169 = scmp.eq.s32.totalorder %s26, 6
      %p170 = por %p168, %p169
      %p171 = scmp.ne.s32.totalorder %s162, %s163
      %p172 = scmp.eq.s32.totalorder %s26, 0
      %p173 = por %p171, %p172
      %p174 = scmp.ne.s32.totalorder %s162, %s163
      %p175 = scmp.eq.s32.totalorder %s27, 6
      %p176 = por %p174, %p175
      %p178 = scmp.ne.s32.totalorder %s163, %s177
      %p179 = scmp.eq.s32.totalorder %s27, 0
      %p180 = por %p178, %p179
      %s182 = sadd.s32 %s181, 1
      %p185 = scmp.eq.s32.totalorder %s21, 6
      %p186 = scmp.ne.s32.totalorder %s181, %s183
      %p187 = scmp.eq.s32.totalorder %s21, 0
      %p188 = por %p186, %p187
      %p189 = scmp.ne.s32.totalorder %s181, %s183
      %p190 = scmp.eq.s32.totalorder %s26, 6
      %p191 = por %p189, %p190
      %p192 = scmp.ne.s32.totalorder %s183, %s184
      %p193 = scmp.eq.s32.totalorder %s26, 0
      %p194 = por %p192, %p193
      %p195 = scmp.ne.s32.totalorder %s183, %s184
      %p196 = scmp.eq.s32.totalorder %s27, 6
      %p197 = por %p195, %p196
      %p199 = scmp.ne.s32.totalorder %s184, %s198
      %p200 = scmp.eq.s32.totalorder %s27, 0
      %p201 = por %p199, %p200
      %s203 = sadd.s32 %s202, 1
      %p206 = scmp.eq.s32.totalorder %s21, 6
      %p207 = scmp.ne.s32.totalorder %s202, %s204
      %p208 = scmp.eq.s32.totalorder %s21, 0
      %p209 = por %p207, %p208
      %p210 = scmp.ne.s32.totalorder %s202, %s204
      %p211 = scmp.eq.s32.totalorder %s26, 6
      %p212 = por %p210, %p211
      %p213 = scmp.ne.s32.totalorder %s204, %s205
      %p214 = scmp.eq.s32.totalorder %s26, 0
      %p215 = por %p213, %p214
      %p216 = scmp.ne.s32.totalorder %s204, %s205
      %p217 = scmp.eq.s32.totalorder %s27, 6
      %p218 = por %p216, %p217
      %p220 = scmp.ne.s32.totalorder %s205, %s219
      %p221 = scmp.eq.s32.totalorder %s27, 0
      %p222 = por %p220, %p221
      %s224 = sadd.s32 %s223, 1
      %p227 = scmp.eq.s32.totalorder %s21, 6
      %p228 = scmp.ne.s32.totalorder %s223, %s225
      %p229 = scmp.eq.s32.totalorder %s21, 0
      %p230 = por %p228, %p229
      %p231 = scmp.ne.s32.totalorder %s223, %s225
      %p232 = scmp.eq.s32.totalorder %s26, 6
      %p233 = por %p231, %p232
      %p234 = scmp.ne.s32.totalorder %s225, %s226
      %p235 = scmp.eq.s32.totalorder %s26, 0
      %p236 = por %p234, %p235
      %p237 = scmp.ne.s32.totalorder %s225, %s226
      %p238 = scmp.eq.s32.totalorder %s27, 6
      %p239 = por %p237, %p238
      %p241 = scmp.ne.s32.totalorder %s226, %s240
      %p242 = scmp.eq.s32.totalorder %s27, 0
      %p243 = por %p241, %p242
      %p244 = scmp.le.s32.totalorder 1, %s21
      %p245 = scmp.lt.s32.totalorder %s21, 8
      %p246 = pnand %p244, %p245
      %p247 = pneg %p246
      // Predicated region
      $region9: #{tpu_custom_call.1} parent=5 // pred_check
        _
      $region10: #{tpu_custom_call.1} parent=5 // pred_check_branch
        %249 = sbr.rel (%p246) target = $region12
      $region11: #{tpu_custom_call.1} parent=5 // pred_region
        %s250 = ssub.s32 %s21, 1
        // Predicated region
        $region13: #{tpu_custom_call.1} parent=11 // pred_check
          %p251 = pneg %p68
        $region14: #{tpu_custom_call.1} parent=11 // pred_check_branch
          %253 = sbr.rel (%p251) target = $region16
        $region15: #{tpu_custom_call.1} parent=11 // pred_region
          _
        $region16: #{tpu_custom_call.1} parent=11 // pred_fallthru
          _
        // Predicated region
        $region17: #{tpu_custom_call.1} parent=11 // pred_check
          %p254 = pneg %p89
        $region18: #{tpu_custom_call.1} parent=11 // pred_check_branch
          %256 = sbr.rel (%p254) target = $region20
        $region19: #{tpu_custom_call.1} parent=11 // pred_region
          _
        $region20: #{tpu_custom_call.1} parent=11 // pred_fallthru
          _
        // Predicated region
        $region21: #{tpu_custom_call.1} parent=11 // pred_check
          %p257 = pneg %p110
        $region22: #{tpu_custom_call.1} parent=11 // pred_check_branch
          %259 = sbr.rel (%p257) target = $region24
        $region23: #{tpu_custom_call.1} parent=11 // pred_region
          _
        $region24: #{tpu_custom_call.1} parent=11 // pred_fallthru
          _
        // Predicated region
        $region25: #{tpu_custom_call.1} parent=11 // pred_check
          %p260 = pneg %p131
        $region26: #{tpu_custom_call.1} parent=11 // pred_check_branch
          %262 = sbr.rel (%p260) target = $region28
        $region27: #{tpu_custom_call.1} parent=11 // pred_region
          %s264 = ssub.s32 16384, 16384
          %265 = vsyncadd [#allocation7], %s264
          %s266 = sshll.u32 [#allocation6], 4
          %s267 = int_to_ptr.vmem [resolvable:$true] %s266
          %272 = dma.hbm_to_vmem [thread:$0]  %s4, 16384, %s267, [#allocation7], 64, 64, 4
        $region28: #{tpu_custom_call.1} parent=11 // pred_fallthru
          _
        // Predicated region
        $region29: #{tpu_custom_call.1} parent=11 // pred_check
          %p273 = pneg %p152
        $region30: #{tpu_custom_call.1} parent=11 // pred_check_branch
          %275 = sbr.rel (%p273) target = $region32
        $region31: #{tpu_custom_call.1} parent=11 // pred_region
          %s277 = ssub.s32 16384, 16384
          %278 = vsyncadd [#allocation7], %s277
          %s279 = sshll.u32 [#allocation8], 4
          %s280 = int_to_ptr.vmem [resolvable:$true] %s279
          %285 = dma.hbm_to_vmem [thread:$0]  %s5, 16384, %s280, [#allocation7], 64, 64, 4
        $region32: #{tpu_custom_call.1} parent=11 // pred_fallthru
          _
        // Predicated region
        $region33: #{tpu_custom_call.1} parent=11 // pred_check
          %p286 = pneg %p173
        $region34: #{tpu_custom_call.1} parent=11 // pred_check_branch
          %288 = sbr.rel (%p286) target = $region36
        $region35: #{tpu_custom_call.1} parent=11 // pred_region
          _
        $region36: #{tpu_custom_call.1} parent=11 // pred_fallthru
          _
        // Predicated region
        $region37: #{tpu_custom_call.1} parent=11 // pred_check
          %p289 = pneg %p194
        $region38: #{tpu_custom_call.1} parent=11 // pred_check_branch
          %291 = sbr.rel (%p289) target = $region40
        $region39: #{tpu_custom_call.1} parent=11 // pred_region
          _
        $region40: #{tpu_custom_call.1} parent=11 // pred_fallthru
          _
        // Predicated region
        $region41: #{tpu_custom_call.1} parent=11 // pred_check
          %p292 = pneg %p215
        $region42: #{tpu_custom_call.1} parent=11 // pred_check_branch
          %294 = sbr.rel (%p292) target = $region44
        $region43: #{tpu_custom_call.1} parent=11 // pred_region
          _
        $region44: #{tpu_custom_call.1} parent=11 // pred_fallthru
          _
      $region12: #{tpu_custom_call.1} parent=5 // pred_fallthru
        _
      %p295 = scmp.lt.s32.totalorder %s21, 7
      // Predicated region
      $region45: #{tpu_custom_call.1} parent=5 // pred_check
        %p296 = pneg %p295
      $region46: #{tpu_custom_call.1} parent=5 // pred_check_branch
        %298 = sbr.rel (%p296) target = $region48
      $region47: #{tpu_custom_call.1} parent=5 // pred_region
        // Predicated region
        $region49: #{tpu_custom_call.1} parent=47 // pred_check
          %p299 = pneg %p41
        $region50: #{tpu_custom_call.1} parent=47 // pred_check_branch
          %301 = sbr.rel (%p299) target = $region52
        $region51: #{tpu_custom_call.1} parent=47 // pred_region
          %s302 = sand.u32 %s31, 1
          %s303 = scalar_lea.sflag [#allocation5], %s302
          %s304 = sand.u32 %s31, 1
          %s305 = smul.addr %s304, 40
          %s306 = scalar_lea.vmem [#allocation4], %s305
          %s308 = ssub.s32 640, 640
          %309 = vsyncadd %s303, %s308
          %s310 = smul.addr %s21, 10
          %s311 = smul.addr %s310, 64
          %s312 = scalar_lea.hbm %s0, %s311
          %s313 = sshll.u32 %s306, 4
          %s314 = int_to_ptr.vmem [resolvable:$true] %s313
          %319 = dma.hbm_to_vmem [thread:$0]  %s312, 640, %s314, %s303, 128, 128, 8
        $region52: #{tpu_custom_call.1} parent=47 // pred_fallthru
          _
      $region48: #{tpu_custom_call.1} parent=5 // pred_fallthru
        _
      %p320 = scmp.le.s32.totalorder 1, %s21
      %p321 = scmp.lt.s32.totalorder %s21, 8
      %p322 = pnand %p320, %p321
      %p323 = pneg %p322
      // Predicated region
      $region53: #{tpu_custom_call.1} parent=5 // pred_check
        _
      $region54: #{tpu_custom_call.1} parent=5 // pred_check_branch
        %325 = sbr.rel (%p322) target = $region56
      $region55: #{tpu_custom_call.1} parent=5 // pred_region
        %s326 = ssub.s32 %s21, 1
        %s327 = sand.u32 %s34, 1
        %s328 = scalar_lea.sflag [#allocation5], %s327
        %s329 = sand.u32 %s34, 1
        %s330 = smul.addr %s329, 40
        %s331 = scalar_lea.vmem [#allocation4], %s330
        // Predicated region
        $region57: #{tpu_custom_call.1} parent=55 // pred_check
          %p332 = pneg %p47
        $region58: #{tpu_custom_call.1} parent=55 // pred_check_branch
          %334 = sbr.rel (%p332) target = $region60
        $region59: #{tpu_custom_call.1} parent=55 // pred_region
          %335 = dma.done %s328, 640
        $region60: #{tpu_custom_call.1} parent=55 // pred_fallthru
          _
        // Predicated region
        $region61: #{tpu_custom_call.1} parent=55 // pred_check
          %p336 = pneg %p131
        $region62: #{tpu_custom_call.1} parent=55 // pred_check_branch
          %338 = sbr.rel (%p336) target = $region64
        $region63: #{tpu_custom_call.1} parent=55 // pred_region
          %339 = dma.done [#allocation7], 16384
        $region64: #{tpu_custom_call.1} parent=55 // pred_fallthru
          _
        // Predicated region
        $region65: #{tpu_custom_call.1} parent=55 // pred_check
          %p340 = pneg %p152
        $region66: #{tpu_custom_call.1} parent=55 // pred_check_branch
          %342 = sbr.rel (%p340) target = $region68
        $region67: #{tpu_custom_call.1} parent=55 // pred_region
          %343 = dma.done [#allocation7], 16384
        $region68: #{tpu_custom_call.1} parent=55 // pred_fallthru
          _
        %s344 = sand.u32 %s34, 1
        %s345 = scalar_lea.sflag [#allocation5], %s344
        %s346 = sand.u32 %s34, 1
        %s347 = smul.addr %s346, 40
        %s348 = scalar_lea.vmem [#allocation4], %s347
        %p349 = pneg %p47
        %p350 = pneg %p44
        %p351 = pneg %p68
        %p352 = pneg %p65
        %p353 = pneg %p89
        %p354 = pneg %p86
        %p355 = pneg %p110
        %p356 = pneg %p107
        %p357 = pneg %p131
        %p358 = pneg %p128
        %p359 = pneg %p152
        %p360 = pneg %p149
        %p361 = pneg %p173
        %p362 = pneg %p170
        %p363 = pneg %p194
        %p364 = pneg %p191
        %p365 = pneg %p215
        %p366 = pneg %p212
        %p367 = pneg %p236
        %p368 = pneg %p233
        %v370 = vld [vmem:[%s1] sm:$0xf]
        %v371 = vld [vmem:[%s331] sm:$0xff]
        %v372 = vld [vmem:[%s331 + $0x8] sm:$0xff]
        %v373 = vld [vmem:[%s331 + $0x10] sm:$0xff]
        %v374 = vld [vmem:[%s331 + $0x18] sm:$0xff]
        %v375 = vld [vmem:[%s331 + $0x20] sm:$0x33]
        %v376 = vld [vmem:[%s2] sm:$0xff]
        %378 = vset.pattern.permute.xlu0 0
        %379 = vperm.xlu0 %378, %v376
        %v380 = vpop.permute.xlu0 %379
        %v387 = vunpack.c.l.b16 %v371
        %v388 = vunpack.c.h.b16 %v371
        %v389 = vunpack.c.l.b16 %v372
        %v390 = vunpack.c.h.b16 %v372
        %v391 = vunpack.c.l.b16 %v373
        %v392 = vunpack.c.h.b16 %v373
        %v393 = vunpack.c.l.b16 %v374
        %v394 = vunpack.c.h.b16 %v374
        %v395 = vunpack.c.l.b16 %v375
        %v396 = vunpack.c.h.b16 %v375
        %v397 = vpack.c.b16 %v389, %v387
        %v398 = vpack.c.b16 %v390, %v388
        %v399 = vpack.c.b16 %v393, %v391
        %v400 = vpack.c.b16 %v394, %v392
        %v401 = vpack.c.b16 %v395, %v395
        %v402 = vpack.c.b16 %v396, %v396
        %vm407 = vcmask 293888
        %v409 = vsel %vm407, %v370, 0
        %vm411 = vcmask 1041408
        %v413 = vsel %vm411, %v401, 0
        %v416 = vsel %vm411, %v402, 0
        %418 = vmatprep.subr.bf16.mxu0 0
        %419 = vmatpush1.bf16.msra.mxu0 0
        %420 = vmatprep.subr.bf16.mxu0 0
        %421 = vmatpush1.bf16.msra.mxu0 0
        %422 = vmatprep.subr.bf16.mxu0 0
        %423 = vmatpush1.bf16.msra.mxu0 0
        %424 = vmatprep.subr.bf16.mxu0 0
        %425 = vmatpush1.bf16.msra.mxu0 0
        %426 = vmatprep.subr.bf16.mxu0 0
        %427 = vmatpush1.bf16.msra.mxu0 0
        %428 = vmatprep.subr.bf16.mxu0 %v416
        %429 = vmatpush1.bf16.msra.mxu0 %v413
        %430 = vmatprep.subr.bf16.mxu0 %v400
        %431 = vmatpush1.bf16.msra.mxu0 %v399
        %432 = vmatprep.subr.bf16.mxu0 %v398
        %433 = vmatpush1.bf16.msra.mxu0 %v397
        %434 = vmatprep.subr.bf16.mxu0 0
        %435 = vmatpush2.bf16.msra.mxu0 0
        %436 = vmatprep.subr.bf16.mxu0 0
        %437 = vmatpush2.bf16.msra.mxu0 0
        %438 = vmatprep.subr.bf16.mxu0 0
        %439 = vmatpush2.bf16.msra.mxu0 0
        %440 = vmatprep.subr.bf16.mxu0 0
        %441 = vmatpush2.bf16.msra.mxu0 0
        %442 = vmatprep.subr.bf16.mxu0 0
        %443 = vmatpush2.bf16.msra.mxu0 0
        %444 = vmatprep.subr.bf16.mxu0 0
        %445 = vmatpush2.bf16.msra.mxu0 0
        %446 = vmatprep.subr.bf16.mxu0 0
        %447 = vmatpush2.bf16.msra.mxu0 0
        %448 = vmatprep.subr.bf16.mxu0 0
        %449 = vmatpush2.bf16.msra.mxu0 0
        %450 = vmatprep.mubr.bf16.mxu0 0
        %451 = vmatmul.mubr.bf16.gmra.mxu0 %v409
        %v452 = vpop.f32.mrf.mxu0
        %v453 = vadd.f32 %v380, %v452
        %v454 = vpop.f32.mrf.mxu0
        %v455 = vadd.f32 %v380, %v454
        %v456 = vpop.f32.mrf.mxu0
        %v457 = vpop.f32.mrf.mxu0
        %458 = vdwg.mxu0
        %v459 = vmax.f32 %v453, 0.0
        %v460 = vmax.f32 %v455, 0.0
        %v463 = vcombine.low %v459, %v460
        %v465 = vunpack.c.l.s4 1966171168
        %v466 = vunpack.c.0.s8 %v465
        %v467 = vlaneseq
        %v468 = vshrl.u32 %v467, 7
        %v469 = vsub.s32 %v466, %v468
        %v470 = vrot.slane %v463, %v469
        %v472 = vunpack.c.l.s4 1966171168
        %v473 = vunpack.c.0.s8 %v472
        %v474 = vlaneseq
        %v475 = vshrl.u32 %v474, 7
        %v476 = vsub.s32 %v473, %v475
        %v477 = vrot.slane %v470, %v476
        %v479 = vlaneseq
        %vm480 = vcmp.ge.s32.totalorder %v479, 0
        %vm481 = vcmp.lt.s32.totalorder %v479, 256
        %vm482 = vmand %vm480, %vm481
        %s483 = sshra.s32 %s26, 3
        %s484 = sand.u32 %s26, 7
        %s485 = sshra.s32 %s26, 3
        %s486 = sand.u32 %s26, 7
        %s487 = smul.u32 %s483, 16
        %s488 = smul.u32 %s487, 8
        %s489 = sadd.s32 %s488, %s486
        %s490 = scalar_lea.vmem [#allocation2], %s489
        %491 = vst.msk [vmem:[%s490] ss:$8 sm:$0x3] %vm482, %v477
        %492 = vst.msk [vmem:[%s490] ss:$8 sm:$0x0] %vm482, %v477
        %v493 = vcombine.high %v470, %v470
        %v495 = vunpack.c.l.s4 1966171168
        %v496 = vunpack.c.0.s8 %v495
        %v497 = vlaneseq
        %v498 = vshrl.u32 %v497, 7
        %v499 = vsub.s32 %v496, %v498
        %v500 = vrot.slane %v493, %v499
        %s502 = sadd.s32 %s487, 2
        %s503 = smul.u32 %s502, 8
        %s504 = sadd.s32 %s503, %s486
        %s505 = scalar_lea.vmem [#allocation2], %s504
        %506 = vst.msk [vmem:[%s505] ss:$8 sm:$0x3] %vm482, %v500
        %507 = vst.msk [vmem:[%s505] ss:$8 sm:$0x0] %vm482, %v500
        %v508 = vcombine.high %v477, %v477
        %s510 = sadd.s32 %s487, 4
        %s511 = smul.u32 %s510, 8
        %s512 = sadd.s32 %s511, %s486
        %s513 = scalar_lea.vmem [#allocation2], %s512
        %514 = vst.msk [vmem:[%s513] ss:$8 sm:$0x3] %vm482, %v508
        %515 = vst.msk [vmem:[%s513] ss:$8 sm:$0x0] %vm482, %v508
        %v516 = vcombine.high %v500, %v500
        %s518 = sadd.s32 %s487, 6
        %s519 = smul.u32 %s518, 8
        %s520 = sadd.s32 %s519, %s486
        %s521 = scalar_lea.vmem [#allocation2], %s520
        %522 = vst.msk [vmem:[%s521] ss:$8 sm:$0x3] %vm482, %v516
        %523 = vst.msk [vmem:[%s521] ss:$8 sm:$0x0] %vm482, %v516
        %v524 = vcombine.high %v459, %v460
        %v526 = vunpack.c.l.s4 1966171168
        %v527 = vunpack.c.0.s8 %v526
        %v528 = vlaneseq
        %v529 = vshrl.u32 %v528, 7
        %v530 = vsub.s32 %v527, %v529
        %v531 = vrot.slane %v524, %v530
        %v533 = vunpack.c.l.s4 1966171168
        %v534 = vunpack.c.0.s8 %v533
        %v535 = vlaneseq
        %v536 = vshrl.u32 %v535, 7
        %v537 = vsub.s32 %v534, %v536
        %v538 = vrot.slane %v531, %v537
        %s540 = sadd.s32 %s487, 8
        %s541 = smul.u32 %s540, 8
        %s542 = sadd.s32 %s541, %s486
        %s543 = scalar_lea.vmem [#allocation2], %s542
        %544 = vst.msk [vmem:[%s543] ss:$8 sm:$0x3] %vm482, %v538
        %545 = vst.msk [vmem:[%s543] ss:$8 sm:$0x0] %vm482, %v538
        %v546 = vcombine.high %v531, %v531
        %v548 = vunpack.c.l.s4 1966171168
        %v549 = vunpack.c.0.s8 %v548
        %v550 = vlaneseq
        %v551 = vshrl.u32 %v550, 7
        %v552 = vsub.s32 %v549, %v551
        %v553 = vrot.slane %v546, %v552
        %s555 = sadd.s32 %s487, 10
        %s556 = smul.u32 %s555, 8
        %s557 = sadd.s32 %s556, %s486
        %s558 = scalar_lea.vmem [#allocation2], %s557
        %559 = vst.msk [vmem:[%s558] ss:$8 sm:$0x3] %vm482, %v553
        %560 = vst.msk [vmem:[%s558] ss:$8 sm:$0x0] %vm482, %v553
        %v561 = vcombine.high %v538, %v538
        %s563 = sadd.s32 %s487, 12
        %s564 = smul.u32 %s563, 8
        %s565 = sadd.s32 %s564, %s486
        %s566 = scalar_lea.vmem [#allocation2], %s565
        %567 = vst.msk [vmem:[%s566] ss:$8 sm:$0x3] %vm482, %v561
        %568 = vst.msk [vmem:[%s566] ss:$8 sm:$0x0] %vm482, %v561
        %v569 = vcombine.high %v553, %v553
        %s571 = sadd.s32 %s487, 14
        %s572 = smul.u32 %s571, 8
        %s573 = sadd.s32 %s572, %s486
        %s574 = scalar_lea.vmem [#allocation2], %s573
        %575 = vst.msk [vmem:[%s574] ss:$8 sm:$0x3] %vm482, %v569
        %576 = vst.msk [vmem:[%s574] ss:$8 sm:$0x0] %vm482, %v569
        %p577 = scmp.eq.s32.totalorder %s26, 6
        // Predicated region
        $region69: #{tpu_custom_call.1} parent=55 // pred_check
          %p578 = pneg %p577
        $region70: #{tpu_custom_call.1} parent=55 // pred_check_branch
          %580 = sbr.rel (%p578) target = $region72
        $region71: #{tpu_custom_call.1} parent=55 // pred_region
          %v581 = vld [vmem:[#allocation2] sm:$0xf]
          %v582 = vld [vmem:[#allocation2 + $0x8] sm:$0xf]
          %v583 = vld [vmem:[#allocation2 + $0x10] sm:$0xf]
          %v584 = vld [vmem:[#allocation2 + $0x18] sm:$0xf]
          %v585 = vld [vmem:[#allocation2 + $0x20] sm:$0xf]
          %v586 = vld [vmem:[#allocation2 + $0x28] sm:$0xf]
          %v587 = vld [vmem:[#allocation2 + $0x30] sm:$0xf]
          %v588 = vld [vmem:[#allocation2 + $0x38] sm:$0xf]
          %v589 = vld [vmem:[#allocation2 + $0x40] sm:$0xf]
          %v590 = vld [vmem:[#allocation2 + $0x48] sm:$0xf]
          %v591 = vld [vmem:[#allocation2 + $0x50] sm:$0xf]
          %v592 = vld [vmem:[#allocation2 + $0x58] sm:$0xf]
          %v593 = vld [vmem:[#allocation2 + $0x60] sm:$0xf]
          %v594 = vld [vmem:[#allocation2 + $0x68] sm:$0xf]
          %v595 = vld [vmem:[#allocation2 + $0x70] sm:$0xf]
          %v596 = vld [vmem:[#allocation2 + $0x78] sm:$0xf]
          %v597 = vld [vmem:[#allocation2] sm:$0x70]
          %v598 = vld [vmem:[#allocation2 + $0x8] sm:$0x70]
          %v599 = vld [vmem:[#allocation2 + $0x10] sm:$0x70]
          %v600 = vld [vmem:[#allocation2 + $0x18] sm:$0x70]
          %v601 = vld [vmem:[#allocation2 + $0x20] sm:$0x70]
          %v602 = vld [vmem:[#allocation2 + $0x28] sm:$0x70]
          %v603 = vld [vmem:[#allocation2 + $0x30] sm:$0x70]
          %v604 = vld [vmem:[#allocation2 + $0x38] sm:$0x70]
          %v605 = vld [vmem:[#allocation2 + $0x40] sm:$0x70]
          %v606 = vld [vmem:[#allocation2 + $0x48] sm:$0x70]
          %v607 = vld [vmem:[#allocation2 + $0x50] sm:$0x70]
          %v608 = vld [vmem:[#allocation2 + $0x58] sm:$0x70]
          %v609 = vld [vmem:[#allocation2 + $0x60] sm:$0x70]
          %v610 = vld [vmem:[#allocation2 + $0x68] sm:$0x70]
          %v611 = vld [vmem:[#allocation2 + $0x70] sm:$0x70]
          %v612 = vld [vmem:[#allocation2 + $0x78] sm:$0x70]
          %v613 = vld [vmem:[%s3] sm:$0x3]
          %vm614 = vcmask 31744
          %v616 = vsel %vm614, %v613, 0
          %vm618 = vcmask 1043456
          %v620 = vsel %vm618, %v581, 0
          %v623 = vsel %vm618, %v582, 0
          %v626 = vsel %vm618, %v583, 0
          %v629 = vsel %vm618, %v584, 0
          %v632 = vsel %vm618, %v585, 0
          %v635 = vsel %vm618, %v586, 0
          %v638 = vsel %vm618, %v587, 0
          %v641 = vsel %vm618, %v588, 0
          %v644 = vsel %vm618, %v589, 0
          %v647 = vsel %vm618, %v590, 0
          %v650 = vsel %vm618, %v591, 0
          %v653 = vsel %vm618, %v592, 0
          %v656 = vsel %vm618, %v593, 0
          %v659 = vsel %vm618, %v594, 0
          %v662 = vsel %vm618, %v595, 0
          %v665 = vsel %vm618, %v596, 0
          %667 = vmatprep.subr.mxu0 0.0
          %668 = vmatpush1.msra.mxu0 0.0
          %669 = vmatprep.subr.mxu0 0.0
          %670 = vmatpush1.msra.mxu0 0.0
          %671 = vmatprep.subr.mxu0 0.0
          %672 = vmatpush1.msra.mxu0 0.0
          %673 = vmatprep.subr.mxu0 0.0
          %674 = vmatpush1.msra.mxu0 0.0
          %675 = vmatprep.subr.mxu0 0.0
          %676 = vmatpush1.msra.mxu0 0.0
          %677 = vmatprep.subr.mxu0 0.0
          %678 = vmatpush1.msra.mxu0 0.0
          %679 = vmatprep.subr.mxu0 0.0
          %680 = vmatpush1.msra.mxu0 0.0
          %681 = vmatprep.subr.mxu0 0.0
          %682 = vmatpush1.msra.mxu0 0.0
          %683 = vmatprep.subr.mxu0 0.0
          %684 = vmatpush1.msra.mxu0 0.0
          %685 = vmatprep.subr.mxu0 0.0
          %686 = vmatpush1.msra.mxu0 0.0
          %687 = vmatprep.subr.mxu0 0.0
          %688 = vmatpush1.msra.mxu0 0.0
          %689 = vmatprep.subr.mxu0 0.0
          %690 = vmatpush1.msra.mxu0 0.0
          %691 = vmatprep.subr.mxu0 0.0
          %692 = vmatpush1.msra.mxu0 0.0
          %693 = vmatprep.subr.mxu0 0.0
          %694 = vmatpush1.msra.mxu0 0.0
          %695 = vmatprep.subr.mxu0 0.0
          %696 = vmatpush1.msra.mxu0 0.0
          %697 = vmatprep.subr.mxu0 %v623
          %698 = vmatpush1.msra.mxu0 %v620
          %699 = vmatprep.subr.mxu0 0.0
          %700 = vmatpush2.msra.mxu0 0.0
          %701 = vmatprep.subr.mxu0 0.0
          %702 = vmatpush2.msra.mxu0 0.0
          %703 = vmatprep.subr.mxu0 0.0
          %704 = vmatpush2.msra.mxu0 0.0
          %705 = vmatprep.subr.mxu0 0.0
          %706 = vmatpush2.msra.mxu0 0.0
          %707 = vmatprep.subr.mxu0 0.0
          %708 = vmatpush2.msra.mxu0 0.0
          %709 = vmatprep.subr.mxu0 0.0
          %710 = vmatpush2.msra.mxu0 0.0
          %711 = vmatprep.subr.mxu0 0.0
          %712 = vmatpush2.msra.mxu0 0.0
          %713 = vmatprep.subr.mxu0 0.0
          %714 = vmatpush2.msra.mxu0 0.0
          %715 = vmatprep.subr.mxu0 0.0
          %716 = vmatpush2.msra.mxu0 0.0
          %717 = vmatprep.subr.mxu0 0.0
          %718 = vmatpush2.msra.mxu0 0.0
          %719 = vmatprep.subr.mxu0 0.0
          %720 = vmatpush2.msra.mxu0 0.0
          %721 = vmatprep.subr.mxu0 0.0
          %722 = vmatpush2.msra.mxu0 0.0
          %723 = vmatprep.subr.mxu0 0.0
          %724 = vmatpush2.msra.mxu0 0.0
          %725 = vmatprep.subr.mxu0 0.0
          %726 = vmatpush2.msra.mxu0 0.0
          %727 = vmatprep.subr.mxu0 0.0
          %728 = vmatpush2.msra.mxu0 0.0
          %729 = vmatprep.subr.mxu0 0.0
          %730 = vmatpush2.msra.mxu0 0.0
          %731 = vmatprep.mubr.f32.mxu0 0.0
          %732 = vmatmul.mubr.f32.gmra.mxu0 %v616
          %v733 = vpop.f32.mrf.mxu0
          %v734 = vadd.f32 0.0, %v733
          %v735 = vpop.f32.mrf.mxu0
          %v736 = vadd.f32 0.0, %v735
          %737 = vdwg.mxu0
          %738 = vmatprep.subr.mxu0 0.0
          %739 = vmatpush1.msra.mxu0 0.0
          %740 = vmatprep.subr.mxu0 0.0
          %741 = vmatpush1.msra.mxu0 0.0
          %742 = vmatprep.subr.mxu0 0.0
          %743 = vmatpush1.msra.mxu0 0.0
          %744 = vmatprep.subr.mxu0 0.0
          %745 = vmatpush1.msra.mxu0 0.0
          %746 = vmatprep.subr.mxu0 0.0
          %747 = vmatpush1.msra.mxu0 0.0
          %748 = vmatprep.subr.mxu0 0.0
          %749 = vmatpush1.msra.mxu0 0.0
          %750 = vmatprep.subr.mxu0 0.0
          %751 = vmatpush1.msra.mxu0 0.0
          %752 = vmatprep.subr.mxu0 0.0
          %753 = vmatpush1.msra.mxu0 0.0
          %754 = vmatprep.subr.mxu0 0.0
          %755 = vmatpush1.msra.mxu0 0.0
          %756 = vmatprep.subr.mxu0 0.0
          %757 = vmatpush1.msra.mxu0 0.0
          %758 = vmatprep.subr.mxu0 0.0
          %759 = vmatpush1.msra.mxu0 0.0
          %760 = vmatprep.subr.mxu0 0.0
          %761 = vmatpush1.msra.mxu0 0.0
          %762 = vmatprep.subr.mxu0 0.0
          %763 = vmatpush1.msra.mxu0 0.0
          %764 = vmatprep.subr.mxu0 0.0
          %765 = vmatpush1.msra.mxu0 0.0
          %766 = vmatprep.subr.mxu0 0.0
          %767 = vmatpush1.msra.mxu0 0.0
          %768 = vmatprep.subr.mxu0 %v629
          %769 = vmatpush1.msra.mxu0 %v626
          %770 = vmatprep.subr.mxu0 0.0
          %771 = vmatpush2.msra.mxu0 0.0
          %772 = vmatprep.subr.mxu0 0.0
          %773 = vmatpush2.msra.mxu0 0.0
          %774 = vmatprep.subr.mxu0 0.0
          %775 = vmatpush2.msra.mxu0 0.0
          %776 = vmatprep.subr.mxu0 0.0
          %777 = vmatpush2.msra.mxu0 0.0
          %778 = vmatprep.subr.mxu0 0.0
          %779 = vmatpush2.msra.mxu0 0.0
          %780 = vmatprep.subr.mxu0 0.0
          %781 = vmatpush2.msra.mxu0 0.0
          %782 = vmatprep.subr.mxu0 0.0
          %783 = vmatpush2.msra.mxu0 0.0
          %784 = vmatprep.subr.mxu0 0.0
          %785 = vmatpush2.msra.mxu0 0.0
          %786 = vmatprep.subr.mxu0 0.0
          %787 = vmatpush2.msra.mxu0 0.0
          %788 = vmatprep.subr.mxu0 0.0
          %789 = vmatpush2.msra.mxu0 0.0
          %790 = vmatprep.subr.mxu0 0.0
          %791 = vmatpush2.msra.mxu0 0.0
          %792 = vmatprep.subr.mxu0 0.0
          %793 = vmatpush2.msra.mxu0 0.0
          %794 = vmatprep.subr.mxu0 0.0
          %795 = vmatpush2.msra.mxu0 0.0
          %796 = vmatprep.subr.mxu0 0.0
          %797 = vmatpush2.msra.mxu0 0.0
          %798 = vmatprep.subr.mxu0 0.0
          %799 = vmatpush2.msra.mxu0 0.0
          %800 = vmatprep.subr.mxu0 0.0
          %801 = vmatpush2.msra.mxu0 0.0
          %802 = vmatprep.mubr.f32.mxu0 0.0
          %803 = vmatmul.mubr.f32.gmra.mxu0 %v616
          %v804 = vpop.f32.mrf.mxu0
          %v805 = vadd.f32 0.0, %v804
          %v806 = vpop.f32.mrf.mxu0
          %v807 = vadd.f32 0.0, %v806
          %808 = vdwg.mxu0
          %809 = vmatprep.subr.mxu0 0.0
          %810 = vmatpush1.msra.mxu0 0.0
          %811 = vmatprep.subr.mxu0 0.0
          %812 = vmatpush1.msra.mxu0 0.0
          %813 = vmatprep.subr.mxu0 0.0
          %814 = vmatpush1.msra.mxu0 0.0
          %815 = vmatprep.subr.mxu0 0.0
          %816 = vmatpush1.msra.mxu0 0.0
          %817 = vmatprep.subr.mxu0 0.0
          %818 = vmatpush1.msra.mxu0 0.0
          %819 = vmatprep.subr.mxu0 0.0
          %820 = vmatpush1.msra.mxu0 0.0
          %821 = vmatprep.subr.mxu0 0.0
          %822 = vmatpush1.msra.mxu0 0.0
          %823 = vmatprep.subr.mxu0 0.0
          %824 = vmatpush1.msra.mxu0 0.0
          %825 = vmatprep.subr.mxu0 0.0
          %826 = vmatpush1.msra.mxu0 0.0
          %827 = vmatprep.subr.mxu0 0.0
          %828 = vmatpush1.msra.mxu0 0.0
          %829 = vmatprep.subr.mxu0 0.0
          %830 = vmatpush1.msra.mxu0 0.0
          %831 = vmatprep.subr.mxu0 0.0
          %832 = vmatpush1.msra.mxu0 0.0
          %833 = vmatprep.subr.mxu0 0.0
          %834 = vmatpush1.msra.mxu0 0.0
          %835 = vmatprep.subr.mxu0 0.0
          %836 = vmatpush1.msra.mxu0 0.0
          %837 = vmatprep.subr.mxu0 0.0
          %838 = vmatpush1.msra.mxu0 0.0
          %839 = vmatprep.subr.mxu0 %v635
          %840 = vmatpush1.msra.mxu0 %v632
          %841 = vmatprep.subr.mxu0 0.0
          %842 = vmatpush2.msra.mxu0 0.0
          %843 = vmatprep.subr.mxu0 0.0
          %844 = vmatpush2.msra.mxu0 0.0
          %845 = vmatprep.subr.mxu0 0.0
          %846 = vmatpush2.msra.mxu0 0.0
          %847 = vmatprep.subr.mxu0 0.0
          %848 = vmatpush2.msra.mxu0 0.0
          %849 = vmatprep.subr.mxu0 0.0
          %850 = vmatpush2.msra.mxu0 0.0
          %851 = vmatprep.subr.mxu0 0.0
          %852 = vmatpush2.msra.mxu0 0.0
          %853 = vmatprep.subr.mxu0 0.0
          %854 = vmatpush2.msra.mxu0 0.0
          %855 = vmatprep.subr.mxu0 0.0
          %856 = vmatpush2.msra.mxu0 0.0
          %857 = vmatprep.subr.mxu0 0.0
          %858 = vmatpush2.msra.mxu0 0.0
          %859 = vmatprep.subr.mxu0 0.0
          %860 = vmatpush2.msra.mxu0 0.0
          %861 = vmatprep.subr.mxu0 0.0
          %862 = vmatpush2.msra.mxu0 0.0
          %863 = vmatprep.subr.mxu0 0.0
          %864 = vmatpush2.msra.mxu0 0.0
          %865 = vmatprep.subr.mxu0 0.0
          %866 = vmatpush2.msra.mxu0 0.0
          %867 = vmatprep.subr.mxu0 0.0
          %868 = vmatpush2.msra.mxu0 0.0
          %869 = vmatprep.subr.mxu0 0.0
          %870 = vmatpush2.msra.mxu0 0.0
          %871 = vmatprep.subr.mxu0 0.0
          %872 = vmatpush2.msra.mxu0 0.0
          %873 = vmatprep.mubr.f32.mxu0 0.0
          %874 = vmatmul.mubr.f32.gmra.mxu0 %v616
          %v875 = vpop.f32.mrf.mxu0
          %v876 = vadd.f32 0.0, %v875
          %v877 = vpop.f32.mrf.mxu0
          %v878 = vadd.f32 0.0, %v877
          %879 = vdwg.mxu0
          %880 = vmatprep.subr.mxu0 0.0
          %881 = vmatpush1.msra.mxu0 0.0
          %882 = vmatprep.subr.mxu0 0.0
          %883 = vmatpush1.msra.mxu0 0.0
          %884 = vmatprep.subr.mxu0 0.0
          %885 = vmatpush1.msra.mxu0 0.0
          %886 = vmatprep.subr.mxu0 0.0
          %887 = vmatpush1.msra.mxu0 0.0
          %888 = vmatprep.subr.mxu0 0.0
          %889 = vmatpush1.msra.mxu0 0.0
          %890 = vmatprep.subr.mxu0 0.0
          %891 = vmatpush1.msra.mxu0 0.0
          %892 = vmatprep.subr.mxu0 0.0
          %893 = vmatpush1.msra.mxu0 0.0
          %894 = vmatprep.subr.mxu0 0.0
          %895 = vmatpush1.msra.mxu0 0.0
          %896 = vmatprep.subr.mxu0 0.0
          %897 = vmatpush1.msra.mxu0 0.0
          %898 = vmatprep.subr.mxu0 0.0
          %899 = vmatpush1.msra.mxu0 0.0
          %900 = vmatprep.subr.mxu0 0.0
          %901 = vmatpush1.msra.mxu0 0.0
          %902 = vmatprep.subr.mxu0 0.0
          %903 = vmatpush1.msra.mxu0 0.0
          %904 = vmatprep.subr.mxu0 0.0
          %905 = vmatpush1.msra.mxu0 0.0
          %906 = vmatprep.subr.mxu0 0.0
          %907 = vmatpush1.msra.mxu0 0.0
          %908 = vmatprep.subr.mxu0 0.0
          %909 = vmatpush1.msra.mxu0 0.0
          %910 = vmatprep.subr.mxu0 %v641
          %911 = vmatpush1.msra.mxu0 %v638
          %912 = vmatprep.subr.mxu0 0.0
          %913 = vmatpush2.msra.mxu0 0.0
          %914 = vmatprep.subr.mxu0 0.0
          %915 = vmatpush2.msra.mxu0 0.0
          %916 = vmatprep.subr.mxu0 0.0
          %917 = vmatpush2.msra.mxu0 0.0
          %918 = vmatprep.subr.mxu0 0.0
          %919 = vmatpush2.msra.mxu0 0.0
          %920 = vmatprep.subr.mxu0 0.0
          %921 = vmatpush2.msra.mxu0 0.0
          %922 = vmatprep.subr.mxu0 0.0
          %923 = vmatpush2.msra.mxu0 0.0
          %924 = vmatprep.subr.mxu0 0.0
          %925 = vmatpush2.msra.mxu0 0.0
          %926 = vmatprep.subr.mxu0 0.0
          %927 = vmatpush2.msra.mxu0 0.0
          %928 = vmatprep.subr.mxu0 0.0
          %929 = vmatpush2.msra.mxu0 0.0
          %930 = vmatprep.subr.mxu0 0.0
          %931 = vmatpush2.msra.mxu0 0.0
          %932 = vmatprep.subr.mxu0 0.0
          %933 = vmatpush2.msra.mxu0 0.0
          %934 = vmatprep.subr.mxu0 0.0
          %935 = vmatpush2.msra.mxu0 0.0
          %936 = vmatprep.subr.mxu0 0.0
          %937 = vmatpush2.msra.mxu0 0.0
          %938 = vmatprep.subr.mxu0 0.0
          %939 = vmatpush2.msra.mxu0 0.0
          %940 = vmatprep.subr.mxu0 0.0
          %941 = vmatpush2.msra.mxu0 0.0
          %942 = vmatprep.subr.mxu0 0.0
          %943 = vmatpush2.msra.mxu0 0.0
          %944 = vmatprep.mubr.f32.mxu0 0.0
          %945 = vmatmul.mubr.f32.gmra.mxu0 %v616
          %v946 = vpop.f32.mrf.mxu0
          %v947 = vadd.f32 0.0, %v946
          %v948 = vpop.f32.mrf.mxu0
          %v949 = vadd.f32 0.0, %v948
          %950 = vdwg.mxu0
          %951 = vmatprep.subr.mxu0 0.0
          %952 = vmatpush1.msra.mxu0 0.0
          %953 = vmatprep.subr.mxu0 0.0
          %954 = vmatpush1.msra.mxu0 0.0
          %955 = vmatprep.subr.mxu0 0.0
          %956 = vmatpush1.msra.mxu0 0.0
          %957 = vmatprep.subr.mxu0 0.0
          %958 = vmatpush1.msra.mxu0 0.0
          %959 = vmatprep.subr.mxu0 0.0
          %960 = vmatpush1.msra.mxu0 0.0
          %961 = vmatprep.subr.mxu0 0.0
          %962 = vmatpush1.msra.mxu0 0.0
          %963 = vmatprep.subr.mxu0 0.0
          %964 = vmatpush1.msra.mxu0 0.0
          %965 = vmatprep.subr.mxu0 0.0
          %966 = vmatpush1.msra.mxu0 0.0
          %967 = vmatprep.subr.mxu0 0.0
          %968 = vmatpush1.msra.mxu0 0.0
          %969 = vmatprep.subr.mxu0 0.0
          %970 = vmatpush1.msra.mxu0 0.0
          %971 = vmatprep.subr.mxu0 0.0
          %972 = vmatpush1.msra.mxu0 0.0
          %973 = vmatprep.subr.mxu0 0.0
          %974 = vmatpush1.msra.mxu0 0.0
          %975 = vmatprep.subr.mxu0 0.0
          %976 = vmatpush1.msra.mxu0 0.0
          %977 = vmatprep.subr.mxu0 0.0
          %978 = vmatpush1.msra.mxu0 0.0
          %979 = vmatprep.subr.mxu0 0.0
          %980 = vmatpush1.msra.mxu0 0.0
          %981 = vmatprep.subr.mxu0 %v647
          %982 = vmatpush1.msra.mxu0 %v644
          %983 = vmatprep.subr.mxu0 0.0
          %984 = vmatpush2.msra.mxu0 0.0
          %985 = vmatprep.subr.mxu0 0.0
          %986 = vmatpush2.msra.mxu0 0.0
          %987 = vmatprep.subr.mxu0 0.0
          %988 = vmatpush2.msra.mxu0 0.0
          %989 = vmatprep.subr.mxu0 0.0
          %990 = vmatpush2.msra.mxu0 0.0
          %991 = vmatprep.subr.mxu0 0.0
          %992 = vmatpush2.msra.mxu0 0.0
          %993 = vmatprep.subr.mxu0 0.0
          %994 = vmatpush2.msra.mxu0 0.0
          %995 = vmatprep.subr.mxu0 0.0
          %996 = vmatpush2.msra.mxu0 0.0
          %997 = vmatprep.subr.mxu0 0.0
          %998 = vmatpush2.msra.mxu0 0.0
          %999 = vmatprep.subr.mxu0 0.0
          %1000 = vmatpush2.msra.mxu0 0.0
          %1001 = vmatprep.subr.mxu0 0.0
          %1002 = vmatpush2.msra.mxu0 0.0
          %1003 = vmatprep.subr.mxu0 0.0
          %1004 = vmatpush2.msra.mxu0 0.0
          %1005 = vmatprep.subr.mxu0 0.0
          %1006 = vmatpush2.msra.mxu0 0.0
          %1007 = vmatprep.subr.mxu0 0.0
          %1008 = vmatpush2.msra.mxu0 0.0
          %1009 = vmatprep.subr.mxu0 0.0
          %1010 = vmatpush2.msra.mxu0 0.0
          %1011 = vmatprep.subr.mxu0 0.0
          %1012 = vmatpush2.msra.mxu0 0.0
          %1013 = vmatprep.subr.mxu0 0.0
          %1014 = vmatpush2.msra.mxu0 0.0
          %1015 = vmatprep.mubr.f32.mxu0 0.0
          %1016 = vmatmul.mubr.f32.gmra.mxu0 %v616
          %v1017 = vpop.f32.mrf.mxu0
          %v1018 = vadd.f32 0.0, %v1017
          %v1019 = vpop.f32.mrf.mxu0
          %v1020 = vadd.f32 0.0, %v1019
          %1021 = vdwg.mxu0
          %1022 = vmatprep.subr.mxu0 0.0
          %1023 = vmatpush1.msra.mxu0 0.0
          %1024 = vmatprep.subr.mxu0 0.0
          %1025 = vmatpush1.msra.mxu0 0.0
          %1026 = vmatprep.subr.mxu0 0.0
          %1027 = vmatpush1.msra.mxu0 0.0
          %1028 = vmatprep.subr.mxu0 0.0
          %1029 = vmatpush1.msra.mxu0 0.0
          %1030 = vmatprep.subr.mxu0 0.0
          %1031 = vmatpush1.msra.mxu0 0.0
          %1032 = vmatprep.subr.mxu0 0.0
          %1033 = vmatpush1.msra.mxu0 0.0
          %1034 = vmatprep.subr.mxu0 0.0
          %1035 = vmatpush1.msra.mxu0 0.0
          %1036 = vmatprep.subr.mxu0 0.0
          %1037 = vmatpush1.msra.mxu0 0.0
          %1038 = vmatprep.subr.mxu0 0.0
          %1039 = vmatpush1.msra.mxu0 0.0
          %1040 = vmatprep.subr.mxu0 0.0
          %1041 = vmatpush1.msra.mxu0 0.0
          %1042 = vmatprep.subr.mxu0 0.0
          %1043 = vmatpush1.msra.mxu0 0.0
          %1044 = vmatprep.subr.mxu0 0.0
          %1045 = vmatpush1.msra.mxu0 0.0
          %1046 = vmatprep.subr.mxu0 0.0
          %1047 = vmatpush1.msra.mxu0 0.0
          %1048 = vmatprep.subr.mxu0 0.0
          %1049 = vmatpush1.msra.mxu0 0.0
          %1050 = vmatprep.subr.mxu0 0.0
          %1051 = vmatpush1.msra.mxu0 0.0
          %1052 = vmatprep.subr.mxu0 %v653
          %1053 = vmatpush1.msra.mxu0 %v650
          %1054 = vmatprep.subr.mxu0 0.0
          %1055 = vmatpush2.msra.mxu0 0.0
          %1056 = vmatprep.subr.mxu0 0.0
          %1057 = vmatpush2.msra.mxu0 0.0
          %1058 = vmatprep.subr.mxu0 0.0
          %1059 = vmatpush2.msra.mxu0 0.0
          %1060 = vmatprep.subr.mxu0 0.0
          %1061 = vmatpush2.msra.mxu0 0.0
          %1062 = vmatprep.subr.mxu0 0.0
          %1063 = vmatpush2.msra.mxu0 0.0
          %1064 = vmatprep.subr.mxu0 0.0
          %1065 = vmatpush2.msra.mxu0 0.0
          %1066 = vmatprep.subr.mxu0 0.0
          %1067 = vmatpush2.msra.mxu0 0.0
          %1068 = vmatprep.subr.mxu0 0.0
          %1069 = vmatpush2.msra.mxu0 0.0
          %1070 = vmatprep.subr.mxu0 0.0
          %1071 = vmatpush2.msra.mxu0 0.0
          %1072 = vmatprep.subr.mxu0 0.0
          %1073 = vmatpush2.msra.mxu0 0.0
          %1074 = vmatprep.subr.mxu0 0.0
          %1075 = vmatpush2.msra.mxu0 0.0
          %1076 = vmatprep.subr.mxu0 0.0
          %1077 = vmatpush2.msra.mxu0 0.0
          %1078 = vmatprep.subr.mxu0 0.0
          %1079 = vmatpush2.msra.mxu0 0.0
          %1080 = vmatprep.subr.mxu0 0.0
          %1081 = vmatpush2.msra.mxu0 0.0
          %1082 = vmatprep.subr.mxu0 0.0
          %1083 = vmatpush2.msra.mxu0 0.0
          %1084 = vmatprep.subr.mxu0 0.0
          %1085 = vmatpush2.msra.mxu0 0.0
          %1086 = vmatprep.mubr.f32.mxu0 0.0
          %1087 = vmatmul.mubr.f32.gmra.mxu0 %v616
          %v1088 = vpop.f32.mrf.mxu0
          %v1089 = vadd.f32 0.0, %v1088
          %v1090 = vpop.f32.mrf.mxu0
          %v1091 = vadd.f32 0.0, %v1090
          %1092 = vdwg.mxu0
          %1093 = vmatprep.subr.mxu0 0.0
          %1094 = vmatpush1.msra.mxu0 0.0
          %1095 = vmatprep.subr.mxu0 0.0
          %1096 = vmatpush1.msra.mxu0 0.0
          %1097 = vmatprep.subr.mxu0 0.0
          %1098 = vmatpush1.msra.mxu0 0.0
          %1099 = vmatprep.subr.mxu0 0.0
          %1100 = vmatpush1.msra.mxu0 0.0
          %1101 = vmatprep.subr.mxu0 0.0
          %1102 = vmatpush1.msra.mxu0 0.0
          %1103 = vmatprep.subr.mxu0 0.0
          %1104 = vmatpush1.msra.mxu0 0.0
          %1105 = vmatprep.subr.mxu0 0.0
          %1106 = vmatpush1.msra.mxu0 0.0
          %1107 = vmatprep.subr.mxu0 0.0
          %1108 = vmatpush1.msra.mxu0 0.0
          %1109 = vmatprep.subr.mxu0 0.0
          %1110 = vmatpush1.msra.mxu0 0.0
          %1111 = vmatprep.subr.mxu0 0.0
          %1112 = vmatpush1.msra.mxu0 0.0
          %1113 = vmatprep.subr.mxu0 0.0
          %1114 = vmatpush1.msra.mxu0 0.0
          %1115 = vmatprep.subr.mxu0 0.0
          %1116 = vmatpush1.msra.mxu0 0.0
          %1117 = vmatprep.subr.mxu0 0.0
          %1118 = vmatpush1.msra.mxu0 0.0
          %1119 = vmatprep.subr.mxu0 0.0
          %1120 = vmatpush1.msra.mxu0 0.0
          %1121 = vmatprep.subr.mxu0 0.0
          %1122 = vmatpush1.msra.mxu0 0.0
          %1123 = vmatprep.subr.mxu0 %v659
          %1124 = vmatpush1.msra.mxu0 %v656
          %1125 = vmatprep.subr.mxu0 0.0
          %1126 = vmatpush2.msra.mxu0 0.0
          %1127 = vmatprep.subr.mxu0 0.0
          %1128 = vmatpush2.msra.mxu0 0.0
          %1129 = vmatprep.subr.mxu0 0.0
          %1130 = vmatpush2.msra.mxu0 0.0
          %1131 = vmatprep.subr.mxu0 0.0
          %1132 = vmatpush2.msra.mxu0 0.0
          %1133 = vmatprep.subr.mxu0 0.0
          %1134 = vmatpush2.msra.mxu0 0.0
          %1135 = vmatprep.subr.mxu0 0.0
          %1136 = vmatpush2.msra.mxu0 0.0
          %1137 = vmatprep.subr.mxu0 0.0
          %1138 = vmatpush2.msra.mxu0 0.0
          %1139 = vmatprep.subr.mxu0 0.0
          %1140 = vmatpush2.msra.mxu0 0.0
          %1141 = vmatprep.subr.mxu0 0.0
          %1142 = vmatpush2.msra.mxu0 0.0
          %1143 = vmatprep.subr.mxu0 0.0
          %1144 = vmatpush2.msra.mxu0 0.0
          %1145 = vmatprep.subr.mxu0 0.0
          %1146 = vmatpush2.msra.mxu0 0.0
          %1147 = vmatprep.subr.mxu0 0.0
          %1148 = vmatpush2.msra.mxu0 0.0
          %1149 = vmatprep.subr.mxu0 0.0
          %1150 = vmatpush2.msra.mxu0 0.0
          %1151 = vmatprep.subr.mxu0 0.0
          %1152 = vmatpush2.msra.mxu0 0.0
          %1153 = vmatprep.subr.mxu0 0.0
          %1154 = vmatpush2.msra.mxu0 0.0
          %1155 = vmatprep.subr.mxu0 0.0
          %1156 = vmatpush2.msra.mxu0 0.0
          %1157 = vmatprep.mubr.f32.mxu0 0.0
          %1158 = vmatmul.mubr.f32.gmra.mxu0 %v616
          %v1159 = vpop.f32.mrf.mxu0
          %v1160 = vadd.f32 0.0, %v1159
          %v1161 = vpop.f32.mrf.mxu0
          %v1162 = vadd.f32 0.0, %v1161
          %1163 = vdwg.mxu0
          %1164 = vmatprep.subr.mxu0 0.0
          %1165 = vmatpush1.msra.mxu0 0.0
          %1166 = vmatprep.subr.mxu0 0.0
          %1167 = vmatpush1.msra.mxu0 0.0
          %1168 = vmatprep.subr.mxu0 0.0
          %1169 = vmatpush1.msra.mxu0 0.0
          %1170 = vmatprep.subr.mxu0 0.0
          %1171 = vmatpush1.msra.mxu0 0.0
          %1172 = vmatprep.subr.mxu0 0.0
          %1173 = vmatpush1.msra.mxu0 0.0
          %1174 = vmatprep.subr.mxu0 0.0
          %1175 = vmatpush1.msra.mxu0 0.0
          %1176 = vmatprep.subr.mxu0 0.0
          %1177 = vmatpush1.msra.mxu0 0.0
          %1178 = vmatprep.subr.mxu0 0.0
          %1179 = vmatpush1.msra.mxu0 0.0
          %1180 = vmatprep.subr.mxu0 0.0
          %1181 = vmatpush1.msra.mxu0 0.0
          %1182 = vmatprep.subr.mxu0 0.0
          %1183 = vmatpush1.msra.mxu0 0.0
          %1184 = vmatprep.subr.mxu0 0.0
          %1185 = vmatpush1.msra.mxu0 0.0
          %1186 = vmatprep.subr.mxu0 0.0
          %1187 = vmatpush1.msra.mxu0 0.0
          %1188 = vmatprep.subr.mxu0 0.0
          %1189 = vmatpush1.msra.mxu0 0.0
          %1190 = vmatprep.subr.mxu0 0.0
          %1191 = vmatpush1.msra.mxu0 0.0
          %1192 = vmatprep.subr.mxu0 0.0
          %1193 = vmatpush1.msra.mxu0 0.0
          %1194 = vmatprep.subr.mxu0 %v665
          %1195 = vmatpush1.msra.mxu0 %v662
          %1196 = vmatprep.subr.mxu0 0.0
          %1197 = vmatpush2.msra.mxu0 0.0
          %1198 = vmatprep.subr.mxu0 0.0
          %1199 = vmatpush2.msra.mxu0 0.0
          %1200 = vmatprep.subr.mxu0 0.0
          %1201 = vmatpush2.msra.mxu0 0.0
          %1202 = vmatprep.subr.mxu0 0.0
          %1203 = vmatpush2.msra.mxu0 0.0
          %1204 = vmatprep.subr.mxu0 0.0
          %1205 = vmatpush2.msra.mxu0 0.0
          %1206 = vmatprep.subr.mxu0 0.0
          %1207 = vmatpush2.msra.mxu0 0.0
          %1208 = vmatprep.subr.mxu0 0.0
          %1209 = vmatpush2.msra.mxu0 0.0
          %1210 = vmatprep.subr.mxu0 0.0
          %1211 = vmatpush2.msra.mxu0 0.0
          %1212 = vmatprep.subr.mxu0 0.0
          %1213 = vmatpush2.msra.mxu0 0.0
          %1214 = vmatprep.subr.mxu0 0.0
          %1215 = vmatpush2.msra.mxu0 0.0
          %1216 = vmatprep.subr.mxu0 0.0
          %1217 = vmatpush2.msra.mxu0 0.0
          %1218 = vmatprep.subr.mxu0 0.0
          %1219 = vmatpush2.msra.mxu0 0.0
          %1220 = vmatprep.subr.mxu0 0.0
          %1221 = vmatpush2.msra.mxu0 0.0
          %1222 = vmatprep.subr.mxu0 0.0
          %1223 = vmatpush2.msra.mxu0 0.0
          %1224 = vmatprep.subr.mxu0 0.0
          %1225 = vmatpush2.msra.mxu0 0.0
          %1226 = vmatprep.subr.mxu0 0.0
          %1227 = vmatpush2.msra.mxu0 0.0
          %1228 = vmatprep.mubr.f32.mxu0 0.0
          %1229 = vmatmul.mubr.f32.gmra.mxu0 %v616
          %v1230 = vpop.f32.mrf.mxu0
          %v1231 = vadd.f32 0.0, %v1230
          %v1232 = vpop.f32.mrf.mxu0
          %v1233 = vadd.f32 0.0, %v1232
          %1234 = vdwg.mxu0
          %v1235 = vpack.c.bf16 %v597, %v597
          %v1236 = vpack.c.bf16 %v598, %v598
          %v1237 = vpack.c.bf16 %v599, %v599
          %v1238 = vpack.c.bf16 %v600, %v600
          %v1239 = vpack.c.bf16 %v601, %v601
          %v1240 = vpack.c.bf16 %v602, %v602
          %v1241 = vpack.c.bf16 %v603, %v603
          %v1242 = vpack.c.bf16 %v604, %v604
          %v1243 = vpack.c.bf16 %v605, %v605
          %v1244 = vpack.c.bf16 %v606, %v606
          %v1245 = vpack.c.bf16 %v607, %v607
          %v1246 = vpack.c.bf16 %v608, %v608
          %v1247 = vpack.c.bf16 %v609, %v609
          %v1248 = vpack.c.bf16 %v610, %v610
          %v1249 = vpack.c.bf16 %v611, %v611
          %v1250 = vpack.c.bf16 %v612, %v612
          %v1251 = vld [vmem:[#allocation6] sm:$0xf]
          %v1252 = vld [vmem:[#allocation6 + $0x4] sm:$0xf]
          %v1253 = vld [vmem:[#allocation6 + $0x8] sm:$0xf]
          %v1254 = vld [vmem:[#allocation6 + $0xc] sm:$0xf]
          %v1255 = vld [vmem:[#allocation6 + $0x10] sm:$0xf]
          %v1256 = vld [vmem:[#allocation6 + $0x14] sm:$0xf]
          %v1257 = vld [vmem:[#allocation6 + $0x18] sm:$0xf]
          %v1258 = vld [vmem:[#allocation6 + $0x1c] sm:$0xf]
          %v1259 = vld [vmem:[#allocation6 + $0x20] sm:$0xf]
          %v1260 = vld [vmem:[#allocation6 + $0x24] sm:$0xf]
          %v1261 = vld [vmem:[#allocation6 + $0x28] sm:$0xf]
          %v1262 = vld [vmem:[#allocation6 + $0x2c] sm:$0xf]
          %v1263 = vld [vmem:[#allocation6 + $0x30] sm:$0xf]
          %v1264 = vld [vmem:[#allocation6 + $0x34] sm:$0xf]
          %v1265 = vld [vmem:[#allocation6 + $0x38] sm:$0xf]
          %v1266 = vld [vmem:[#allocation6 + $0x3c] sm:$0xf]
          %v1267 = vld [vmem:[#allocation6 + $0x40] sm:$0xf]
          %v1268 = vld [vmem:[#allocation6 + $0x44] sm:$0xf]
          %v1269 = vld [vmem:[#allocation6 + $0x48] sm:$0xf]
          %v1270 = vld [vmem:[#allocation6 + $0x4c] sm:$0xf]
          %v1271 = vld [vmem:[#allocation6 + $0x50] sm:$0xf]
          %v1272 = vld [vmem:[#allocation6 + $0x54] sm:$0xf]
          %v1273 = vld [vmem:[#allocation6 + $0x58] sm:$0xf]
          %v1274 = vld [vmem:[#allocation6 + $0x5c] sm:$0xf]
          %v1275 = vld [vmem:[#allocation6 + $0x60] sm:$0xf]
          %v1276 = vld [vmem:[#allocation6 + $0x64] sm:$0xf]
          %v1277 = vld [vmem:[#allocation6 + $0x68] sm:$0xf]
          %v1278 = vld [vmem:[#allocation6 + $0x6c] sm:$0xf]
          %v1279 = vld [vmem:[#allocation6 + $0x70] sm:$0xf]
          %v1280 = vld [vmem:[#allocation6 + $0x74] sm:$0xf]
          %v1281 = vld [vmem:[#allocation6 + $0x78] sm:$0xf]
          %v1282 = vld [vmem:[#allocation6 + $0x7c] sm:$0xf]
          %v1283 = vld [vmem:[#allocation6 + $0x80] sm:$0xf]
          %v1284 = vld [vmem:[#allocation6 + $0x84] sm:$0xf]
          %v1285 = vld [vmem:[#allocation6 + $0x88] sm:$0xf]
          %v1286 = vld [vmem:[#allocation6 + $0x8c] sm:$0xf]
          %v1287 = vld [vmem:[#allocation6 + $0x90] sm:$0xf]
          %v1288 = vld [vmem:[#allocation6 + $0x94] sm:$0xf]
          %v1289 = vld [vmem:[#allocation6 + $0x98] sm:$0xf]
          %v1290 = vld [vmem:[#allocation6 + $0x9c] sm:$0xf]
          %v1291 = vld [vmem:[#allocation6 + $0xa0] sm:$0xf]
          %v1292 = vld [vmem:[#allocation6 + $0xa4] sm:$0xf]
          %v1293 = vld [vmem:[#allocation6 + $0xa8] sm:$0xf]
          %v1294 = vld [vmem:[#allocation6 + $0xac] sm:$0xf]
          %v1295 = vld [vmem:[#allocation6 + $0xb0] sm:$0xf]
          %v1296 = vld [vmem:[#allocation6 + $0xb4] sm:$0xf]
          %v1297 = vld [vmem:[#allocation6 + $0xb8] sm:$0xf]
          %v1298 = vld [vmem:[#allocation6 + $0xbc] sm:$0xf]
          %v1299 = vld [vmem:[#allocation6 + $0xc0] sm:$0xf]
          %v1300 = vld [vmem:[#allocation6 + $0xc4] sm:$0xf]
          %v1301 = vld [vmem:[#allocation6 + $0xc8] sm:$0xf]
          %v1302 = vld [vmem:[#allocation6 + $0xcc] sm:$0xf]
          %v1303 = vld [vmem:[#allocation6 + $0xd0] sm:$0xf]
          %v1304 = vld [vmem:[#allocation6 + $0xd4] sm:$0xf]
          %v1305 = vld [vmem:[#allocation6 + $0xd8] sm:$0xf]
          %v1306 = vld [vmem:[#allocation6 + $0xdc] sm:$0xf]
          %v1307 = vld [vmem:[#allocation6 + $0xe0] sm:$0xf]
          %v1308 = vld [vmem:[#allocation6 + $0xe4] sm:$0xf]
          %v1309 = vld [vmem:[#allocation6 + $0xe8] sm:$0xf]
          %v1310 = vld [vmem:[#allocation6 + $0xec] sm:$0xf]
          %v1311 = vld [vmem:[#allocation6 + $0xf0] sm:$0xf]
          %v1312 = vld [vmem:[#allocation6 + $0xf4] sm:$0xf]
          %v1313 = vld [vmem:[#allocation6 + $0xf8] sm:$0xf]
          %v1314 = vld [vmem:[#allocation6 + $0xfc] sm:$0xf]
          %v1315 = vld [vmem:[#allocation6 + $0x100] sm:$0xf]
          %v1316 = vld [vmem:[#allocation6 + $0x104] sm:$0xf]
          %v1317 = vld [vmem:[#allocation6 + $0x108] sm:$0xf]
          %v1318 = vld [vmem:[#allocation6 + $0x10c] sm:$0xf]
          %v1319 = vld [vmem:[#allocation6 + $0x110] sm:$0xf]
          %v1320 = vld [vmem:[#allocation6 + $0x114] sm:$0xf]
          %v1321 = vld [vmem:[#allocation6 + $0x118] sm:$0xf]
          %v1322 = vld [vmem:[#allocation6 + $0x11c] sm:$0xf]
          %v1323 = vld [vmem:[#allocation6 + $0x120] sm:$0xf]
          %v1324 = vld [vmem:[#allocation6 + $0x124] sm:$0xf]
          %v1325 = vld [vmem:[#allocation6 + $0x128] sm:$0xf]
          %v1326 = vld [vmem:[#allocation6 + $0x12c] sm:$0xf]
          %v1327 = vld [vmem:[#allocation6 + $0x130] sm:$0xf]
          %v1328 = vld [vmem:[#allocation6 + $0x134] sm:$0xf]
          %v1329 = vld [vmem:[#allocation6 + $0x138] sm:$0xf]
          %v1330 = vld [vmem:[#allocation6 + $0x13c] sm:$0xf]
          %v1331 = vld [vmem:[#allocation6 + $0x140] sm:$0xf]
          %v1332 = vld [vmem:[#allocation6 + $0x144] sm:$0xf]
          %v1333 = vld [vmem:[#allocation6 + $0x148] sm:$0xf]
          %v1334 = vld [vmem:[#allocation6 + $0x14c] sm:$0xf]
          %v1335 = vld [vmem:[#allocation6 + $0x150] sm:$0xf]
          %v1336 = vld [vmem:[#allocation6 + $0x154] sm:$0xf]
          %v1337 = vld [vmem:[#allocation6 + $0x158] sm:$0xf]
          %v1338 = vld [vmem:[#allocation6 + $0x15c] sm:$0xf]
          %v1339 = vld [vmem:[#allocation6 + $0x160] sm:$0xf]
          %v1340 = vld [vmem:[#allocation6 + $0x164] sm:$0xf]
          %v1341 = vld [vmem:[#allocation6 + $0x168] sm:$0xf]
          %v1342 = vld [vmem:[#allocation6 + $0x16c] sm:$0xf]
          %v1343 = vld [vmem:[#allocation6 + $0x170] sm:$0xf]
          %v1344 = vld [vmem:[#allocation6 + $0x174] sm:$0xf]
          %v1345 = vld [vmem:[#allocation6 + $0x178] sm:$0xf]
          %v1346 = vld [vmem:[#allocation6 + $0x17c] sm:$0xf]
          %v1347 = vld [vmem:[#allocation6 + $0x180] sm:$0xf]
          %v1348 = vld [vmem:[#allocation6 + $0x184] sm:$0xf]
          %v1349 = vld [vmem:[#allocation6 + $0x188] sm:$0xf]
          %v1350 = vld [vmem:[#allocation6 + $0x18c] sm:$0xf]
          %v1351 = vld [vmem:[#allocation6 + $0x190] sm:$0xf]
          %v1352 = vld [vmem:[#allocation6 + $0x194] sm:$0xf]
          %v1353 = vld [vmem:[#allocation6 + $0x198] sm:$0xf]
          %v1354 = vld [vmem:[#allocation6 + $0x19c] sm:$0xf]
          %v1355 = vld [vmem:[#allocation6 + $0x1a0] sm:$0xf]
          %v1356 = vld [vmem:[#allocation6 + $0x1a4] sm:$0xf]
          %v1357 = vld [vmem:[#allocation6 + $0x1a8] sm:$0xf]
          %v1358 = vld [vmem:[#allocation6 + $0x1ac] sm:$0xf]
          %v1359 = vld [vmem:[#allocation6 + $0x1b0] sm:$0xf]
          %v1360 = vld [vmem:[#allocation6 + $0x1b4] sm:$0xf]
          %v1361 = vld [vmem:[#allocation6 + $0x1b8] sm:$0xf]
          %v1362 = vld [vmem:[#allocation6 + $0x1bc] sm:$0xf]
          %v1363 = vld [vmem:[#allocation6 + $0x1c0] sm:$0xf]
          %v1364 = vld [vmem:[#allocation6 + $0x1c4] sm:$0xf]
          %v1365 = vld [vmem:[#allocation6 + $0x1c8] sm:$0xf]
          %v1366 = vld [vmem:[#allocation6 + $0x1cc] sm:$0xf]
          %v1367 = vld [vmem:[#allocation6 + $0x1d0] sm:$0xf]
          %v1368 = vld [vmem:[#allocation6 + $0x1d4] sm:$0xf]
          %v1369 = vld [vmem:[#allocation6 + $0x1d8] sm:$0xf]
          %v1370 = vld [vmem:[#allocation6 + $0x1dc] sm:$0xf]
          %v1371 = vld [vmem:[#allocation6 + $0x1e0] sm:$0xf]
          %v1372 = vld [vmem:[#allocation6 + $0x1e4] sm:$0xf]
          %v1373 = vld [vmem:[#allocation6 + $0x1e8] sm:$0xf]
          %v1374 = vld [vmem:[#allocation6 + $0x1ec] sm:$0xf]
          %v1375 = vld [vmem:[#allocation6 + $0x1f0] sm:$0xf]
          %v1376 = vld [vmem:[#allocation6 + $0x1f4] sm:$0xf]
          %v1377 = vld [vmem:[#allocation6 + $0x1f8] sm:$0xf]
          %v1378 = vld [vmem:[#allocation6 + $0x1fc] sm:$0xf]
          %v1379 = vld [vmem:[#allocation6 + $0x200] sm:$0xf]
          %v1380 = vld [vmem:[#allocation6 + $0x204] sm:$0xf]
          %v1381 = vld [vmem:[#allocation6 + $0x208] sm:$0xf]
          %v1382 = vld [vmem:[#allocation6 + $0x20c] sm:$0xf]
          %v1383 = vld [vmem:[#allocation6 + $0x210] sm:$0xf]
          %v1384 = vld [vmem:[#allocation6 + $0x214] sm:$0xf]
          %v1385 = vld [vmem:[#allocation6 + $0x218] sm:$0xf]
          %v1386 = vld [vmem:[#allocation6 + $0x21c] sm:$0xf]
          %v1387 = vld [vmem:[#allocation6 + $0x220] sm:$0xf]
          %v1388 = vld [vmem:[#allocation6 + $0x224] sm:$0xf]
          %v1389 = vld [vmem:[#allocation6 + $0x228] sm:$0xf]
          %v1390 = vld [vmem:[#allocation6 + $0x22c] sm:$0xf]
          %v1391 = vld [vmem:[#allocation6 + $0x230] sm:$0xf]
          %v1392 = vld [vmem:[#allocation6 + $0x234] sm:$0xf]
          %v1393 = vld [vmem:[#allocation6 + $0x238] sm:$0xf]
          %v1394 = vld [vmem:[#allocation6 + $0x23c] sm:$0xf]
          %v1395 = vld [vmem:[#allocation6 + $0x240] sm:$0xf]
          %v1396 = vld [vmem:[#allocation6 + $0x244] sm:$0xf]
          %v1397 = vld [vmem:[#allocation6 + $0x248] sm:$0xf]
          %v1398 = vld [vmem:[#allocation6 + $0x24c] sm:$0xf]
          %v1399 = vld [vmem:[#allocation6 + $0x250] sm:$0xf]
          %v1400 = vld [vmem:[#allocation6 + $0x254] sm:$0xf]
          %v1401 = vld [vmem:[#allocation6 + $0x258] sm:$0xf]
          %v1402 = vld [vmem:[#allocation6 + $0x25c] sm:$0xf]
          %v1403 = vld [vmem:[#allocation6 + $0x260] sm:$0xf]
          %v1404 = vld [vmem:[#allocation6 + $0x264] sm:$0xf]
          %v1405 = vld [vmem:[#allocation6 + $0x268] sm:$0xf]
          %v1406 = vld [vmem:[#allocation6 + $0x26c] sm:$0xf]
          %v1407 = vld [vmem:[#allocation6 + $0x270] sm:$0xf]
          %v1408 = vld [vmem:[#allocation6 + $0x274] sm:$0xf]
          %v1409 = vld [vmem:[#allocation6 + $0x278] sm:$0xf]
          %v1410 = vld [vmem:[#allocation6 + $0x27c] sm:$0xf]
          %v1411 = vld [vmem:[#allocation6 + $0x280] sm:$0xf]
          %v1412 = vld [vmem:[#allocation6 + $0x284] sm:$0xf]
          %v1413 = vld [vmem:[#allocation6 + $0x288] sm:$0xf]
          %v1414 = vld [vmem:[#allocation6 + $0x28c] sm:$0xf]
          %v1415 = vld [vmem:[#allocation6 + $0x290] sm:$0xf]
          %v1416 = vld [vmem:[#allocation6 + $0x294] sm:$0xf]
          %v1417 = vld [vmem:[#allocation6 + $0x298] sm:$0xf]
          %v1418 = vld [vmem:[#allocation6 + $0x29c] sm:$0xf]
          %v1419 = vld [vmem:[#allocation6 + $0x2a0] sm:$0xf]
          %v1420 = vld [vmem:[#allocation6 + $0x2a4] sm:$0xf]
          %v1421 = vld [vmem:[#allocation6 + $0x2a8] sm:$0xf]
          %v1422 = vld [vmem:[#allocation6 + $0x2ac] sm:$0xf]
          %v1423 = vld [vmem:[#allocation6 + $0x2b0] sm:$0xf]
          %v1424 = vld [vmem:[#allocation6 + $0x2b4] sm:$0xf]
          %v1425 = vld [vmem:[#allocation6 + $0x2b8] sm:$0xf]
          %v1426 = vld [vmem:[#allocation6 + $0x2bc] sm:$0xf]
          %v1427 = vld [vmem:[#allocation6 + $0x2c0] sm:$0xf]
          %v1428 = vld [vmem:[#allocation6 + $0x2c4] sm:$0xf]
          %v1429 = vld [vmem:[#allocation6 + $0x2c8] sm:$0xf]
          %v1430 = vld [vmem:[#allocation6 + $0x2cc] sm:$0xf]
          %v1431 = vld [vmem:[#allocation6 + $0x2d0] sm:$0xf]
          %v1432 = vld [vmem:[#allocation6 + $0x2d4] sm:$0xf]
          %v1433 = vld [vmem:[#allocation6 + $0x2d8] sm:$0xf]
          %v1434 = vld [vmem:[#allocation6 + $0x2dc] sm:$0xf]
          %v1435 = vld [vmem:[#allocation6 + $0x2e0] sm:$0xf]
          %v1436 = vld [vmem:[#allocation6 + $0x2e4] sm:$0xf]
          %v1437 = vld [vmem:[#allocation6 + $0x2e8] sm:$0xf]
          %v1438 = vld [vmem:[#allocation6 + $0x2ec] sm:$0xf]
          %v1439 = vld [vmem:[#allocation6 + $0x2f0] sm:$0xf]
          %v1440 = vld [vmem:[#allocation6 + $0x2f4] sm:$0xf]
          %v1441 = vld [vmem:[#allocation6 + $0x2f8] sm:$0xf]
          %v1442 = vld [vmem:[#allocation6 + $0x2fc] sm:$0xf]
          %v1443 = vld [vmem:[#allocation6 + $0x300] sm:$0xf]
          %v1444 = vld [vmem:[#allocation6 + $0x304] sm:$0xf]
          %v1445 = vld [vmem:[#allocation6 + $0x308] sm:$0xf]
          %v1446 = vld [vmem:[#allocation6 + $0x30c] sm:$0xf]
          %v1447 = vld [vmem:[#allocation6 + $0x310] sm:$0xf]
          %v1448 = vld [vmem:[#allocation6 + $0x314] sm:$0xf]
          %v1449 = vld [vmem:[#allocation6 + $0x318] sm:$0xf]
          %v1450 = vld [vmem:[#allocation6 + $0x31c] sm:$0xf]
          %v1451 = vld [vmem:[#allocation6 + $0x320] sm:$0xf]
          %v1452 = vld [vmem:[#allocation6 + $0x324] sm:$0xf]
          %v1453 = vld [vmem:[#allocation6 + $0x328] sm:$0xf]
          %v1454 = vld [vmem:[#allocation6 + $0x32c] sm:$0xf]
          %v1455 = vld [vmem:[#allocation6 + $0x330] sm:$0xf]
          %v1456 = vld [vmem:[#allocation6 + $0x334] sm:$0xf]
          %v1457 = vld [vmem:[#allocation6 + $0x338] sm:$0xf]
          %v1458 = vld [vmem:[#allocation6 + $0x33c] sm:$0xf]
          %v1459 = vld [vmem:[#allocation6 + $0x340] sm:$0xf]
          %v1460 = vld [vmem:[#allocation6 + $0x344] sm:$0xf]
          %v1461 = vld [vmem:[#allocation6 + $0x348] sm:$0xf]
          %v1462 = vld [vmem:[#allocation6 + $0x34c] sm:$0xf]
          %v1463 = vld [vmem:[#allocation6 + $0x350] sm:$0xf]
          %v1464 = vld [vmem:[#allocation6 + $0x354] sm:$0xf]
          %v1465 = vld [vmem:[#allocation6 + $0x358] sm:$0xf]
          %v1466 = vld [vmem:[#allocation6 + $0x35c] sm:$0xf]
          %v1467 = vld [vmem:[#allocation6 + $0x360] sm:$0xf]
          %v1468 = vld [vmem:[#allocation6 + $0x364] sm:$0xf]
          %v1469 = vld [vmem:[#allocation6 + $0x368] sm:$0xf]
          %v1470 = vld [vmem:[#allocation6 + $0x36c] sm:$0xf]
          %v1471 = vld [vmem:[#allocation6 + $0x370] sm:$0xf]
          %v1472 = vld [vmem:[#allocation6 + $0x374] sm:$0xf]
          %v1473 = vld [vmem:[#allocation6 + $0x378] sm:$0xf]
          %v1474 = vld [vmem:[#allocation6 + $0x37c] sm:$0xf]
          %v1475 = vld [vmem:[#allocation6 + $0x380] sm:$0xf]
          %v1476 = vld [vmem:[#allocation6 + $0x384] sm:$0xf]
          %v1477 = vld [vmem:[#allocation6 + $0x388] sm:$0xf]
          %v1478 = vld [vmem:[#allocation6 + $0x38c] sm:$0xf]
          %v1479 = vld [vmem:[#allocation6 + $0x390] sm:$0xf]
          %v1480 = vld [vmem:[#allocation6 + $0x394] sm:$0xf]
          %v1481 = vld [vmem:[#allocation6 + $0x398] sm:$0xf]
          %v1482 = vld [vmem:[#allocation6 + $0x39c] sm:$0xf]
          %v1483 = vld [vmem:[#allocation6 + $0x3a0] sm:$0xf]
          %v1484 = vld [vmem:[#allocation6 + $0x3a4] sm:$0xf]
          %v1485 = vld [vmem:[#allocation6 + $0x3a8] sm:$0xf]
          %v1486 = vld [vmem:[#allocation6 + $0x3ac] sm:$0xf]
          %v1487 = vld [vmem:[#allocation6 + $0x3b0] sm:$0xf]
          %v1488 = vld [vmem:[#allocation6 + $0x3b4] sm:$0xf]
          %v1489 = vld [vmem:[#allocation6 + $0x3b8] sm:$0xf]
          %v1490 = vld [vmem:[#allocation6 + $0x3bc] sm:$0xf]
          %v1491 = vld [vmem:[#allocation6 + $0x3c0] sm:$0xf]
          %v1492 = vld [vmem:[#allocation6 + $0x3c4] sm:$0xf]
          %v1493 = vld [vmem:[#allocation6 + $0x3c8] sm:$0xf]
          %v1494 = vld [vmem:[#allocation6 + $0x3cc] sm:$0xf]
          %v1495 = vld [vmem:[#allocation6 + $0x3d0] sm:$0xf]
          %v1496 = vld [vmem:[#allocation6 + $0x3d4] sm:$0xf]
          %v1497 = vld [vmem:[#allocation6 + $0x3d8] sm:$0xf]
          %v1498 = vld [vmem:[#allocation6 + $0x3dc] sm:$0xf]
          %v1499 = vld [vmem:[#allocation6 + $0x3e0] sm:$0xf]
          %v1500 = vld [vmem:[#allocation6 + $0x3e4] sm:$0xf]
          %v1501 = vld [vmem:[#allocation6 + $0x3e8] sm:$0xf]
          %v1502 = vld [vmem:[#allocation6 + $0x3ec] sm:$0xf]
          %v1503 = vld [vmem:[#allocation6 + $0x3f0] sm:$0xf]
          %v1504 = vld [vmem:[#allocation6 + $0x3f4] sm:$0xf]
          %v1505 = vld [vmem:[#allocation6 + $0x3f8] sm:$0xf]
          %v1506 = vld [vmem:[#allocation6 + $0x3fc] sm:$0xf]
          %v1523 = vrot.slane %v1235, 2
          %v1524 = vrot.slane %v1236, 2
          %v1525 = vrot.slane %v1237, 2
          %v1526 = vrot.slane %v1238, 2
          %v1527 = vrot.slane %v1239, 2
          %v1528 = vrot.slane %v1240, 2
          %v1529 = vrot.slane %v1241, 2
          %v1530 = vrot.slane %v1242, 2
          %v1531 = vrot.slane %v1243, 2
          %v1532 = vrot.slane %v1244, 2
          %v1533 = vrot.slane %v1245, 2
          %v1534 = vrot.slane %v1246, 2
          %v1535 = vrot.slane %v1247, 2
          %v1536 = vrot.slane %v1248, 2
          %v1537 = vrot.slane %v1249, 2
          %v1538 = vrot.slane %v1250, 2
          %v1811 = vunpack.c.l.b16 %v1251
          %v1812 = vunpack.c.l.b16 %v1252
          %v1813 = vunpack.c.l.b16 %v1253
          %v1814 = vunpack.c.l.b16 %v1254
          %v1815 = vunpack.c.l.b16 %v1255
          %v1816 = vunpack.c.l.b16 %v1256
          %v1817 = vunpack.c.l.b16 %v1257
          %v1818 = vunpack.c.l.b16 %v1258
          %v1819 = vunpack.c.l.b16 %v1259
          %v1820 = vunpack.c.l.b16 %v1260
          %v1821 = vunpack.c.l.b16 %v1261
          %v1822 = vunpack.c.l.b16 %v1262
          %v1823 = vunpack.c.l.b16 %v1263
          %v1824 = vunpack.c.l.b16 %v1264
          %v1825 = vunpack.c.l.b16 %v1265
          %v1826 = vunpack.c.l.b16 %v1266
          %v1827 = vunpack.c.l.b16 %v1267
          %v1828 = vunpack.c.l.b16 %v1268
          %v1829 = vunpack.c.l.b16 %v1269
          %v1830 = vunpack.c.l.b16 %v1270
          %v1831 = vunpack.c.l.b16 %v1271
          %v1832 = vunpack.c.l.b16 %v1272
          %v1833 = vunpack.c.l.b16 %v1273
          %v1834 = vunpack.c.l.b16 %v1274
          %v1835 = vunpack.c.l.b16 %v1275
          %v1836 = vunpack.c.l.b16 %v1276
          %v1837 = vunpack.c.l.b16 %v1277
          %v1838 = vunpack.c.l.b16 %v1278
          %v1839 = vunpack.c.l.b16 %v1279
          %v1840 = vunpack.c.l.b16 %v1280
          %v1841 = vunpack.c.l.b16 %v1281
          %v1842 = vunpack.c.l.b16 %v1282
          %v1843 = vunpack.c.l.b16 %v1283
          %v1844 = vunpack.c.l.b16 %v1284
          %v1845 = vunpack.c.l.b16 %v1285
          %v1846 = vunpack.c.l.b16 %v1286
          %v1847 = vunpack.c.l.b16 %v1287
          %v1848 = vunpack.c.l.b16 %v1288
          %v1849 = vunpack.c.l.b16 %v1289
          %v1850 = vunpack.c.l.b16 %v1290
          %v1851 = vunpack.c.l.b16 %v1291
          %v1852 = vunpack.c.l.b16 %v1292
          %v1853 = vunpack.c.l.b16 %v1293
          %v1854 = vunpack.c.l.b16 %v1294
          %v1855 = vunpack.c.l.b16 %v1295
          %v1856 = vunpack.c.l.b16 %v1296
          %v1857 = vunpack.c.l.b16 %v1297
          %v1858 = vunpack.c.l.b16 %v1298
          %v1859 = vunpack.c.l.b16 %v1299
          %v1860 = vunpack.c.l.b16 %v1300
          %v1861 = vunpack.c.l.b16 %v1301
          %v1862 = vunpack.c.l.b16 %v1302
          %v1863 = vunpack.c.l.b16 %v1303
          %v1864 = vunpack.c.l.b16 %v1304
          %v1865 = vunpack.c.l.b16 %v1305
          %v1866 = vunpack.c.l.b16 %v1306
          %v1867 = vunpack.c.l.b16 %v1307
          %v1868 = vunpack.c.l.b16 %v1308
          %v1869 = vunpack.c.l.b16 %v1309
          %v1870 = vunpack.c.l.b16 %v1310
          %v1871 = vunpack.c.l.b16 %v1311
          %v1872 = vunpack.c.l.b16 %v1312
          %v1873 = vunpack.c.l.b16 %v1313
          %v1874 = vunpack.c.l.b16 %v1314
          %v1875 = vunpack.c.l.b16 %v1315
          %v1876 = vunpack.c.l.b16 %v1316
          %v1877 = vunpack.c.l.b16 %v1317
          %v1878 = vunpack.c.l.b16 %v1318
          %v1879 = vunpack.c.l.b16 %v1319
          %v1880 = vunpack.c.l.b16 %v1320
          %v1881 = vunpack.c.l.b16 %v1321
          %v1882 = vunpack.c.l.b16 %v1322
          %v1883 = vunpack.c.l.b16 %v1323
          %v1884 = vunpack.c.l.b16 %v1324
          %v1885 = vunpack.c.l.b16 %v1325
          %v1886 = vunpack.c.l.b16 %v1326
          %v1887 = vunpack.c.l.b16 %v1327
          %v1888 = vunpack.c.l.b16 %v1328
          %v1889 = vunpack.c.l.b16 %v1329
          %v1890 = vunpack.c.l.b16 %v1330
          %v1891 = vunpack.c.l.b16 %v1331
          %v1892 = vunpack.c.l.b16 %v1332
          %v1893 = vunpack.c.l.b16 %v1333
          %v1894 = vunpack.c.l.b16 %v1334
          %v1895 = vunpack.c.l.b16 %v1335
          %v1896 = vunpack.c.l.b16 %v1336
          %v1897 = vunpack.c.l.b16 %v1337
          %v1898 = vunpack.c.l.b16 %v1338
          %v1899 = vunpack.c.l.b16 %v1339
          %v1900 = vunpack.c.l.b16 %v1340
          %v1901 = vunpack.c.l.b16 %v1341
          %v1902 = vunpack.c.l.b16 %v1342
          %v1903 = vunpack.c.l.b16 %v1343
          %v1904 = vunpack.c.l.b16 %v1344
          %v1905 = vunpack.c.l.b16 %v1345
          %v1906 = vunpack.c.l.b16 %v1346
          %v1907 = vunpack.c.l.b16 %v1347
          %v1908 = vunpack.c.l.b16 %v1348
          %v1909 = vunpack.c.l.b16 %v1349
          %v1910 = vunpack.c.l.b16 %v1350
          %v1911 = vunpack.c.l.b16 %v1351
          %v1912 = vunpack.c.l.b16 %v1352
          %v1913 = vunpack.c.l.b16 %v1353
          %v1914 = vunpack.c.l.b16 %v1354
          %v1915 = vunpack.c.l.b16 %v1355
          %v1916 = vunpack.c.l.b16 %v1356
          %v1917 = vunpack.c.l.b16 %v1357
          %v1918 = vunpack.c.l.b16 %v1358
          %v1919 = vunpack.c.l.b16 %v1359
          %v1920 = vunpack.c.l.b16 %v1360
          %v1921 = vunpack.c.l.b16 %v1361
          %v1922 = vunpack.c.l.b16 %v1362
          %v1923 = vunpack.c.l.b16 %v1363
          %v1924 = vunpack.c.l.b16 %v1364
          %v1925 = vunpack.c.l.b16 %v1365
          %v1926 = vunpack.c.l.b16 %v1366
          %v1927 = vunpack.c.l.b16 %v1367
          %v1928 = vunpack.c.l.b16 %v1368
          %v1929 = vunpack.c.l.b16 %v1369
          %v1930 = vunpack.c.l.b16 %v1370
          %v1931 = vunpack.c.l.b16 %v1371
          %v1932 = vunpack.c.l.b16 %v1372
          %v1933 = vunpack.c.l.b16 %v1373
          %v1934 = vunpack.c.l.b16 %v1374
          %v1935 = vunpack.c.l.b16 %v1375
          %v1936 = vunpack.c.l.b16 %v1376
          %v1937 = vunpack.c.l.b16 %v1377
          %v1938 = vunpack.c.l.b16 %v1378
          %v1939 = vunpack.c.l.b16 %v1379
          %v1940 = vunpack.c.l.b16 %v1380
          %v1941 = vunpack.c.l.b16 %v1381
          %v1942 = vunpack.c.l.b16 %v1382
          %v1943 = vunpack.c.l.b16 %v1383
          %v1944 = vunpack.c.l.b16 %v1384
          %v1945 = vunpack.c.l.b16 %v1385
          %v1946 = vunpack.c.l.b16 %v1386
          %v1947 = vunpack.c.l.b16 %v1387
          %v1948 = vunpack.c.l.b16 %v1388
          %v1949 = vunpack.c.l.b16 %v1389
          %v1950 = vunpack.c.l.b16 %v1390
          %v1951 = vunpack.c.l.b16 %v1391
          %v1952 = vunpack.c.l.b16 %v1392
          %v1953 = vunpack.c.l.b16 %v1393
          %v1954 = vunpack.c.l.b16 %v1394
          %v1955 = vunpack.c.l.b16 %v1395
          %v1956 = vunpack.c.l.b16 %v1396
          %v1957 = vunpack.c.l.b16 %v1397
          %v1958 = vunpack.c.l.b16 %v1398
          %v1959 = vunpack.c.l.b16 %v1399
          %v1960 = vunpack.c.l.b16 %v1400
          %v1961 = vunpack.c.l.b16 %v1401
          %v1962 = vunpack.c.l.b16 %v1402
          %v1963 = vunpack.c.l.b16 %v1403
          %v1964 = vunpack.c.l.b16 %v1404
          %v1965 = vunpack.c.l.b16 %v1405
          %v1966 = vunpack.c.l.b16 %v1406
          %v1967 = vunpack.c.l.b16 %v1407
          %v1968 = vunpack.c.l.b16 %v1408
          %v1969 = vunpack.c.l.b16 %v1409
          %v1970 = vunpack.c.l.b16 %v1410
          %v1971 = vunpack.c.l.b16 %v1411
          %v1972 = vunpack.c.l.b16 %v1412
          %v1973 = vunpack.c.l.b16 %v1413
          %v1974 = vunpack.c.l.b16 %v1414
          %v1975 = vunpack.c.l.b16 %v1415
          %v1976 = vunpack.c.l.b16 %v1416
          %v1977 = vunpack.c.l.b16 %v1417
          %v1978 = vunpack.c.l.b16 %v1418
          %v1979 = vunpack.c.l.b16 %v1419
          %v1980 = vunpack.c.l.b16 %v1420
          %v1981 = vunpack.c.l.b16 %v1421
          %v1982 = vunpack.c.l.b16 %v1422
          %v1983 = vunpack.c.l.b16 %v1423
          %v1984 = vunpack.c.l.b16 %v1424
          %v1985 = vunpack.c.l.b16 %v1425
          %v1986 = vunpack.c.l.b16 %v1426
          %v1987 = vunpack.c.l.b16 %v1427
          %v1988 = vunpack.c.l.b16 %v1428
          %v1989 = vunpack.c.l.b16 %v1429
          %v1990 = vunpack.c.l.b16 %v1430
          %v1991 = vunpack.c.l.b16 %v1431
          %v1992 = vunpack.c.l.b16 %v1432
          %v1993 = vunpack.c.l.b16 %v1433
          %v1994 = vunpack.c.l.b16 %v1434
          %v1995 = vunpack.c.l.b16 %v1435
          %v1996 = vunpack.c.l.b16 %v1436
          %v1997 = vunpack.c.l.b16 %v1437
          %v1998 = vunpack.c.l.b16 %v1438
          %v1999 = vunpack.c.l.b16 %v1439
          %v2000 = vunpack.c.l.b16 %v1440
          %v2001 = vunpack.c.l.b16 %v1441
          %v2002 = vunpack.c.l.b16 %v1442
          %v2003 = vunpack.c.l.b16 %v1443
          %v2004 = vunpack.c.l.b16 %v1444
          %v2005 = vunpack.c.l.b16 %v1445
          %v2006 = vunpack.c.l.b16 %v1446
          %v2007 = vunpack.c.l.b16 %v1447
          %v2008 = vunpack.c.l.b16 %v1448
          %v2009 = vunpack.c.l.b16 %v1449
          %v2010 = vunpack.c.l.b16 %v1450
          %v2011 = vunpack.c.l.b16 %v1451
          %v2012 = vunpack.c.l.b16 %v1452
          %v2013 = vunpack.c.l.b16 %v1453
          %v2014 = vunpack.c.l.b16 %v1454
          %v2015 = vunpack.c.l.b16 %v1455
          %v2016 = vunpack.c.l.b16 %v1456
          %v2017 = vunpack.c.l.b16 %v1457
          %v2018 = vunpack.c.l.b16 %v1458
          %v2019 = vunpack.c.l.b16 %v1459
          %v2020 = vunpack.c.l.b16 %v1460
          %v2021 = vunpack.c.l.b16 %v1461
          %v2022 = vunpack.c.l.b16 %v1462
          %v2023 = vunpack.c.l.b16 %v1463
          %v2024 = vunpack.c.l.b16 %v1464
          %v2025 = vunpack.c.l.b16 %v1465
          %v2026 = vunpack.c.l.b16 %v1466
          %v2027 = vunpack.c.l.b16 %v1467
          %v2028 = vunpack.c.l.b16 %v1468
          %v2029 = vunpack.c.l.b16 %v1469
          %v2030 = vunpack.c.l.b16 %v1470
          %v2031 = vunpack.c.l.b16 %v1471
          %v2032 = vunpack.c.l.b16 %v1472
          %v2033 = vunpack.c.l.b16 %v1473
          %v2034 = vunpack.c.l.b16 %v1474
          %v2035 = vunpack.c.l.b16 %v1475
          %v2036 = vunpack.c.l.b16 %v1476
          %v2037 = vunpack.c.l.b16 %v1477
          %v2038 = vunpack.c.l.b16 %v1478
          %v2039 = vunpack.c.l.b16 %v1479
          %v2040 = vunpack.c.l.b16 %v1480
          %v2041 = vunpack.c.l.b16 %v1481
          %v2042 = vunpack.c.l.b16 %v1482
          %v2043 = vunpack.c.l.b16 %v1483
          %v2044 = vunpack.c.l.b16 %v1484
          %v2045 = vunpack.c.l.b16 %v1485
          %v2046 = vunpack.c.l.b16 %v1486
          %v2047 = vunpack.c.l.b16 %v1487
          %v2048 = vunpack.c.l.b16 %v1488
          %v2049 = vunpack.c.l.b16 %v1489
          %v2050 = vunpack.c.l.b16 %v1490
          %v2051 = vunpack.c.l.b16 %v1491
          %v2052 = vunpack.c.l.b16 %v1492
          %v2053 = vunpack.c.l.b16 %v1493
          %v2054 = vunpack.c.l.b16 %v1494
          %v2055 = vunpack.c.l.b16 %v1495
          %v2056 = vunpack.c.l.b16 %v1496
          %v2057 = vunpack.c.l.b16 %v1497
          %v2058 = vunpack.c.l.b16 %v1498
          %v2059 = vunpack.c.l.b16 %v1499
          %v2060 = vunpack.c.l.b16 %v1500
          %v2061 = vunpack.c.l.b16 %v1501
          %v2062 = vunpack.c.l.b16 %v1502
          %v2063 = vunpack.c.l.b16 %v1503
          %v2064 = vunpack.c.l.b16 %v1504
          %v2065 = vunpack.c.l.b16 %v1505
          %v2066 = vunpack.c.l.b16 %v1506
          %v2067 = vpack.c.b16 %v1812, %v1811
          %v2068 = vpack.c.b16 %v1814, %v1813
          %v2069 = vpack.c.b16 %v1816, %v1815
          %v2070 = vpack.c.b16 %v1818, %v1817
          %v2071 = vpack.c.b16 %v1820, %v1819
          %v2072 = vpack.c.b16 %v1822, %v1821
          %v2073 = vpack.c.b16 %v1824, %v1823
          %v2074 = vpack.c.b16 %v1826, %v1825
          %v2075 = vpack.c.b16 %v1828, %v1827
          %v2076 = vpack.c.b16 %v1830, %v1829
          %v2077 = vpack.c.b16 %v1832, %v1831
          %v2078 = vpack.c.b16 %v1834, %v1833
          %v2079 = vpack.c.b16 %v1836, %v1835
          %v2080 = vpack.c.b16 %v1838, %v1837
          %v2081 = vpack.c.b16 %v1840, %v1839
          %v2082 = vpack.c.b16 %v1842, %v1841
          %v2083 = vpack.c.b16 %v1844, %v1843
          %v2084 = vpack.c.b16 %v1846, %v1845
          %v2085 = vpack.c.b16 %v1848, %v1847
          %v2086 = vpack.c.b16 %v1850, %v1849
          %v2087 = vpack.c.b16 %v1852, %v1851
          %v2088 = vpack.c.b16 %v1854, %v1853
          %v2089 = vpack.c.b16 %v1856, %v1855
          %v2090 = vpack.c.b16 %v1858, %v1857
          %v2091 = vpack.c.b16 %v1860, %v1859
          %v2092 = vpack.c.b16 %v1862, %v1861
          %v2093 = vpack.c.b16 %v1864, %v1863
          %v2094 = vpack.c.b16 %v1866, %v1865
          %v2095 = vpack.c.b16 %v1868, %v1867
          %v2096 = vpack.c.b16 %v1870, %v1869
          %v2097 = vpack.c.b16 %v1872, %v1871
          %v2098 = vpack.c.b16 %v1874, %v1873
          %v2099 = vpack.c.b16 %v1876, %v1875
          %v2100 = vpack.c.b16 %v1878, %v1877
          %v2101 = vpack.c.b16 %v1880, %v1879
          %v2102 = vpack.c.b16 %v1882, %v1881
          %v2103 = vpack.c.b16 %v1884, %v1883
          %v2104 = vpack.c.b16 %v1886, %v1885
          %v2105 = vpack.c.b16 %v1888, %v1887
          %v2106 = vpack.c.b16 %v1890, %v1889
          %v2107 = vpack.c.b16 %v1892, %v1891
          %v2108 = vpack.c.b16 %v1894, %v1893
          %v2109 = vpack.c.b16 %v1896, %v1895
          %v2110 = vpack.c.b16 %v1898, %v1897
          %v2111 = vpack.c.b16 %v1900, %v1899
          %v2112 = vpack.c.b16 %v1902, %v1901
          %v2113 = vpack.c.b16 %v1904, %v1903
          %v2114 = vpack.c.b16 %v1906, %v1905
          %v2115 = vpack.c.b16 %v1908, %v1907
          %v2116 = vpack.c.b16 %v1910, %v1909
          %v2117 = vpack.c.b16 %v1912, %v1911
          %v2118 = vpack.c.b16 %v1914, %v1913
          %v2119 = vpack.c.b16 %v1916, %v1915
          %v2120 = vpack.c.b16 %v1918, %v1917
          %v2121 = vpack.c.b16 %v1920, %v1919
          %v2122 = vpack.c.b16 %v1922, %v1921
          %v2123 = vpack.c.b16 %v1924, %v1923
          %v2124 = vpack.c.b16 %v1926, %v1925
          %v2125 = vpack.c.b16 %v1928, %v1927
          %v2126 = vpack.c.b16 %v1930, %v1929
          %v2127 = vpack.c.b16 %v1932, %v1931
          %v2128 = vpack.c.b16 %v1934, %v1933
          %v2129 = vpack.c.b16 %v1936, %v1935
          %v2130 = vpack.c.b16 %v1938, %v1937
          %v2131 = vpack.c.b16 %v1940, %v1939
          %v2132 = vpack.c.b16 %v1942, %v1941
          %v2133 = vpack.c.b16 %v1944, %v1943
          %v2134 = vpack.c.b16 %v1946, %v1945
          %v2135 = vpack.c.b16 %v1948, %v1947
          %v2136 = vpack.c.b16 %v1950, %v1949
          %v2137 = vpack.c.b16 %v1952, %v1951
          %v2138 = vpack.c.b16 %v1954, %v1953
          %v2139 = vpack.c.b16 %v1956, %v1955
          %v2140 = vpack.c.b16 %v1958, %v1957
          %v2141 = vpack.c.b16 %v1960, %v1959
          %v2142 = vpack.c.b16 %v1962, %v1961
          %v2143 = vpack.c.b16 %v1964, %v1963
          %v2144 = vpack.c.b16 %v1966, %v1965
          %v2145 = vpack.c.b16 %v1968, %v1967
          %v2146 = vpack.c.b16 %v1970, %v1969
          %v2147 = vpack.c.b16 %v1972, %v1971
          %v2148 = vpack.c.b16 %v1974, %v1973
          %v2149 = vpack.c.b16 %v1976, %v1975
          %v2150 = vpack.c.b16 %v1978, %v1977
          %v2151 = vpack.c.b16 %v1980, %v1979
          %v2152 = vpack.c.b16 %v1982, %v1981
          %v2153 = vpack.c.b16 %v1984, %v1983
          %v2154 = vpack.c.b16 %v1986, %v1985
          %v2155 = vpack.c.b16 %v1988, %v1987
          %v2156 = vpack.c.b16 %v1990, %v1989
          %v2157 = vpack.c.b16 %v1992, %v1991
          %v2158 = vpack.c.b16 %v1994, %v1993
          %v2159 = vpack.c.b16 %v1996, %v1995
          %v2160 = vpack.c.b16 %v1998, %v1997
          %v2161 = vpack.c.b16 %v2000, %v1999
          %v2162 = vpack.c.b16 %v2002, %v2001
          %v2163 = vpack.c.b16 %v2004, %v2003
          %v2164 = vpack.c.b16 %v2006, %v2005
          %v2165 = vpack.c.b16 %v2008, %v2007
          %v2166 = vpack.c.b16 %v2010, %v2009
          %v2167 = vpack.c.b16 %v2012, %v2011
          %v2168 = vpack.c.b16 %v2014, %v2013
          %v2169 = vpack.c.b16 %v2016, %v2015
          %v2170 = vpack.c.b16 %v2018, %v2017
          %v2171 = vpack.c.b16 %v2020, %v2019
          %v2172 = vpack.c.b16 %v2022, %v2021
          %v2173 = vpack.c.b16 %v2024, %v2023
          %v2174 = vpack.c.b16 %v2026, %v2025
          %v2175 = vpack.c.b16 %v2028, %v2027
          %v2176 = vpack.c.b16 %v2030, %v2029
          %v2177 = vpack.c.b16 %v2032, %v2031
          %v2178 = vpack.c.b16 %v2034, %v2033
          %v2179 = vpack.c.b16 %v2036, %v2035
          %v2180 = vpack.c.b16 %v2038, %v2037
          %v2181 = vpack.c.b16 %v2040, %v2039
          %v2182 = vpack.c.b16 %v2042, %v2041
          %v2183 = vpack.c.b16 %v2044, %v2043
          %v2184 = vpack.c.b16 %v2046, %v2045
          %v2185 = vpack.c.b16 %v2048, %v2047
          %v2186 = vpack.c.b16 %v2050, %v2049
          %v2187 = vpack.c.b16 %v2052, %v2051
          %v2188 = vpack.c.b16 %v2054, %v2053
          %v2189 = vpack.c.b16 %v2056, %v2055
          %v2190 = vpack.c.b16 %v2058, %v2057
          %v2191 = vpack.c.b16 %v2060, %v2059
          %v2192 = vpack.c.b16 %v2062, %v2061
          %v2193 = vpack.c.b16 %v2064, %v2063
          %v2194 = vpack.c.b16 %v2066, %v2065
          %2323 = vmatprep.subr.bf16.mxu0 0
          %2324 = vmatpush1.bf16.msra.mxu0 %v2074
          %2325 = vmatprep.subr.bf16.mxu0 0
          %2326 = vmatpush1.bf16.msra.mxu0 %v2073
          %2327 = vmatprep.subr.bf16.mxu0 0
          %2328 = vmatpush1.bf16.msra.mxu0 %v2072
          %2329 = vmatprep.subr.bf16.mxu0 0
          %2330 = vmatpush1.bf16.msra.mxu0 %v2071
          %2331 = vmatprep.subr.bf16.mxu0 0
          %2332 = vmatpush1.bf16.msra.mxu0 %v2070
          %2333 = vmatprep.subr.bf16.mxu0 0
          %2334 = vmatpush1.bf16.msra.mxu0 %v2069
          %2335 = vmatprep.subr.bf16.mxu0 0
          %2336 = vmatpush1.bf16.msra.mxu0 %v2068
          %2337 = vmatprep.subr.bf16.mxu0 0
          %2338 = vmatpush1.bf16.msra.mxu0 %v2067
          %2339 = vmatprep.subr.bf16.mxu0 0
          %2340 = vmatpush2.bf16.msra.mxu0 %v2082
          %2341 = vmatprep.subr.bf16.mxu0 0
          %2342 = vmatpush2.bf16.msra.mxu0 %v2081
          %2343 = vmatprep.subr.bf16.mxu0 0
          %2344 = vmatpush2.bf16.msra.mxu0 %v2080
          %2345 = vmatprep.subr.bf16.mxu0 0
          %2346 = vmatpush2.bf16.msra.mxu0 %v2079
          %2347 = vmatprep.subr.bf16.mxu0 0
          %2348 = vmatpush2.bf16.msra.mxu0 %v2078
          %2349 = vmatprep.subr.bf16.mxu0 0
          %2350 = vmatpush2.bf16.msra.mxu0 %v2077
          %2351 = vmatprep.subr.bf16.mxu0 0
          %2352 = vmatpush2.bf16.msra.mxu0 %v2076
          %2353 = vmatprep.subr.bf16.mxu0 0
          %2354 = vmatpush2.bf16.msra.mxu0 %v2075
          %2355 = vmatprep.mubr.bf16.mxu0 %v1524
          %2356 = vmatmul.mubr.bf16.gmra.mxu0 %v1523
          %v2357 = vpop.f32.mrf.mxu0
          %v2358 = vadd.f32 0.0, %v2357
          %v2359 = vpop.f32.mrf.mxu0
          %v2360 = vpop.f32.mrf.mxu0
          %v2361 = vpop.f32.mrf.mxu0
          %2362 = vdwg.mxu0
          %2363 = vmatprep.subr.bf16.mxu0 0
          %2364 = vmatpush1.bf16.msra.mxu0 %v2090
          %2365 = vmatprep.subr.bf16.mxu0 0
          %2366 = vmatpush1.bf16.msra.mxu0 %v2089
          %2367 = vmatprep.subr.bf16.mxu0 0
          %2368 = vmatpush1.bf16.msra.mxu0 %v2088
          %2369 = vmatprep.subr.bf16.mxu0 0
          %2370 = vmatpush1.bf16.msra.mxu0 %v2087
          %2371 = vmatprep.subr.bf16.mxu0 0
          %2372 = vmatpush1.bf16.msra.mxu0 %v2086
          %2373 = vmatprep.subr.bf16.mxu0 0
          %2374 = vmatpush1.bf16.msra.mxu0 %v2085
          %2375 = vmatprep.subr.bf16.mxu0 0
          %2376 = vmatpush1.bf16.msra.mxu0 %v2084
          %2377 = vmatprep.subr.bf16.mxu0 0
          %2378 = vmatpush1.bf16.msra.mxu0 %v2083
          %2379 = vmatprep.subr.bf16.mxu0 0
          %2380 = vmatpush2.bf16.msra.mxu0 %v2098
          %2381 = vmatprep.subr.bf16.mxu0 0
          %2382 = vmatpush2.bf16.msra.mxu0 %v2097
          %2383 = vmatprep.subr.bf16.mxu0 0
          %2384 = vmatpush2.bf16.msra.mxu0 %v2096
          %2385 = vmatprep.subr.bf16.mxu0 0
          %2386 = vmatpush2.bf16.msra.mxu0 %v2095
          %2387 = vmatprep.subr.bf16.mxu0 0
          %2388 = vmatpush2.bf16.msra.mxu0 %v2094
          %2389 = vmatprep.subr.bf16.mxu0 0
          %2390 = vmatpush2.bf16.msra.mxu0 %v2093
          %2391 = vmatprep.subr.bf16.mxu0 0
          %2392 = vmatpush2.bf16.msra.mxu0 %v2092
          %2393 = vmatprep.subr.bf16.mxu0 0
          %2394 = vmatpush2.bf16.msra.mxu0 %v2091
          %2395 = vmatprep.mubr.bf16.mxu0 %v1526
          %2396 = vmatmul.mubr.bf16.gmra.mxu0 %v1525
          %v2397 = vpop.f32.mrf.mxu0
          %v2398 = vadd.f32 %v2358, %v2397
          %v2399 = vpop.f32.mrf.mxu0
          %v2400 = vpop.f32.mrf.mxu0
          %v2401 = vpop.f32.mrf.mxu0
          %2402 = vdwg.mxu0
          %2403 = vmatprep.subr.bf16.mxu0 0
          %2404 = vmatpush1.bf16.msra.mxu0 %v2106
          %2405 = vmatprep.subr.bf16.mxu0 0
          %2406 = vmatpush1.bf16.msra.mxu0 %v2105
          %2407 = vmatprep.subr.bf16.mxu0 0
          %2408 = vmatpush1.bf16.msra.mxu0 %v2104
          %2409 = vmatprep.subr.bf16.mxu0 0
          %2410 = vmatpush1.bf16.msra.mxu0 %v2103
          %2411 = vmatprep.subr.bf16.mxu0 0
          %2412 = vmatpush1.bf16.msra.mxu0 %v2102
          %2413 = vmatprep.subr.bf16.mxu0 0
          %2414 = vmatpush1.bf16.msra.mxu0 %v2101
          %2415 = vmatprep.subr.bf16.mxu0 0
          %2416 = vmatpush1.bf16.msra.mxu0 %v2100
          %2417 = vmatprep.subr.bf16.mxu0 0
          %2418 = vmatpush1.bf16.msra.mxu0 %v2099
          %2419 = vmatprep.subr.bf16.mxu0 0
          %2420 = vmatpush2.bf16.msra.mxu0 %v2114
          %2421 = vmatprep.subr.bf16.mxu0 0
          %2422 = vmatpush2.bf16.msra.mxu0 %v2113
          %2423 = vmatprep.subr.bf16.mxu0 0
          %2424 = vmatpush2.bf16.msra.mxu0 %v2112
          %2425 = vmatprep.subr.bf16.mxu0 0
          %2426 = vmatpush2.bf16.msra.mxu0 %v2111
          %2427 = vmatprep.subr.bf16.mxu0 0
          %2428 = vmatpush2.bf16.msra.mxu0 %v2110
          %2429 = vmatprep.subr.bf16.mxu0 0
          %2430 = vmatpush2.bf16.msra.mxu0 %v2109
          %2431 = vmatprep.subr.bf16.mxu0 0
          %2432 = vmatpush2.bf16.msra.mxu0 %v2108
          %2433 = vmatprep.subr.bf16.mxu0 0
          %2434 = vmatpush2.bf16.msra.mxu0 %v2107
          %2435 = vmatprep.mubr.bf16.mxu0 %v1528
          %2436 = vmatmul.mubr.bf16.gmra.mxu0 %v1527
          %v2437 = vpop.f32.mrf.mxu0
          %v2438 = vadd.f32 %v2398, %v2437
          %v2439 = vpop.f32.mrf.mxu0
          %v2440 = vpop.f32.mrf.mxu0
          %v2441 = vpop.f32.mrf.mxu0
          %2442 = vdwg.mxu0
          %2443 = vmatprep.subr.bf16.mxu0 0
          %2444 = vmatpush1.bf16.msra.mxu0 %v2122
          %2445 = vmatprep.subr.bf16.mxu0 0
          %2446 = vmatpush1.bf16.msra.mxu0 %v2121
          %2447 = vmatprep.subr.bf16.mxu0 0
          %2448 = vmatpush1.bf16.msra.mxu0 %v2120
          %2449 = vmatprep.subr.bf16.mxu0 0
          %2450 = vmatpush1.bf16.msra.mxu0 %v2119
          %2451 = vmatprep.subr.bf16.mxu0 0
          %2452 = vmatpush1.bf16.msra.mxu0 %v2118
          %2453 = vmatprep.subr.bf16.mxu0 0
          %2454 = vmatpush1.bf16.msra.mxu0 %v2117
          %2455 = vmatprep.subr.bf16.mxu0 0
          %2456 = vmatpush1.bf16.msra.mxu0 %v2116
          %2457 = vmatprep.subr.bf16.mxu0 0
          %2458 = vmatpush1.bf16.msra.mxu0 %v2115
          %2459 = vmatprep.subr.bf16.mxu0 0
          %2460 = vmatpush2.bf16.msra.mxu0 %v2130
          %2461 = vmatprep.subr.bf16.mxu0 0
          %2462 = vmatpush2.bf16.msra.mxu0 %v2129
          %2463 = vmatprep.subr.bf16.mxu0 0
          %2464 = vmatpush2.bf16.msra.mxu0 %v2128
          %2465 = vmatprep.subr.bf16.mxu0 0
          %2466 = vmatpush2.bf16.msra.mxu0 %v2127
          %2467 = vmatprep.subr.bf16.mxu0 0
          %2468 = vmatpush2.bf16.msra.mxu0 %v2126
          %2469 = vmatprep.subr.bf16.mxu0 0
          %2470 = vmatpush2.bf16.msra.mxu0 %v2125
          %2471 = vmatprep.subr.bf16.mxu0 0
          %2472 = vmatpush2.bf16.msra.mxu0 %v2124
          %2473 = vmatprep.subr.bf16.mxu0 0
          %2474 = vmatpush2.bf16.msra.mxu0 %v2123
          %2475 = vmatprep.mubr.bf16.mxu0 %v1530
          %2476 = vmatmul.mubr.bf16.gmra.mxu0 %v1529
          %v2477 = vpop.f32.mrf.mxu0
          %v2478 = vadd.f32 %v2438, %v2477
          %v2479 = vpop.f32.mrf.mxu0
          %v2480 = vpop.f32.mrf.mxu0
          %v2481 = vpop.f32.mrf.mxu0
          %2482 = vdwg.mxu0
          %2483 = vmatprep.subr.bf16.mxu0 0
          %2484 = vmatpush1.bf16.msra.mxu0 %v2138
          %2485 = vmatprep.subr.bf16.mxu0 0
          %2486 = vmatpush1.bf16.msra.mxu0 %v2137
          %2487 = vmatprep.subr.bf16.mxu0 0
          %2488 = vmatpush1.bf16.msra.mxu0 %v2136
          %2489 = vmatprep.subr.bf16.mxu0 0
          %2490 = vmatpush1.bf16.msra.mxu0 %v2135
          %2491 = vmatprep.subr.bf16.mxu0 0
          %2492 = vmatpush1.bf16.msra.mxu0 %v2134
          %2493 = vmatprep.subr.bf16.mxu0 0
          %2494 = vmatpush1.bf16.msra.mxu0 %v2133
          %2495 = vmatprep.subr.bf16.mxu0 0
          %2496 = vmatpush1.bf16.msra.mxu0 %v2132
          %2497 = vmatprep.subr.bf16.mxu0 0
          %2498 = vmatpush1.bf16.msra.mxu0 %v2131
          %2499 = vmatprep.subr.bf16.mxu0 0
          %2500 = vmatpush2.bf16.msra.mxu0 %v2146
          %2501 = vmatprep.subr.bf16.mxu0 0
          %2502 = vmatpush2.bf16.msra.mxu0 %v2145
          %2503 = vmatprep.subr.bf16.mxu0 0
          %2504 = vmatpush2.bf16.msra.mxu0 %v2144
          %2505 = vmatprep.subr.bf16.mxu0 0
          %2506 = vmatpush2.bf16.msra.mxu0 %v2143
          %2507 = vmatprep.subr.bf16.mxu0 0
          %2508 = vmatpush2.bf16.msra.mxu0 %v2142
          %2509 = vmatprep.subr.bf16.mxu0 0
          %2510 = vmatpush2.bf16.msra.mxu0 %v2141
          %2511 = vmatprep.subr.bf16.mxu0 0
          %2512 = vmatpush2.bf16.msra.mxu0 %v2140
          %2513 = vmatprep.subr.bf16.mxu0 0
          %2514 = vmatpush2.bf16.msra.mxu0 %v2139
          %2515 = vmatprep.mubr.bf16.mxu0 %v1532
          %2516 = vmatmul.mubr.bf16.gmra.mxu0 %v1531
          %v2517 = vpop.f32.mrf.mxu0
          %v2518 = vadd.f32 %v2478, %v2517
          %v2519 = vpop.f32.mrf.mxu0
          %v2520 = vpop.f32.mrf.mxu0
          %v2521 = vpop.f32.mrf.mxu0
          %2522 = vdwg.mxu0
          %2523 = vmatprep.subr.bf16.mxu0 0
          %2524 = vmatpush1.bf16.msra.mxu0 %v2154
          %2525 = vmatprep.subr.bf16.mxu0 0
          %2526 = vmatpush1.bf16.msra.mxu0 %v2153
          %2527 = vmatprep.subr.bf16.mxu0 0
          %2528 = vmatpush1.bf16.msra.mxu0 %v2152
          %2529 = vmatprep.subr.bf16.mxu0 0
          %2530 = vmatpush1.bf16.msra.mxu0 %v2151
          %2531 = vmatprep.subr.bf16.mxu0 0
          %2532 = vmatpush1.bf16.msra.mxu0 %v2150
          %2533 = vmatprep.subr.bf16.mxu0 0
          %2534 = vmatpush1.bf16.msra.mxu0 %v2149
          %2535 = vmatprep.subr.bf16.mxu0 0
          %2536 = vmatpush1.bf16.msra.mxu0 %v2148
          %2537 = vmatprep.subr.bf16.mxu0 0
          %2538 = vmatpush1.bf16.msra.mxu0 %v2147
          %2539 = vmatprep.subr.bf16.mxu0 0
          %2540 = vmatpush2.bf16.msra.mxu0 %v2162
          %2541 = vmatprep.subr.bf16.mxu0 0
          %2542 = vmatpush2.bf16.msra.mxu0 %v2161
          %2543 = vmatprep.subr.bf16.mxu0 0
          %2544 = vmatpush2.bf16.msra.mxu0 %v2160
          %2545 = vmatprep.subr.bf16.mxu0 0
          %2546 = vmatpush2.bf16.msra.mxu0 %v2159
          %2547 = vmatprep.subr.bf16.mxu0 0
          %2548 = vmatpush2.bf16.msra.mxu0 %v2158
          %2549 = vmatprep.subr.bf16.mxu0 0
          %2550 = vmatpush2.bf16.msra.mxu0 %v2157
          %2551 = vmatprep.subr.bf16.mxu0 0
          %2552 = vmatpush2.bf16.msra.mxu0 %v2156
          %2553 = vmatprep.subr.bf16.mxu0 0
          %2554 = vmatpush2.bf16.msra.mxu0 %v2155
          %2555 = vmatprep.mubr.bf16.mxu0 %v1534
          %2556 = vmatmul.mubr.bf16.gmra.mxu0 %v1533
          %v2557 = vpop.f32.mrf.mxu0
          %v2558 = vadd.f32 %v2518, %v2557
          %v2559 = vpop.f32.mrf.mxu0
          %v2560 = vpop.f32.mrf.mxu0
          %v2561 = vpop.f32.mrf.mxu0
          %2562 = vdwg.mxu0
          %2563 = vmatprep.subr.bf16.mxu0 0
          %2564 = vmatpush1.bf16.msra.mxu0 %v2170
          %2565 = vmatprep.subr.bf16.mxu0 0
          %2566 = vmatpush1.bf16.msra.mxu0 %v2169
          %2567 = vmatprep.subr.bf16.mxu0 0
          %2568 = vmatpush1.bf16.msra.mxu0 %v2168
          %2569 = vmatprep.subr.bf16.mxu0 0
          %2570 = vmatpush1.bf16.msra.mxu0 %v2167
          %2571 = vmatprep.subr.bf16.mxu0 0
          %2572 = vmatpush1.bf16.msra.mxu0 %v2166
          %2573 = vmatprep.subr.bf16.mxu0 0
          %2574 = vmatpush1.bf16.msra.mxu0 %v2165
          %2575 = vmatprep.subr.bf16.mxu0 0
          %2576 = vmatpush1.bf16.msra.mxu0 %v2164
          %2577 = vmatprep.subr.bf16.mxu0 0
          %2578 = vmatpush1.bf16.msra.mxu0 %v2163
          %2579 = vmatprep.subr.bf16.mxu0 0
          %2580 = vmatpush2.bf16.msra.mxu0 %v2178
          %2581 = vmatprep.subr.bf16.mxu0 0
          %2582 = vmatpush2.bf16.msra.mxu0 %v2177
          %2583 = vmatprep.subr.bf16.mxu0 0
          %2584 = vmatpush2.bf16.msra.mxu0 %v2176
          %2585 = vmatprep.subr.bf16.mxu0 0
          %2586 = vmatpush2.bf16.msra.mxu0 %v2175
          %2587 = vmatprep.subr.bf16.mxu0 0
          %2588 = vmatpush2.bf16.msra.mxu0 %v2174
          %2589 = vmatprep.subr.bf16.mxu0 0
          %2590 = vmatpush2.bf16.msra.mxu0 %v2173
          %2591 = vmatprep.subr.bf16.mxu0 0
          %2592 = vmatpush2.bf16.msra.mxu0 %v2172
          %2593 = vmatprep.subr.bf16.mxu0 0
          %2594 = vmatpush2.bf16.msra.mxu0 %v2171
          %2595 = vmatprep.mubr.bf16.mxu0 %v1536
          %2596 = vmatmul.mubr.bf16.gmra.mxu0 %v1535
          %v2597 = vpop.f32.mrf.mxu0
          %v2598 = vadd.f32 %v2558, %v2597
          %v2599 = vpop.f32.mrf.mxu0
          %v2600 = vpop.f32.mrf.mxu0
          %v2601 = vpop.f32.mrf.mxu0
          %2602 = vdwg.mxu0
          %2603 = vmatprep.subr.bf16.mxu0 0
          %2604 = vmatpush1.bf16.msra.mxu0 %v2186
          %2605 = vmatprep.subr.bf16.mxu0 0
          %2606 = vmatpush1.bf16.msra.mxu0 %v2185
          %2607 = vmatprep.subr.bf16.mxu0 0
          %2608 = vmatpush1.bf16.msra.mxu0 %v2184
          %2609 = vmatprep.subr.bf16.mxu0 0
          %2610 = vmatpush1.bf16.msra.mxu0 %v2183
          %2611 = vmatprep.subr.bf16.mxu0 0
          %2612 = vmatpush1.bf16.msra.mxu0 %v2182
          %2613 = vmatprep.subr.bf16.mxu0 0
          %2614 = vmatpush1.bf16.msra.mxu0 %v2181
          %2615 = vmatprep.subr.bf16.mxu0 0
          %2616 = vmatpush1.bf16.msra.mxu0 %v2180
          %2617 = vmatprep.subr.bf16.mxu0 0
          %2618 = vmatpush1.bf16.msra.mxu0 %v2179
          %2619 = vmatprep.subr.bf16.mxu0 0
          %2620 = vmatpush2.bf16.msra.mxu0 %v2194
          %2621 = vmatprep.subr.bf16.mxu0 0
          %2622 = vmatpush2.bf16.msra.mxu0 %v2193
          %2623 = vmatprep.subr.bf16.mxu0 0
          %2624 = vmatpush2.bf16.msra.mxu0 %v2192
          %2625 = vmatprep.subr.bf16.mxu0 0
          %2626 = vmatpush2.bf16.msra.mxu0 %v2191
          %2627 = vmatprep.subr.bf16.mxu0 0
          %2628 = vmatpush2.bf16.msra.mxu0 %v2190
          %2629 = vmatprep.subr.bf16.mxu0 0
          %2630 = vmatpush2.bf16.msra.mxu0 %v2189
          %2631 = vmatprep.subr.bf16.mxu0 0
          %2632 = vmatpush2.bf16.msra.mxu0 %v2188
          %2633 = vmatprep.subr.bf16.mxu0 0
          %2634 = vmatpush2.bf16.msra.mxu0 %v2187
          %2635 = vmatprep.mubr.bf16.mxu0 %v1538
          %2636 = vmatmul.mubr.bf16.gmra.mxu0 %v1537
          %v2637 = vpop.f32.mrf.mxu0
          %v2638 = vadd.f32 %v2598, %v2637
          %v2639 = vpop.f32.mrf.mxu0
          %v2640 = vpop.f32.mrf.mxu0
          %v2641 = vpop.f32.mrf.mxu0
          %2642 = vdwg.mxu0
          %v2643 = vpack.c.bf16 %v734, %v734
          %v2644 = vpack.c.bf16 %v736, %v736
          %v2645 = vpack.c.bf16 %v805, %v805
          %v2646 = vpack.c.bf16 %v807, %v807
          %v2647 = vpack.c.bf16 %v876, %v876
          %v2648 = vpack.c.bf16 %v878, %v878
          %v2649 = vpack.c.bf16 %v947, %v947
          %v2650 = vpack.c.bf16 %v949, %v949
          %v2651 = vpack.c.bf16 %v1018, %v1018
          %v2652 = vpack.c.bf16 %v1020, %v1020
          %v2653 = vpack.c.bf16 %v1089, %v1089
          %v2654 = vpack.c.bf16 %v1091, %v1091
          %v2655 = vpack.c.bf16 %v1160, %v1160
          %v2656 = vpack.c.bf16 %v1162, %v1162
          %v2657 = vpack.c.bf16 %v1231, %v1231
          %v2658 = vpack.c.bf16 %v1233, %v1233
          %v2659 = vld [vmem:[#allocation8] sm:$0xf]
          %v2660 = vld [vmem:[#allocation8 + $0x4] sm:$0xf]
          %v2661 = vld [vmem:[#allocation8 + $0x8] sm:$0xf]
          %v2662 = vld [vmem:[#allocation8 + $0xc] sm:$0xf]
          %v2663 = vld [vmem:[#allocation8 + $0x10] sm:$0xf]
          %v2664 = vld [vmem:[#allocation8 + $0x14] sm:$0xf]
          %v2665 = vld [vmem:[#allocation8 + $0x18] sm:$0xf]
          %v2666 = vld [vmem:[#allocation8 + $0x1c] sm:$0xf]
          %v2667 = vld [vmem:[#allocation8 + $0x20] sm:$0xf]
          %v2668 = vld [vmem:[#allocation8 + $0x24] sm:$0xf]
          %v2669 = vld [vmem:[#allocation8 + $0x28] sm:$0xf]
          %v2670 = vld [vmem:[#allocation8 + $0x2c] sm:$0xf]
          %v2671 = vld [vmem:[#allocation8 + $0x30] sm:$0xf]
          %v2672 = vld [vmem:[#allocation8 + $0x34] sm:$0xf]
          %v2673 = vld [vmem:[#allocation8 + $0x38] sm:$0xf]
          %v2674 = vld [vmem:[#allocation8 + $0x3c] sm:$0xf]
          %v2675 = vld [vmem:[#allocation8 + $0x40] sm:$0xf]
          %v2676 = vld [vmem:[#allocation8 + $0x44] sm:$0xf]
          %v2677 = vld [vmem:[#allocation8 + $0x48] sm:$0xf]
          %v2678 = vld [vmem:[#allocation8 + $0x4c] sm:$0xf]
          %v2679 = vld [vmem:[#allocation8 + $0x50] sm:$0xf]
          %v2680 = vld [vmem:[#allocation8 + $0x54] sm:$0xf]
          %v2681 = vld [vmem:[#allocation8 + $0x58] sm:$0xf]
          %v2682 = vld [vmem:[#allocation8 + $0x5c] sm:$0xf]
          %v2683 = vld [vmem:[#allocation8 + $0x60] sm:$0xf]
          %v2684 = vld [vmem:[#allocation8 + $0x64] sm:$0xf]
          %v2685 = vld [vmem:[#allocation8 + $0x68] sm:$0xf]
          %v2686 = vld [vmem:[#allocation8 + $0x6c] sm:$0xf]
          %v2687 = vld [vmem:[#allocation8 + $0x70] sm:$0xf]
          %v2688 = vld [vmem:[#allocation8 + $0x74] sm:$0xf]
          %v2689 = vld [vmem:[#allocation8 + $0x78] sm:$0xf]
          %v2690 = vld [vmem:[#allocation8 + $0x7c] sm:$0xf]
          %v2691 = vld [vmem:[#allocation8 + $0x80] sm:$0xf]
          %v2692 = vld [vmem:[#allocation8 + $0x84] sm:$0xf]
          %v2693 = vld [vmem:[#allocation8 + $0x88] sm:$0xf]
          %v2694 = vld [vmem:[#allocation8 + $0x8c] sm:$0xf]
          %v2695 = vld [vmem:[#allocation8 + $0x90] sm:$0xf]
          %v2696 = vld [vmem:[#allocation8 + $0x94] sm:$0xf]
          %v2697 = vld [vmem:[#allocation8 + $0x98] sm:$0xf]
          %v2698 = vld [vmem:[#allocation8 + $0x9c] sm:$0xf]
          %v2699 = vld [vmem:[#allocation8 + $0xa0] sm:$0xf]
          %v2700 = vld [vmem:[#allocation8 + $0xa4] sm:$0xf]
          %v2701 = vld [vmem:[#allocation8 + $0xa8] sm:$0xf]
          %v2702 = vld [vmem:[#allocation8 + $0xac] sm:$0xf]
          %v2703 = vld [vmem:[#allocation8 + $0xb0] sm:$0xf]
          %v2704 = vld [vmem:[#allocation8 + $0xb4] sm:$0xf]
          %v2705 = vld [vmem:[#allocation8 + $0xb8] sm:$0xf]
          %v2706 = vld [vmem:[#allocation8 + $0xbc] sm:$0xf]
          %v2707 = vld [vmem:[#allocation8 + $0xc0] sm:$0xf]
          %v2708 = vld [vmem:[#allocation8 + $0xc4] sm:$0xf]
          %v2709 = vld [vmem:[#allocation8 + $0xc8] sm:$0xf]
          %v2710 = vld [vmem:[#allocation8 + $0xcc] sm:$0xf]
          %v2711 = vld [vmem:[#allocation8 + $0xd0] sm:$0xf]
          %v2712 = vld [vmem:[#allocation8 + $0xd4] sm:$0xf]
          %v2713 = vld [vmem:[#allocation8 + $0xd8] sm:$0xf]
          %v2714 = vld [vmem:[#allocation8 + $0xdc] sm:$0xf]
          %v2715 = vld [vmem:[#allocation8 + $0xe0] sm:$0xf]
          %v2716 = vld [vmem:[#allocation8 + $0xe4] sm:$0xf]
          %v2717 = vld [vmem:[#allocation8 + $0xe8] sm:$0xf]
          %v2718 = vld [vmem:[#allocation8 + $0xec] sm:$0xf]
          %v2719 = vld [vmem:[#allocation8 + $0xf0] sm:$0xf]
          %v2720 = vld [vmem:[#allocation8 + $0xf4] sm:$0xf]
          %v2721 = vld [vmem:[#allocation8 + $0xf8] sm:$0xf]
          %v2722 = vld [vmem:[#allocation8 + $0xfc] sm:$0xf]
          %v2723 = vld [vmem:[#allocation8 + $0x100] sm:$0xf]
          %v2724 = vld [vmem:[#allocation8 + $0x104] sm:$0xf]
          %v2725 = vld [vmem:[#allocation8 + $0x108] sm:$0xf]
          %v2726 = vld [vmem:[#allocation8 + $0x10c] sm:$0xf]
          %v2727 = vld [vmem:[#allocation8 + $0x110] sm:$0xf]
          %v2728 = vld [vmem:[#allocation8 + $0x114] sm:$0xf]
          %v2729 = vld [vmem:[#allocation8 + $0x118] sm:$0xf]
          %v2730 = vld [vmem:[#allocation8 + $0x11c] sm:$0xf]
          %v2731 = vld [vmem:[#allocation8 + $0x120] sm:$0xf]
          %v2732 = vld [vmem:[#allocation8 + $0x124] sm:$0xf]
          %v2733 = vld [vmem:[#allocation8 + $0x128] sm:$0xf]
          %v2734 = vld [vmem:[#allocation8 + $0x12c] sm:$0xf]
          %v2735 = vld [vmem:[#allocation8 + $0x130] sm:$0xf]
          %v2736 = vld [vmem:[#allocation8 + $0x134] sm:$0xf]
          %v2737 = vld [vmem:[#allocation8 + $0x138] sm:$0xf]
          %v2738 = vld [vmem:[#allocation8 + $0x13c] sm:$0xf]
          %v2739 = vld [vmem:[#allocation8 + $0x140] sm:$0xf]
          %v2740 = vld [vmem:[#allocation8 + $0x144] sm:$0xf]
          %v2741 = vld [vmem:[#allocation8 + $0x148] sm:$0xf]
          %v2742 = vld [vmem:[#allocation8 + $0x14c] sm:$0xf]
          %v2743 = vld [vmem:[#allocation8 + $0x150] sm:$0xf]
          %v2744 = vld [vmem:[#allocation8 + $0x154] sm:$0xf]
          %v2745 = vld [vmem:[#allocation8 + $0x158] sm:$0xf]
          %v2746 = vld [vmem:[#allocation8 + $0x15c] sm:$0xf]
          %v2747 = vld [vmem:[#allocation8 + $0x160] sm:$0xf]
          %v2748 = vld [vmem:[#allocation8 + $0x164] sm:$0xf]
          %v2749 = vld [vmem:[#allocation8 + $0x168] sm:$0xf]
          %v2750 = vld [vmem:[#allocation8 + $0x16c] sm:$0xf]
          %v2751 = vld [vmem:[#allocation8 + $0x170] sm:$0xf]
          %v2752 = vld [vmem:[#allocation8 + $0x174] sm:$0xf]
          %v2753 = vld [vmem:[#allocation8 + $0x178] sm:$0xf]
          %v2754 = vld [vmem:[#allocation8 + $0x17c] sm:$0xf]
          %v2755 = vld [vmem:[#allocation8 + $0x180] sm:$0xf]
          %v2756 = vld [vmem:[#allocation8 + $0x184] sm:$0xf]
          %v2757 = vld [vmem:[#allocation8 + $0x188] sm:$0xf]
          %v2758 = vld [vmem:[#allocation8 + $0x18c] sm:$0xf]
          %v2759 = vld [vmem:[#allocation8 + $0x190] sm:$0xf]
          %v2760 = vld [vmem:[#allocation8 + $0x194] sm:$0xf]
          %v2761 = vld [vmem:[#allocation8 + $0x198] sm:$0xf]
          %v2762 = vld [vmem:[#allocation8 + $0x19c] sm:$0xf]
          %v2763 = vld [vmem:[#allocation8 + $0x1a0] sm:$0xf]
          %v2764 = vld [vmem:[#allocation8 + $0x1a4] sm:$0xf]
          %v2765 = vld [vmem:[#allocation8 + $0x1a8] sm:$0xf]
          %v2766 = vld [vmem:[#allocation8 + $0x1ac] sm:$0xf]
          %v2767 = vld [vmem:[#allocation8 + $0x1b0] sm:$0xf]
          %v2768 = vld [vmem:[#allocation8 + $0x1b4] sm:$0xf]
          %v2769 = vld [vmem:[#allocation8 + $0x1b8] sm:$0xf]
          %v2770 = vld [vmem:[#allocation8 + $0x1bc] sm:$0xf]
          %v2771 = vld [vmem:[#allocation8 + $0x1c0] sm:$0xf]
          %v2772 = vld [vmem:[#allocation8 + $0x1c4] sm:$0xf]
          %v2773 = vld [vmem:[#allocation8 + $0x1c8] sm:$0xf]
          %v2774 = vld [vmem:[#allocation8 + $0x1cc] sm:$0xf]
          %v2775 = vld [vmem:[#allocation8 + $0x1d0] sm:$0xf]
          %v2776 = vld [vmem:[#allocation8 + $0x1d4] sm:$0xf]
          %v2777 = vld [vmem:[#allocation8 + $0x1d8] sm:$0xf]
          %v2778 = vld [vmem:[#allocation8 + $0x1dc] sm:$0xf]
          %v2779 = vld [vmem:[#allocation8 + $0x1e0] sm:$0xf]
          %v2780 = vld [vmem:[#allocation8 + $0x1e4] sm:$0xf]
          %v2781 = vld [vmem:[#allocation8 + $0x1e8] sm:$0xf]
          %v2782 = vld [vmem:[#allocation8 + $0x1ec] sm:$0xf]
          %v2783 = vld [vmem:[#allocation8 + $0x1f0] sm:$0xf]
          %v2784 = vld [vmem:[#allocation8 + $0x1f4] sm:$0xf]
          %v2785 = vld [vmem:[#allocation8 + $0x1f8] sm:$0xf]
          %v2786 = vld [vmem:[#allocation8 + $0x1fc] sm:$0xf]
          %v2787 = vld [vmem:[#allocation8 + $0x200] sm:$0xf]
          %v2788 = vld [vmem:[#allocation8 + $0x204] sm:$0xf]
          %v2789 = vld [vmem:[#allocation8 + $0x208] sm:$0xf]
          %v2790 = vld [vmem:[#allocation8 + $0x20c] sm:$0xf]
          %v2791 = vld [vmem:[#allocation8 + $0x210] sm:$0xf]
          %v2792 = vld [vmem:[#allocation8 + $0x214] sm:$0xf]
          %v2793 = vld [vmem:[#allocation8 + $0x218] sm:$0xf]
          %v2794 = vld [vmem:[#allocation8 + $0x21c] sm:$0xf]
          %v2795 = vld [vmem:[#allocation8 + $0x220] sm:$0xf]
          %v2796 = vld [vmem:[#allocation8 + $0x224] sm:$0xf]
          %v2797 = vld [vmem:[#allocation8 + $0x228] sm:$0xf]
          %v2798 = vld [vmem:[#allocation8 + $0x22c] sm:$0xf]
          %v2799 = vld [vmem:[#allocation8 + $0x230] sm:$0xf]
          %v2800 = vld [vmem:[#allocation8 + $0x234] sm:$0xf]
          %v2801 = vld [vmem:[#allocation8 + $0x238] sm:$0xf]
          %v2802 = vld [vmem:[#allocation8 + $0x23c] sm:$0xf]
          %v2803 = vld [vmem:[#allocation8 + $0x240] sm:$0xf]
          %v2804 = vld [vmem:[#allocation8 + $0x244] sm:$0xf]
          %v2805 = vld [vmem:[#allocation8 + $0x248] sm:$0xf]
          %v2806 = vld [vmem:[#allocation8 + $0x24c] sm:$0xf]
          %v2807 = vld [vmem:[#allocation8 + $0x250] sm:$0xf]
          %v2808 = vld [vmem:[#allocation8 + $0x254] sm:$0xf]
          %v2809 = vld [vmem:[#allocation8 + $0x258] sm:$0xf]
          %v2810 = vld [vmem:[#allocation8 + $0x25c] sm:$0xf]
          %v2811 = vld [vmem:[#allocation8 + $0x260] sm:$0xf]
          %v2812 = vld [vmem:[#allocation8 + $0x264] sm:$0xf]
          %v2813 = vld [vmem:[#allocation8 + $0x268] sm:$0xf]
          %v2814 = vld [vmem:[#allocation8 + $0x26c] sm:$0xf]
          %v2815 = vld [vmem:[#allocation8 + $0x270] sm:$0xf]
          %v2816 = vld [vmem:[#allocation8 + $0x274] sm:$0xf]
          %v2817 = vld [vmem:[#allocation8 + $0x278] sm:$0xf]
          %v2818 = vld [vmem:[#allocation8 + $0x27c] sm:$0xf]
          %v2819 = vld [vmem:[#allocation8 + $0x280] sm:$0xf]
          %v2820 = vld [vmem:[#allocation8 + $0x284] sm:$0xf]
          %v2821 = vld [vmem:[#allocation8 + $0x288] sm:$0xf]
          %v2822 = vld [vmem:[#allocation8 + $0x28c] sm:$0xf]
          %v2823 = vld [vmem:[#allocation8 + $0x290] sm:$0xf]
          %v2824 = vld [vmem:[#allocation8 + $0x294] sm:$0xf]
          %v2825 = vld [vmem:[#allocation8 + $0x298] sm:$0xf]
          %v2826 = vld [vmem:[#allocation8 + $0x29c] sm:$0xf]
          %v2827 = vld [vmem:[#allocation8 + $0x2a0] sm:$0xf]
          %v2828 = vld [vmem:[#allocation8 + $0x2a4] sm:$0xf]
          %v2829 = vld [vmem:[#allocation8 + $0x2a8] sm:$0xf]
          %v2830 = vld [vmem:[#allocation8 + $0x2ac] sm:$0xf]
          %v2831 = vld [vmem:[#allocation8 + $0x2b0] sm:$0xf]
          %v2832 = vld [vmem:[#allocation8 + $0x2b4] sm:$0xf]
          %v2833 = vld [vmem:[#allocation8 + $0x2b8] sm:$0xf]
          %v2834 = vld [vmem:[#allocation8 + $0x2bc] sm:$0xf]
          %v2835 = vld [vmem:[#allocation8 + $0x2c0] sm:$0xf]
          %v2836 = vld [vmem:[#allocation8 + $0x2c4] sm:$0xf]
          %v2837 = vld [vmem:[#allocation8 + $0x2c8] sm:$0xf]
          %v2838 = vld [vmem:[#allocation8 + $0x2cc] sm:$0xf]
          %v2839 = vld [vmem:[#allocation8 + $0x2d0] sm:$0xf]
          %v2840 = vld [vmem:[#allocation8 + $0x2d4] sm:$0xf]
          %v2841 = vld [vmem:[#allocation8 + $0x2d8] sm:$0xf]
          %v2842 = vld [vmem:[#allocation8 + $0x2dc] sm:$0xf]
          %v2843 = vld [vmem:[#allocation8 + $0x2e0] sm:$0xf]
          %v2844 = vld [vmem:[#allocation8 + $0x2e4] sm:$0xf]
          %v2845 = vld [vmem:[#allocation8 + $0x2e8] sm:$0xf]
          %v2846 = vld [vmem:[#allocation8 + $0x2ec] sm:$0xf]
          %v2847 = vld [vmem:[#allocation8 + $0x2f0] sm:$0xf]
          %v2848 = vld [vmem:[#allocation8 + $0x2f4] sm:$0xf]
          %v2849 = vld [vmem:[#allocation8 + $0x2f8] sm:$0xf]
          %v2850 = vld [vmem:[#allocation8 + $0x2fc] sm:$0xf]
          %v2851 = vld [vmem:[#allocation8 + $0x300] sm:$0xf]
          %v2852 = vld [vmem:[#allocation8 + $0x304] sm:$0xf]
          %v2853 = vld [vmem:[#allocation8 + $0x308] sm:$0xf]
          %v2854 = vld [vmem:[#allocation8 + $0x30c] sm:$0xf]
          %v2855 = vld [vmem:[#allocation8 + $0x310] sm:$0xf]
          %v2856 = vld [vmem:[#allocation8 + $0x314] sm:$0xf]
          %v2857 = vld [vmem:[#allocation8 + $0x318] sm:$0xf]
          %v2858 = vld [vmem:[#allocation8 + $0x31c] sm:$0xf]
          %v2859 = vld [vmem:[#allocation8 + $0x320] sm:$0xf]
          %v2860 = vld [vmem:[#allocation8 + $0x324] sm:$0xf]
          %v2861 = vld [vmem:[#allocation8 + $0x328] sm:$0xf]
          %v2862 = vld [vmem:[#allocation8 + $0x32c] sm:$0xf]
          %v2863 = vld [vmem:[#allocation8 + $0x330] sm:$0xf]
          %v2864 = vld [vmem:[#allocation8 + $0x334] sm:$0xf]
          %v2865 = vld [vmem:[#allocation8 + $0x338] sm:$0xf]
          %v2866 = vld [vmem:[#allocation8 + $0x33c] sm:$0xf]
          %v2867 = vld [vmem:[#allocation8 + $0x340] sm:$0xf]
          %v2868 = vld [vmem:[#allocation8 + $0x344] sm:$0xf]
          %v2869 = vld [vmem:[#allocation8 + $0x348] sm:$0xf]
          %v2870 = vld [vmem:[#allocation8 + $0x34c] sm:$0xf]
          %v2871 = vld [vmem:[#allocation8 + $0x350] sm:$0xf]
          %v2872 = vld [vmem:[#allocation8 + $0x354] sm:$0xf]
          %v2873 = vld [vmem:[#allocation8 + $0x358] sm:$0xf]
          %v2874 = vld [vmem:[#allocation8 + $0x35c] sm:$0xf]
          %v2875 = vld [vmem:[#allocation8 + $0x360] sm:$0xf]
          %v2876 = vld [vmem:[#allocation8 + $0x364] sm:$0xf]
          %v2877 = vld [vmem:[#allocation8 + $0x368] sm:$0xf]
          %v2878 = vld [vmem:[#allocation8 + $0x36c] sm:$0xf]
          %v2879 = vld [vmem:[#allocation8 + $0x370] sm:$0xf]
          %v2880 = vld [vmem:[#allocation8 + $0x374] sm:$0xf]
          %v2881 = vld [vmem:[#allocation8 + $0x378] sm:$0xf]
          %v2882 = vld [vmem:[#allocation8 + $0x37c] sm:$0xf]
          %v2883 = vld [vmem:[#allocation8 + $0x380] sm:$0xf]
          %v2884 = vld [vmem:[#allocation8 + $0x384] sm:$0xf]
          %v2885 = vld [vmem:[#allocation8 + $0x388] sm:$0xf]
          %v2886 = vld [vmem:[#allocation8 + $0x38c] sm:$0xf]
          %v2887 = vld [vmem:[#allocation8 + $0x390] sm:$0xf]
          %v2888 = vld [vmem:[#allocation8 + $0x394] sm:$0xf]
          %v2889 = vld [vmem:[#allocation8 + $0x398] sm:$0xf]
          %v2890 = vld [vmem:[#allocation8 + $0x39c] sm:$0xf]
          %v2891 = vld [vmem:[#allocation8 + $0x3a0] sm:$0xf]
          %v2892 = vld [vmem:[#allocation8 + $0x3a4] sm:$0xf]
          %v2893 = vld [vmem:[#allocation8 + $0x3a8] sm:$0xf]
          %v2894 = vld [vmem:[#allocation8 + $0x3ac] sm:$0xf]
          %v2895 = vld [vmem:[#allocation8 + $0x3b0] sm:$0xf]
          %v2896 = vld [vmem:[#allocation8 + $0x3b4] sm:$0xf]
          %v2897 = vld [vmem:[#allocation8 + $0x3b8] sm:$0xf]
          %v2898 = vld [vmem:[#allocation8 + $0x3bc] sm:$0xf]
          %v2899 = vld [vmem:[#allocation8 + $0x3c0] sm:$0xf]
          %v2900 = vld [vmem:[#allocation8 + $0x3c4] sm:$0xf]
          %v2901 = vld [vmem:[#allocation8 + $0x3c8] sm:$0xf]
          %v2902 = vld [vmem:[#allocation8 + $0x3cc] sm:$0xf]
          %v2903 = vld [vmem:[#allocation8 + $0x3d0] sm:$0xf]
          %v2904 = vld [vmem:[#allocation8 + $0x3d4] sm:$0xf]
          %v2905 = vld [vmem:[#allocation8 + $0x3d8] sm:$0xf]
          %v2906 = vld [vmem:[#allocation8 + $0x3dc] sm:$0xf]
          %v2907 = vld [vmem:[#allocation8 + $0x3e0] sm:$0xf]
          %v2908 = vld [vmem:[#allocation8 + $0x3e4] sm:$0xf]
          %v2909 = vld [vmem:[#allocation8 + $0x3e8] sm:$0xf]
          %v2910 = vld [vmem:[#allocation8 + $0x3ec] sm:$0xf]
          %v2911 = vld [vmem:[#allocation8 + $0x3f0] sm:$0xf]
          %v2912 = vld [vmem:[#allocation8 + $0x3f4] sm:$0xf]
          %v2913 = vld [vmem:[#allocation8 + $0x3f8] sm:$0xf]
          %v2914 = vld [vmem:[#allocation8 + $0x3fc] sm:$0xf]
          %v3171 = vunpack.c.l.b16 %v2659
          %v3172 = vunpack.c.l.b16 %v2660
          %v3173 = vunpack.c.l.b16 %v2661
          %v3174 = vunpack.c.l.b16 %v2662
          %v3175 = vunpack.c.l.b16 %v2663
          %v3176 = vunpack.c.l.b16 %v2664
          %v3177 = vunpack.c.l.b16 %v2665
          %v3178 = vunpack.c.l.b16 %v2666
          %v3179 = vunpack.c.l.b16 %v2667
          %v3180 = vunpack.c.l.b16 %v2668
          %v3181 = vunpack.c.l.b16 %v2669
          %v3182 = vunpack.c.l.b16 %v2670
          %v3183 = vunpack.c.l.b16 %v2671
          %v3184 = vunpack.c.l.b16 %v2672
          %v3185 = vunpack.c.l.b16 %v2673
          %v3186 = vunpack.c.l.b16 %v2674
          %v3187 = vunpack.c.l.b16 %v2675
          %v3188 = vunpack.c.l.b16 %v2676
          %v3189 = vunpack.c.l.b16 %v2677
          %v3190 = vunpack.c.l.b16 %v2678
          %v3191 = vunpack.c.l.b16 %v2679
          %v3192 = vunpack.c.l.b16 %v2680
          %v3193 = vunpack.c.l.b16 %v2681
          %v3194 = vunpack.c.l.b16 %v2682
          %v3195 = vunpack.c.l.b16 %v2683
          %v3196 = vunpack.c.l.b16 %v2684
          %v3197 = vunpack.c.l.b16 %v2685
          %v3198 = vunpack.c.l.b16 %v2686
          %v3199 = vunpack.c.l.b16 %v2687
          %v3200 = vunpack.c.l.b16 %v2688
          %v3201 = vunpack.c.l.b16 %v2689
          %v3202 = vunpack.c.l.b16 %v2690
          %v3203 = vunpack.c.l.b16 %v2691
          %v3204 = vunpack.c.l.b16 %v2692
          %v3205 = vunpack.c.l.b16 %v2693
          %v3206 = vunpack.c.l.b16 %v2694
          %v3207 = vunpack.c.l.b16 %v2695
          %v3208 = vunpack.c.l.b16 %v2696
          %v3209 = vunpack.c.l.b16 %v2697
          %v3210 = vunpack.c.l.b16 %v2698
          %v3211 = vunpack.c.l.b16 %v2699
          %v3212 = vunpack.c.l.b16 %v2700
          %v3213 = vunpack.c.l.b16 %v2701
          %v3214 = vunpack.c.l.b16 %v2702
          %v3215 = vunpack.c.l.b16 %v2703
          %v3216 = vunpack.c.l.b16 %v2704
          %v3217 = vunpack.c.l.b16 %v2705
          %v3218 = vunpack.c.l.b16 %v2706
          %v3219 = vunpack.c.l.b16 %v2707
          %v3220 = vunpack.c.l.b16 %v2708
          %v3221 = vunpack.c.l.b16 %v2709
          %v3222 = vunpack.c.l.b16 %v2710
          %v3223 = vunpack.c.l.b16 %v2711
          %v3224 = vunpack.c.l.b16 %v2712
          %v3225 = vunpack.c.l.b16 %v2713
          %v3226 = vunpack.c.l.b16 %v2714
          %v3227 = vunpack.c.l.b16 %v2715
          %v3228 = vunpack.c.l.b16 %v2716
          %v3229 = vunpack.c.l.b16 %v2717
          %v3230 = vunpack.c.l.b16 %v2718
          %v3231 = vunpack.c.l.b16 %v2719
          %v3232 = vunpack.c.l.b16 %v2720
          %v3233 = vunpack.c.l.b16 %v2721
          %v3234 = vunpack.c.l.b16 %v2722
          %v3235 = vunpack.c.l.b16 %v2723
          %v3236 = vunpack.c.l.b16 %v2724
          %v3237 = vunpack.c.l.b16 %v2725
          %v3238 = vunpack.c.l.b16 %v2726
          %v3239 = vunpack.c.l.b16 %v2727
          %v3240 = vunpack.c.l.b16 %v2728
          %v3241 = vunpack.c.l.b16 %v2729
          %v3242 = vunpack.c.l.b16 %v2730
          %v3243 = vunpack.c.l.b16 %v2731
          %v3244 = vunpack.c.l.b16 %v2732
          %v3245 = vunpack.c.l.b16 %v2733
          %v3246 = vunpack.c.l.b16 %v2734
          %v3247 = vunpack.c.l.b16 %v2735
          %v3248 = vunpack.c.l.b16 %v2736
          %v3249 = vunpack.c.l.b16 %v2737
          %v3250 = vunpack.c.l.b16 %v2738
          %v3251 = vunpack.c.l.b16 %v2739
          %v3252 = vunpack.c.l.b16 %v2740
          %v3253 = vunpack.c.l.b16 %v2741
          %v3254 = vunpack.c.l.b16 %v2742
          %v3255 = vunpack.c.l.b16 %v2743
          %v3256 = vunpack.c.l.b16 %v2744
          %v3257 = vunpack.c.l.b16 %v2745
          %v3258 = vunpack.c.l.b16 %v2746
          %v3259 = vunpack.c.l.b16 %v2747
          %v3260 = vunpack.c.l.b16 %v2748
          %v3261 = vunpack.c.l.b16 %v2749
          %v3262 = vunpack.c.l.b16 %v2750
          %v3263 = vunpack.c.l.b16 %v2751
          %v3264 = vunpack.c.l.b16 %v2752
          %v3265 = vunpack.c.l.b16 %v2753
          %v3266 = vunpack.c.l.b16 %v2754
          %v3267 = vunpack.c.l.b16 %v2755
          %v3268 = vunpack.c.l.b16 %v2756
          %v3269 = vunpack.c.l.b16 %v2757
          %v3270 = vunpack.c.l.b16 %v2758
          %v3271 = vunpack.c.l.b16 %v2759
          %v3272 = vunpack.c.l.b16 %v2760
          %v3273 = vunpack.c.l.b16 %v2761
          %v3274 = vunpack.c.l.b16 %v2762
          %v3275 = vunpack.c.l.b16 %v2763
          %v3276 = vunpack.c.l.b16 %v2764
          %v3277 = vunpack.c.l.b16 %v2765
          %v3278 = vunpack.c.l.b16 %v2766
          %v3279 = vunpack.c.l.b16 %v2767
          %v3280 = vunpack.c.l.b16 %v2768
          %v3281 = vunpack.c.l.b16 %v2769
          %v3282 = vunpack.c.l.b16 %v2770
          %v3283 = vunpack.c.l.b16 %v2771
          %v3284 = vunpack.c.l.b16 %v2772
          %v3285 = vunpack.c.l.b16 %v2773
          %v3286 = vunpack.c.l.b16 %v2774
          %v3287 = vunpack.c.l.b16 %v2775
          %v3288 = vunpack.c.l.b16 %v2776
          %v3289 = vunpack.c.l.b16 %v2777
          %v3290 = vunpack.c.l.b16 %v2778
          %v3291 = vunpack.c.l.b16 %v2779
          %v3292 = vunpack.c.l.b16 %v2780
          %v3293 = vunpack.c.l.b16 %v2781
          %v3294 = vunpack.c.l.b16 %v2782
          %v3295 = vunpack.c.l.b16 %v2783
          %v3296 = vunpack.c.l.b16 %v2784
          %v3297 = vunpack.c.l.b16 %v2785
          %v3298 = vunpack.c.l.b16 %v2786
          %v3299 = vunpack.c.l.b16 %v2787
          %v3300 = vunpack.c.l.b16 %v2788
          %v3301 = vunpack.c.l.b16 %v2789
          %v3302 = vunpack.c.l.b16 %v2790
          %v3303 = vunpack.c.l.b16 %v2791
          %v3304 = vunpack.c.l.b16 %v2792
          %v3305 = vunpack.c.l.b16 %v2793
          %v3306 = vunpack.c.l.b16 %v2794
          %v3307 = vunpack.c.l.b16 %v2795
          %v3308 = vunpack.c.l.b16 %v2796
          %v3309 = vunpack.c.l.b16 %v2797
          %v3310 = vunpack.c.l.b16 %v2798
          %v3311 = vunpack.c.l.b16 %v2799
          %v3312 = vunpack.c.l.b16 %v2800
          %v3313 = vunpack.c.l.b16 %v2801
          %v3314 = vunpack.c.l.b16 %v2802
          %v3315 = vunpack.c.l.b16 %v2803
          %v3316 = vunpack.c.l.b16 %v2804
          %v3317 = vunpack.c.l.b16 %v2805
          %v3318 = vunpack.c.l.b16 %v2806
          %v3319 = vunpack.c.l.b16 %v2807
          %v3320 = vunpack.c.l.b16 %v2808
          %v3321 = vunpack.c.l.b16 %v2809
          %v3322 = vunpack.c.l.b16 %v2810
          %v3323 = vunpack.c.l.b16 %v2811
          %v3324 = vunpack.c.l.b16 %v2812
          %v3325 = vunpack.c.l.b16 %v2813
          %v3326 = vunpack.c.l.b16 %v2814
          %v3327 = vunpack.c.l.b16 %v2815
          %v3328 = vunpack.c.l.b16 %v2816
          %v3329 = vunpack.c.l.b16 %v2817
          %v3330 = vunpack.c.l.b16 %v2818
          %v3331 = vunpack.c.l.b16 %v2819
          %v3332 = vunpack.c.l.b16 %v2820
          %v3333 = vunpack.c.l.b16 %v2821
          %v3334 = vunpack.c.l.b16 %v2822
          %v3335 = vunpack.c.l.b16 %v2823
          %v3336 = vunpack.c.l.b16 %v2824
          %v3337 = vunpack.c.l.b16 %v2825
          %v3338 = vunpack.c.l.b16 %v2826
          %v3339 = vunpack.c.l.b16 %v2827
          %v3340 = vunpack.c.l.b16 %v2828
          %v3341 = vunpack.c.l.b16 %v2829
          %v3342 = vunpack.c.l.b16 %v2830
          %v3343 = vunpack.c.l.b16 %v2831
          %v3344 = vunpack.c.l.b16 %v2832
          %v3345 = vunpack.c.l.b16 %v2833
          %v3346 = vunpack.c.l.b16 %v2834
          %v3347 = vunpack.c.l.b16 %v2835
          %v3348 = vunpack.c.l.b16 %v2836
          %v3349 = vunpack.c.l.b16 %v2837
          %v3350 = vunpack.c.l.b16 %v2838
          %v3351 = vunpack.c.l.b16 %v2839
          %v3352 = vunpack.c.l.b16 %v2840
          %v3353 = vunpack.c.l.b16 %v2841
          %v3354 = vunpack.c.l.b16 %v2842
          %v3355 = vunpack.c.l.b16 %v2843
          %v3356 = vunpack.c.l.b16 %v2844
          %v3357 = vunpack.c.l.b16 %v2845
          %v3358 = vunpack.c.l.b16 %v2846
          %v3359 = vunpack.c.l.b16 %v2847
          %v3360 = vunpack.c.l.b16 %v2848
          %v3361 = vunpack.c.l.b16 %v2849
          %v3362 = vunpack.c.l.b16 %v2850
          %v3363 = vunpack.c.l.b16 %v2851
          %v3364 = vunpack.c.l.b16 %v2852
          %v3365 = vunpack.c.l.b16 %v2853
          %v3366 = vunpack.c.l.b16 %v2854
          %v3367 = vunpack.c.l.b16 %v2855
          %v3368 = vunpack.c.l.b16 %v2856
          %v3369 = vunpack.c.l.b16 %v2857
          %v3370 = vunpack.c.l.b16 %v2858
          %v3371 = vunpack.c.l.b16 %v2859
          %v3372 = vunpack.c.l.b16 %v2860
          %v3373 = vunpack.c.l.b16 %v2861
          %v3374 = vunpack.c.l.b16 %v2862
          %v3375 = vunpack.c.l.b16 %v2863
          %v3376 = vunpack.c.l.b16 %v2864
          %v3377 = vunpack.c.l.b16 %v2865
          %v3378 = vunpack.c.l.b16 %v2866
          %v3379 = vunpack.c.l.b16 %v2867
          %v3380 = vunpack.c.l.b16 %v2868
          %v3381 = vunpack.c.l.b16 %v2869
          %v3382 = vunpack.c.l.b16 %v2870
          %v3383 = vunpack.c.l.b16 %v2871
          %v3384 = vunpack.c.l.b16 %v2872
          %v3385 = vunpack.c.l.b16 %v2873
          %v3386 = vunpack.c.l.b16 %v2874
          %v3387 = vunpack.c.l.b16 %v2875
          %v3388 = vunpack.c.l.b16 %v2876
          %v3389 = vunpack.c.l.b16 %v2877
          %v3390 = vunpack.c.l.b16 %v2878
          %v3391 = vunpack.c.l.b16 %v2879
          %v3392 = vunpack.c.l.b16 %v2880
          %v3393 = vunpack.c.l.b16 %v2881
          %v3394 = vunpack.c.l.b16 %v2882
          %v3395 = vunpack.c.l.b16 %v2883
          %v3396 = vunpack.c.l.b16 %v2884
          %v3397 = vunpack.c.l.b16 %v2885
          %v3398 = vunpack.c.l.b16 %v2886
          %v3399 = vunpack.c.l.b16 %v2887
          %v3400 = vunpack.c.l.b16 %v2888
          %v3401 = vunpack.c.l.b16 %v2889
          %v3402 = vunpack.c.l.b16 %v2890
          %v3403 = vunpack.c.l.b16 %v2891
          %v3404 = vunpack.c.l.b16 %v2892
          %v3405 = vunpack.c.l.b16 %v2893
          %v3406 = vunpack.c.l.b16 %v2894
          %v3407 = vunpack.c.l.b16 %v2895
          %v3408 = vunpack.c.l.b16 %v2896
          %v3409 = vunpack.c.l.b16 %v2897
          %v3410 = vunpack.c.l.b16 %v2898
          %v3411 = vunpack.c.l.b16 %v2899
          %v3412 = vunpack.c.l.b16 %v2900
          %v3413 = vunpack.c.l.b16 %v2901
          %v3414 = vunpack.c.l.b16 %v2902
          %v3415 = vunpack.c.l.b16 %v2903
          %v3416 = vunpack.c.l.b16 %v2904
          %v3417 = vunpack.c.l.b16 %v2905
          %v3418 = vunpack.c.l.b16 %v2906
          %v3419 = vunpack.c.l.b16 %v2907
          %v3420 = vunpack.c.l.b16 %v2908
          %v3421 = vunpack.c.l.b16 %v2909
          %v3422 = vunpack.c.l.b16 %v2910
          %v3423 = vunpack.c.l.b16 %v2911
          %v3424 = vunpack.c.l.b16 %v2912
          %v3425 = vunpack.c.l.b16 %v2913
          %v3426 = vunpack.c.l.b16 %v2914
          %v3427 = vpack.c.b16 %v3172, %v3171
          %v3428 = vpack.c.b16 %v3174, %v3173
          %v3429 = vpack.c.b16 %v3176, %v3175
          %v3430 = vpack.c.b16 %v3178, %v3177
          %v3431 = vpack.c.b16 %v3180, %v3179
          %v3432 = vpack.c.b16 %v3182, %v3181
          %v3433 = vpack.c.b16 %v3184, %v3183
          %v3434 = vpack.c.b16 %v3186, %v3185
          %v3435 = vpack.c.b16 %v3188, %v3187
          %v3436 = vpack.c.b16 %v3190, %v3189
          %v3437 = vpack.c.b16 %v3192, %v3191
          %v3438 = vpack.c.b16 %v3194, %v3193
          %v3439 = vpack.c.b16 %v3196, %v3195
          %v3440 = vpack.c.b16 %v3198, %v3197
          %v3441 = vpack.c.b16 %v3200, %v3199
          %v3442 = vpack.c.b16 %v3202, %v3201
          %v3443 = vpack.c.b16 %v3204, %v3203
          %v3444 = vpack.c.b16 %v3206, %v3205
          %v3445 = vpack.c.b16 %v3208, %v3207
          %v3446 = vpack.c.b16 %v3210, %v3209
          %v3447 = vpack.c.b16 %v3212, %v3211
          %v3448 = vpack.c.b16 %v3214, %v3213
          %v3449 = vpack.c.b16 %v3216, %v3215
          %v3450 = vpack.c.b16 %v3218, %v3217
          %v3451 = vpack.c.b16 %v3220, %v3219
          %v3452 = vpack.c.b16 %v3222, %v3221
          %v3453 = vpack.c.b16 %v3224, %v3223
          %v3454 = vpack.c.b16 %v3226, %v3225
          %v3455 = vpack.c.b16 %v3228, %v3227
          %v3456 = vpack.c.b16 %v3230, %v3229
          %v3457 = vpack.c.b16 %v3232, %v3231
          %v3458 = vpack.c.b16 %v3234, %v3233
          %v3459 = vpack.c.b16 %v3236, %v3235
          %v3460 = vpack.c.b16 %v3238, %v3237
          %v3461 = vpack.c.b16 %v3240, %v3239
          %v3462 = vpack.c.b16 %v3242, %v3241
          %v3463 = vpack.c.b16 %v3244, %v3243
          %v3464 = vpack.c.b16 %v3246, %v3245
          %v3465 = vpack.c.b16 %v3248, %v3247
          %v3466 = vpack.c.b16 %v3250, %v3249
          %v3467 = vpack.c.b16 %v3252, %v3251
          %v3468 = vpack.c.b16 %v3254, %v3253
          %v3469 = vpack.c.b16 %v3256, %v3255
          %v3470 = vpack.c.b16 %v3258, %v3257
          %v3471 = vpack.c.b16 %v3260, %v3259
          %v3472 = vpack.c.b16 %v3262, %v3261
          %v3473 = vpack.c.b16 %v3264, %v3263
          %v3474 = vpack.c.b16 %v3266, %v3265
          %v3475 = vpack.c.b16 %v3268, %v3267
          %v3476 = vpack.c.b16 %v3270, %v3269
          %v3477 = vpack.c.b16 %v3272, %v3271
          %v3478 = vpack.c.b16 %v3274, %v3273
          %v3479 = vpack.c.b16 %v3276, %v3275
          %v3480 = vpack.c.b16 %v3278, %v3277
          %v3481 = vpack.c.b16 %v3280, %v3279
          %v3482 = vpack.c.b16 %v3282, %v3281
          %v3483 = vpack.c.b16 %v3284, %v3283
          %v3484 = vpack.c.b16 %v3286, %v3285
          %v3485 = vpack.c.b16 %v3288, %v3287
          %v3486 = vpack.c.b16 %v3290, %v3289
          %v3487 = vpack.c.b16 %v3292, %v3291
          %v3488 = vpack.c.b16 %v3294, %v3293
          %v3489 = vpack.c.b16 %v3296, %v3295
          %v3490 = vpack.c.b16 %v3298, %v3297
          %v3491 = vpack.c.b16 %v3300, %v3299
          %v3492 = vpack.c.b16 %v3302, %v3301
          %v3493 = vpack.c.b16 %v3304, %v3303
          %v3494 = vpack.c.b16 %v3306, %v3305
          %v3495 = vpack.c.b16 %v3308, %v3307
          %v3496 = vpack.c.b16 %v3310, %v3309
          %v3497 = vpack.c.b16 %v3312, %v3311
          %v3498 = vpack.c.b16 %v3314, %v3313
          %v3499 = vpack.c.b16 %v3316, %v3315
          %v3500 = vpack.c.b16 %v3318, %v3317
          %v3501 = vpack.c.b16 %v3320, %v3319
          %v3502 = vpack.c.b16 %v3322, %v3321
          %v3503 = vpack.c.b16 %v3324, %v3323
          %v3504 = vpack.c.b16 %v3326, %v3325
          %v3505 = vpack.c.b16 %v3328, %v3327
          %v3506 = vpack.c.b16 %v3330, %v3329
          %v3507 = vpack.c.b16 %v3332, %v3331
          %v3508 = vpack.c.b16 %v3334, %v3333
          %v3509 = vpack.c.b16 %v3336, %v3335
          %v3510 = vpack.c.b16 %v3338, %v3337
          %v3511 = vpack.c.b16 %v3340, %v3339
          %v3512 = vpack.c.b16 %v3342, %v3341
          %v3513 = vpack.c.b16 %v3344, %v3343
          %v3514 = vpack.c.b16 %v3346, %v3345
          %v3515 = vpack.c.b16 %v3348, %v3347
          %v3516 = vpack.c.b16 %v3350, %v3349
          %v3517 = vpack.c.b16 %v3352, %v3351
          %v3518 = vpack.c.b16 %v3354, %v3353
          %v3519 = vpack.c.b16 %v3356, %v3355
          %v3520 = vpack.c.b16 %v3358, %v3357
          %v3521 = vpack.c.b16 %v3360, %v3359
          %v3522 = vpack.c.b16 %v3362, %v3361
          %v3523 = vpack.c.b16 %v3364, %v3363
          %v3524 = vpack.c.b16 %v3366, %v3365
          %v3525 = vpack.c.b16 %v3368, %v3367
          %v3526 = vpack.c.b16 %v3370, %v3369
          %v3527 = vpack.c.b16 %v3372, %v3371
          %v3528 = vpack.c.b16 %v3374, %v3373
          %v3529 = vpack.c.b16 %v3376, %v3375
          %v3530 = vpack.c.b16 %v3378, %v3377
          %v3531 = vpack.c.b16 %v3380, %v3379
          %v3532 = vpack.c.b16 %v3382, %v3381
          %v3533 = vpack.c.b16 %v3384, %v3383
          %v3534 = vpack.c.b16 %v3386, %v3385
          %v3535 = vpack.c.b16 %v3388, %v3387
          %v3536 = vpack.c.b16 %v3390, %v3389
          %v3537 = vpack.c.b16 %v3392, %v3391
          %v3538 = vpack.c.b16 %v3394, %v3393
          %v3539 = vpack.c.b16 %v3396, %v3395
          %v3540 = vpack.c.b16 %v3398, %v3397
          %v3541 = vpack.c.b16 %v3400, %v3399
          %v3542 = vpack.c.b16 %v3402, %v3401
          %v3543 = vpack.c.b16 %v3404, %v3403
          %v3544 = vpack.c.b16 %v3406, %v3405
          %v3545 = vpack.c.b16 %v3408, %v3407
          %v3546 = vpack.c.b16 %v3410, %v3409
          %v3547 = vpack.c.b16 %v3412, %v3411
          %v3548 = vpack.c.b16 %v3414, %v3413
          %v3549 = vpack.c.b16 %v3416, %v3415
          %v3550 = vpack.c.b16 %v3418, %v3417
          %v3551 = vpack.c.b16 %v3420, %v3419
          %v3552 = vpack.c.b16 %v3422, %v3421
          %v3553 = vpack.c.b16 %v3424, %v3423
          %v3554 = vpack.c.b16 %v3426, %v3425
          %3683 = vmatprep.subr.bf16.mxu0 0
          %3684 = vmatpush1.bf16.msra.mxu0 %v3434
          %3685 = vmatprep.subr.bf16.mxu0 0
          %3686 = vmatpush1.bf16.msra.mxu0 %v3433
          %3687 = vmatprep.subr.bf16.mxu0 0
          %3688 = vmatpush1.bf16.msra.mxu0 %v3432
          %3689 = vmatprep.subr.bf16.mxu0 0
          %3690 = vmatpush1.bf16.msra.mxu0 %v3431
          %3691 = vmatprep.subr.bf16.mxu0 0
          %3692 = vmatpush1.bf16.msra.mxu0 %v3430
          %3693 = vmatprep.subr.bf16.mxu0 0
          %3694 = vmatpush1.bf16.msra.mxu0 %v3429
          %3695 = vmatprep.subr.bf16.mxu0 0
          %3696 = vmatpush1.bf16.msra.mxu0 %v3428
          %3697 = vmatprep.subr.bf16.mxu0 0
          %3698 = vmatpush1.bf16.msra.mxu0 %v3427
          %3699 = vmatprep.subr.bf16.mxu0 0
          %3700 = vmatpush2.bf16.msra.mxu0 %v3442
          %3701 = vmatprep.subr.bf16.mxu0 0
          %3702 = vmatpush2.bf16.msra.mxu0 %v3441
          %3703 = vmatprep.subr.bf16.mxu0 0
          %3704 = vmatpush2.bf16.msra.mxu0 %v3440
          %3705 = vmatprep.subr.bf16.mxu0 0
          %3706 = vmatpush2.bf16.msra.mxu0 %v3439
          %3707 = vmatprep.subr.bf16.mxu0 0
          %3708 = vmatpush2.bf16.msra.mxu0 %v3438
          %3709 = vmatprep.subr.bf16.mxu0 0
          %3710 = vmatpush2.bf16.msra.mxu0 %v3437
          %3711 = vmatprep.subr.bf16.mxu0 0
          %3712 = vmatpush2.bf16.msra.mxu0 %v3436
          %3713 = vmatprep.subr.bf16.mxu0 0
          %3714 = vmatpush2.bf16.msra.mxu0 %v3435
          %3715 = vmatprep.mubr.bf16.mxu0 %v2644
          %3716 = vmatmul.mubr.bf16.gmra.mxu0 %v2643
          %v3717 = vpop.f32.mrf.mxu0
          %v3718 = vadd.f32 0.0, %v3717
          %v3719 = vpop.f32.mrf.mxu0
          %v3720 = vpop.f32.mrf.mxu0
          %v3721 = vpop.f32.mrf.mxu0
          %3722 = vdwg.mxu0
          %3723 = vmatprep.subr.bf16.mxu0 0
          %3724 = vmatpush1.bf16.msra.mxu0 %v3450
          %3725 = vmatprep.subr.bf16.mxu0 0
          %3726 = vmatpush1.bf16.msra.mxu0 %v3449
          %3727 = vmatprep.subr.bf16.mxu0 0
          %3728 = vmatpush1.bf16.msra.mxu0 %v3448
          %3729 = vmatprep.subr.bf16.mxu0 0
          %3730 = vmatpush1.bf16.msra.mxu0 %v3447
          %3731 = vmatprep.subr.bf16.mxu0 0
          %3732 = vmatpush1.bf16.msra.mxu0 %v3446
          %3733 = vmatprep.subr.bf16.mxu0 0
          %3734 = vmatpush1.bf16.msra.mxu0 %v3445
          %3735 = vmatprep.subr.bf16.mxu0 0
          %3736 = vmatpush1.bf16.msra.mxu0 %v3444
          %3737 = vmatprep.subr.bf16.mxu0 0
          %3738 = vmatpush1.bf16.msra.mxu0 %v3443
          %3739 = vmatprep.subr.bf16.mxu0 0
          %3740 = vmatpush2.bf16.msra.mxu0 %v3458
          %3741 = vmatprep.subr.bf16.mxu0 0
          %3742 = vmatpush2.bf16.msra.mxu0 %v3457
          %3743 = vmatprep.subr.bf16.mxu0 0
          %3744 = vmatpush2.bf16.msra.mxu0 %v3456
          %3745 = vmatprep.subr.bf16.mxu0 0
          %3746 = vmatpush2.bf16.msra.mxu0 %v3455
          %3747 = vmatprep.subr.bf16.mxu0 0
          %3748 = vmatpush2.bf16.msra.mxu0 %v3454
          %3749 = vmatprep.subr.bf16.mxu0 0
          %3750 = vmatpush2.bf16.msra.mxu0 %v3453
          %3751 = vmatprep.subr.bf16.mxu0 0
          %3752 = vmatpush2.bf16.msra.mxu0 %v3452
          %3753 = vmatprep.subr.bf16.mxu0 0
          %3754 = vmatpush2.bf16.msra.mxu0 %v3451
          %3755 = vmatprep.mubr.bf16.mxu0 %v2646
          %3756 = vmatmul.mubr.bf16.gmra.mxu0 %v2645
          %v3757 = vpop.f32.mrf.mxu0
          %v3758 = vadd.f32 %v3718, %v3757
          %v3759 = vpop.f32.mrf.mxu0
          %v3760 = vpop.f32.mrf.mxu0
          %v3761 = vpop.f32.mrf.mxu0
          %3762 = vdwg.mxu0
          %3763 = vmatprep.subr.bf16.mxu0 0
          %3764 = vmatpush1.bf16.msra.mxu0 %v3466
          %3765 = vmatprep.subr.bf16.mxu0 0
          %3766 = vmatpush1.bf16.msra.mxu0 %v3465
          %3767 = vmatprep.subr.bf16.mxu0 0
          %3768 = vmatpush1.bf16.msra.mxu0 %v3464
          %3769 = vmatprep.subr.bf16.mxu0 0
          %3770 = vmatpush1.bf16.msra.mxu0 %v3463
          %3771 = vmatprep.subr.bf16.mxu0 0
          %3772 = vmatpush1.bf16.msra.mxu0 %v3462
          %3773 = vmatprep.subr.bf16.mxu0 0
          %3774 = vmatpush1.bf16.msra.mxu0 %v3461
          %3775 = vmatprep.subr.bf16.mxu0 0
          %3776 = vmatpush1.bf16.msra.mxu0 %v3460
          %3777 = vmatprep.subr.bf16.mxu0 0
          %3778 = vmatpush1.bf16.msra.mxu0 %v3459
          %3779 = vmatprep.subr.bf16.mxu0 0
          %3780 = vmatpush2.bf16.msra.mxu0 %v3474
          %3781 = vmatprep.subr.bf16.mxu0 0
          %3782 = vmatpush2.bf16.msra.mxu0 %v3473
          %3783 = vmatprep.subr.bf16.mxu0 0
          %3784 = vmatpush2.bf16.msra.mxu0 %v3472
          %3785 = vmatprep.subr.bf16.mxu0 0
          %3786 = vmatpush2.bf16.msra.mxu0 %v3471
          %3787 = vmatprep.subr.bf16.mxu0 0
          %3788 = vmatpush2.bf16.msra.mxu0 %v3470
          %3789 = vmatprep.subr.bf16.mxu0 0
          %3790 = vmatpush2.bf16.msra.mxu0 %v3469
          %3791 = vmatprep.subr.bf16.mxu0 0
          %3792 = vmatpush2.bf16.msra.mxu0 %v3468
          %3793 = vmatprep.subr.bf16.mxu0 0
          %3794 = vmatpush2.bf16.msra.mxu0 %v3467
          %3795 = vmatprep.mubr.bf16.mxu0 %v2648
          %3796 = vmatmul.mubr.bf16.gmra.mxu0 %v2647
          %v3797 = vpop.f32.mrf.mxu0
          %v3798 = vadd.f32 %v3758, %v3797
          %v3799 = vpop.f32.mrf.mxu0
          %v3800 = vpop.f32.mrf.mxu0
          %v3801 = vpop.f32.mrf.mxu0
          %3802 = vdwg.mxu0
          %3803 = vmatprep.subr.bf16.mxu0 0
          %3804 = vmatpush1.bf16.msra.mxu0 %v3482
          %3805 = vmatprep.subr.bf16.mxu0 0
          %3806 = vmatpush1.bf16.msra.mxu0 %v3481
          %3807 = vmatprep.subr.bf16.mxu0 0
          %3808 = vmatpush1.bf16.msra.mxu0 %v3480
          %3809 = vmatprep.subr.bf16.mxu0 0
          %3810 = vmatpush1.bf16.msra.mxu0 %v3479
          %3811 = vmatprep.subr.bf16.mxu0 0
          %3812 = vmatpush1.bf16.msra.mxu0 %v3478
          %3813 = vmatprep.subr.bf16.mxu0 0
          %3814 = vmatpush1.bf16.msra.mxu0 %v3477
          %3815 = vmatprep.subr.bf16.mxu0 0
          %3816 = vmatpush1.bf16.msra.mxu0 %v3476
          %3817 = vmatprep.subr.bf16.mxu0 0
          %3818 = vmatpush1.bf16.msra.mxu0 %v3475
          %3819 = vmatprep.subr.bf16.mxu0 0
          %3820 = vmatpush2.bf16.msra.mxu0 %v3490
          %3821 = vmatprep.subr.bf16.mxu0 0
          %3822 = vmatpush2.bf16.msra.mxu0 %v3489
          %3823 = vmatprep.subr.bf16.mxu0 0
          %3824 = vmatpush2.bf16.msra.mxu0 %v3488
          %3825 = vmatprep.subr.bf16.mxu0 0
          %3826 = vmatpush2.bf16.msra.mxu0 %v3487
          %3827 = vmatprep.subr.bf16.mxu0 0
          %3828 = vmatpush2.bf16.msra.mxu0 %v3486
          %3829 = vmatprep.subr.bf16.mxu0 0
          %3830 = vmatpush2.bf16.msra.mxu0 %v3485
          %3831 = vmatprep.subr.bf16.mxu0 0
          %3832 = vmatpush2.bf16.msra.mxu0 %v3484
          %3833 = vmatprep.subr.bf16.mxu0 0
          %3834 = vmatpush2.bf16.msra.mxu0 %v3483
          %3835 = vmatprep.mubr.bf16.mxu0 %v2650
          %3836 = vmatmul.mubr.bf16.gmra.mxu0 %v2649
          %v3837 = vpop.f32.mrf.mxu0
          %v3838 = vadd.f32 %v3798, %v3837
          %v3839 = vpop.f32.mrf.mxu0
          %v3840 = vpop.f32.mrf.mxu0
          %v3841 = vpop.f32.mrf.mxu0
          %3842 = vdwg.mxu0
          %3843 = vmatprep.subr.bf16.mxu0 0
          %3844 = vmatpush1.bf16.msra.mxu0 %v3498
          %3845 = vmatprep.subr.bf16.mxu0 0
          %3846 = vmatpush1.bf16.msra.mxu0 %v3497
          %3847 = vmatprep.subr.bf16.mxu0 0
          %3848 = vmatpush1.bf16.msra.mxu0 %v3496
          %3849 = vmatprep.subr.bf16.mxu0 0
          %3850 = vmatpush1.bf16.msra.mxu0 %v3495
          %3851 = vmatprep.subr.bf16.mxu0 0
          %3852 = vmatpush1.bf16.msra.mxu0 %v3494
          %3853 = vmatprep.subr.bf16.mxu0 0
          %3854 = vmatpush1.bf16.msra.mxu0 %v3493
          %3855 = vmatprep.subr.bf16.mxu0 0
          %3856 = vmatpush1.bf16.msra.mxu0 %v3492
          %3857 = vmatprep.subr.bf16.mxu0 0
          %3858 = vmatpush1.bf16.msra.mxu0 %v3491
          %3859 = vmatprep.subr.bf16.mxu0 0
          %3860 = vmatpush2.bf16.msra.mxu0 %v3506
          %3861 = vmatprep.subr.bf16.mxu0 0
          %3862 = vmatpush2.bf16.msra.mxu0 %v3505
          %3863 = vmatprep.subr.bf16.mxu0 0
          %3864 = vmatpush2.bf16.msra.mxu0 %v3504
          %3865 = vmatprep.subr.bf16.mxu0 0
          %3866 = vmatpush2.bf16.msra.mxu0 %v3503
          %3867 = vmatprep.subr.bf16.mxu0 0
          %3868 = vmatpush2.bf16.msra.mxu0 %v3502
          %3869 = vmatprep.subr.bf16.mxu0 0
          %3870 = vmatpush2.bf16.msra.mxu0 %v3501
          %3871 = vmatprep.subr.bf16.mxu0 0
          %3872 = vmatpush2.bf16.msra.mxu0 %v3500
          %3873 = vmatprep.subr.bf16.mxu0 0
          %3874 = vmatpush2.bf16.msra.mxu0 %v3499
          %3875 = vmatprep.mubr.bf16.mxu0 %v2652
          %3876 = vmatmul.mubr.bf16.gmra.mxu0 %v2651
          %v3877 = vpop.f32.mrf.mxu0
          %v3878 = vadd.f32 %v3838, %v3877
          %v3879 = vpop.f32.mrf.mxu0
          %v3880 = vpop.f32.mrf.mxu0
          %v3881 = vpop.f32.mrf.mxu0
          %3882 = vdwg.mxu0
          %3883 = vmatprep.subr.bf16.mxu0 0
          %3884 = vmatpush1.bf16.msra.mxu0 %v3514
          %3885 = vmatprep.subr.bf16.mxu0 0
          %3886 = vmatpush1.bf16.msra.mxu0 %v3513
          %3887 = vmatprep.subr.bf16.mxu0 0
          %3888 = vmatpush1.bf16.msra.mxu0 %v3512
          %3889 = vmatprep.subr.bf16.mxu0 0
          %3890 = vmatpush1.bf16.msra.mxu0 %v3511
          %3891 = vmatprep.subr.bf16.mxu0 0
          %3892 = vmatpush1.bf16.msra.mxu0 %v3510
          %3893 = vmatprep.subr.bf16.mxu0 0
          %3894 = vmatpush1.bf16.msra.mxu0 %v3509
          %3895 = vmatprep.subr.bf16.mxu0 0
          %3896 = vmatpush1.bf16.msra.mxu0 %v3508
          %3897 = vmatprep.subr.bf16.mxu0 0
          %3898 = vmatpush1.bf16.msra.mxu0 %v3507
          %3899 = vmatprep.subr.bf16.mxu0 0
          %3900 = vmatpush2.bf16.msra.mxu0 %v3522
          %3901 = vmatprep.subr.bf16.mxu0 0
          %3902 = vmatpush2.bf16.msra.mxu0 %v3521
          %3903 = vmatprep.subr.bf16.mxu0 0
          %3904 = vmatpush2.bf16.msra.mxu0 %v3520
          %3905 = vmatprep.subr.bf16.mxu0 0
          %3906 = vmatpush2.bf16.msra.mxu0 %v3519
          %3907 = vmatprep.subr.bf16.mxu0 0
          %3908 = vmatpush2.bf16.msra.mxu0 %v3518
          %3909 = vmatprep.subr.bf16.mxu0 0
          %3910 = vmatpush2.bf16.msra.mxu0 %v3517
          %3911 = vmatprep.subr.bf16.mxu0 0
          %3912 = vmatpush2.bf16.msra.mxu0 %v3516
          %3913 = vmatprep.subr.bf16.mxu0 0
          %3914 = vmatpush2.bf16.msra.mxu0 %v3515
          %3915 = vmatprep.mubr.bf16.mxu0 %v2654
          %3916 = vmatmul.mubr.bf16.gmra.mxu0 %v2653
          %v3917 = vpop.f32.mrf.mxu0
          %v3918 = vadd.f32 %v3878, %v3917
          %v3919 = vpop.f32.mrf.mxu0
          %v3920 = vpop.f32.mrf.mxu0
          %v3921 = vpop.f32.mrf.mxu0
          %3922 = vdwg.mxu0
          %3923 = vmatprep.subr.bf16.mxu0 0
          %3924 = vmatpush1.bf16.msra.mxu0 %v3530
          %3925 = vmatprep.subr.bf16.mxu0 0
          %3926 = vmatpush1.bf16.msra.mxu0 %v3529
          %3927 = vmatprep.subr.bf16.mxu0 0
          %3928 = vmatpush1.bf16.msra.mxu0 %v3528
          %3929 = vmatprep.subr.bf16.mxu0 0
          %3930 = vmatpush1.bf16.msra.mxu0 %v3527
          %3931 = vmatprep.subr.bf16.mxu0 0
          %3932 = vmatpush1.bf16.msra.mxu0 %v3526
          %3933 = vmatprep.subr.bf16.mxu0 0
          %3934 = vmatpush1.bf16.msra.mxu0 %v3525
          %3935 = vmatprep.subr.bf16.mxu0 0
          %3936 = vmatpush1.bf16.msra.mxu0 %v3524
          %3937 = vmatprep.subr.bf16.mxu0 0
          %3938 = vmatpush1.bf16.msra.mxu0 %v3523
          %3939 = vmatprep.subr.bf16.mxu0 0
          %3940 = vmatpush2.bf16.msra.mxu0 %v3538
          %3941 = vmatprep.subr.bf16.mxu0 0
          %3942 = vmatpush2.bf16.msra.mxu0 %v3537
          %3943 = vmatprep.subr.bf16.mxu0 0
          %3944 = vmatpush2.bf16.msra.mxu0 %v3536
          %3945 = vmatprep.subr.bf16.mxu0 0
          %3946 = vmatpush2.bf16.msra.mxu0 %v3535
          %3947 = vmatprep.subr.bf16.mxu0 0
          %3948 = vmatpush2.bf16.msra.mxu0 %v3534
          %3949 = vmatprep.subr.bf16.mxu0 0
          %3950 = vmatpush2.bf16.msra.mxu0 %v3533
          %3951 = vmatprep.subr.bf16.mxu0 0
          %3952 = vmatpush2.bf16.msra.mxu0 %v3532
          %3953 = vmatprep.subr.bf16.mxu0 0
          %3954 = vmatpush2.bf16.msra.mxu0 %v3531
          %3955 = vmatprep.mubr.bf16.mxu0 %v2656
          %3956 = vmatmul.mubr.bf16.gmra.mxu0 %v2655
          %v3957 = vpop.f32.mrf.mxu0
          %v3958 = vadd.f32 %v3918, %v3957
          %v3959 = vpop.f32.mrf.mxu0
          %v3960 = vpop.f32.mrf.mxu0
          %v3961 = vpop.f32.mrf.mxu0
          %3962 = vdwg.mxu0
          %3963 = vmatprep.subr.bf16.mxu0 0
          %3964 = vmatpush1.bf16.msra.mxu0 %v3546
          %3965 = vmatprep.subr.bf16.mxu0 0
          %3966 = vmatpush1.bf16.msra.mxu0 %v3545
          %3967 = vmatprep.subr.bf16.mxu0 0
          %3968 = vmatpush1.bf16.msra.mxu0 %v3544
          %3969 = vmatprep.subr.bf16.mxu0 0
          %3970 = vmatpush1.bf16.msra.mxu0 %v3543
          %3971 = vmatprep.subr.bf16.mxu0 0
          %3972 = vmatpush1.bf16.msra.mxu0 %v3542
          %3973 = vmatprep.subr.bf16.mxu0 0
          %3974 = vmatpush1.bf16.msra.mxu0 %v3541
          %3975 = vmatprep.subr.bf16.mxu0 0
          %3976 = vmatpush1.bf16.msra.mxu0 %v3540
          %3977 = vmatprep.subr.bf16.mxu0 0
          %3978 = vmatpush1.bf16.msra.mxu0 %v3539
          %3979 = vmatprep.subr.bf16.mxu0 0
          %3980 = vmatpush2.bf16.msra.mxu0 %v3554
          %3981 = vmatprep.subr.bf16.mxu0 0
          %3982 = vmatpush2.bf16.msra.mxu0 %v3553
          %3983 = vmatprep.subr.bf16.mxu0 0
          %3984 = vmatpush2.bf16.msra.mxu0 %v3552
          %3985 = vmatprep.subr.bf16.mxu0 0
          %3986 = vmatpush2.bf16.msra.mxu0 %v3551
          %3987 = vmatprep.subr.bf16.mxu0 0
          %3988 = vmatpush2.bf16.msra.mxu0 %v3550
          %3989 = vmatprep.subr.bf16.mxu0 0
          %3990 = vmatpush2.bf16.msra.mxu0 %v3549
          %3991 = vmatprep.subr.bf16.mxu0 0
          %3992 = vmatpush2.bf16.msra.mxu0 %v3548
          %3993 = vmatprep.subr.bf16.mxu0 0
          %3994 = vmatpush2.bf16.msra.mxu0 %v3547
          %3995 = vmatprep.mubr.bf16.mxu0 %v2658
          %3996 = vmatmul.mubr.bf16.gmra.mxu0 %v2657
          %v3997 = vpop.f32.mrf.mxu0
          %v3998 = vadd.f32 %v3958, %v3997
          %v3999 = vpop.f32.mrf.mxu0
          %v4000 = vpop.f32.mrf.mxu0
          %v4001 = vpop.f32.mrf.mxu0
          %4002 = vdwg.mxu0
          %v4003 = vld [vmem:[%s6] sm:$0x1]
          %v4004 = vld [vmem:[%s7] sm:$0x1]
          %v4005 = vlaneseq
          %v4006 = vshrl.u32 %v4005, 7
          %v4007 = vsub.s32 0, %v4006
          %v4008 = vrot.slane %v3998, %v4007
          %v4009 = vadd.f32 %v2638, %v4008
          %v4011 = vlaneseq
          %v4012 = vshrl.u32 %v4011, 7
          %v4013 = vsub.s32 0, %v4012
          %v4014 = vrot.slane %v4003, %v4013
          %v4016 = vadd.f32 %v4009, %v4014
          %v4017 = vmax.f32 %v4016, 0.0
          %v4019 = vlaneseq
          %v4020 = vshrl.u32 %v4019, 7
          %v4021 = vsub.s32 0, %v4020
          %v4022 = vrot.slane %v4004, %v4021
          %v4024 = vmul.f32 %v4017, %v4022
          %vm4025 = vcmask 1042432
          %v4026 = vsel %vm4025, %v4024, 0.0
          %4027 = vadd.xlane.f32.xlu0 %v4026
          %v4028 = vpop.xlane.xlu0 %4027
          %v4029 = vld [vmem:[#allocation3] sm:$0x1]
          %v4031 = vlaneseq
          %v4032 = vshrl.u32 %v4031, 7
          %v4033 = vsub.s32 0, %v4032
          %v4034 = vrot.slane %v4029, %v4033
          %v4036 = vadd.f32 %v4028, %v4034
          %v4037 = vlaneseq
          %v4038 = vshrl.u32 %v4037, 7
          %v4039 = vsub.s32 1, %v4038
          %v4040 = vrot.slane %v3998, %v4039
          %v4041 = vadd.f32 %v2638, %v4040
          %v4042 = vadd.f32 %v4041, %v4014
          %v4043 = vmax.f32 %v4042, 0.0
          %v4044 = vmul.f32 %v4043, %v4022
          %v4045 = vsel %vm4025, %v4044, 0.0
          %4046 = vadd.xlane.f32.xlu0 %v4045
          %v4047 = vpop.xlane.xlu0 %4046
          %v4048 = vadd.f32 %v4047, %v4034
          %4050 = vrot.lane.b32.xlu0 %v4048, 1
          %v4051 = vpop.permute.xlu0 %4050
          %vm4053 = vcmask 7168
          %v4054 = vsel %vm4053, %v4036, %v4051
          %v4055 = vsub.f32 0.0, %v4054
          %v4056 = vmul.f32 %v4055, 1.442695
          %v4057 = vpow.pop %v4056
          %v4058 = vadd.f32 %v4057, 1.0
          %v4059 = vrcp.pop %v4058
          %vm4060 = vcmask 10240
          %4061 = vst.msk [vmem:[%s9] sm:$0x7] %vm4060, %v4059
        $region72: #{tpu_custom_call.1} parent=55 // pred_fallthru
          _
        // Predicated region
        $region73: #{tpu_custom_call.1} parent=55 // pred_check
          %p4062 = pneg %p233
        $region74: #{tpu_custom_call.1} parent=55 // pred_check_branch
          %4064 = sbr.rel (%p4062) target = $region76
        $region75: #{tpu_custom_call.1} parent=55 // pred_region
          _
        $region76: #{tpu_custom_call.1} parent=55 // pred_fallthru
          _
        // Predicated region
        $region77: #{tpu_custom_call.1} parent=55 // pred_check
          %p4065 = pneg %p233
        $region78: #{tpu_custom_call.1} parent=55 // pred_check_branch
          %4067 = sbr.rel (%p4065) target = $region80
        $region79: #{tpu_custom_call.1} parent=55 // pred_region
          _
        $region80: #{tpu_custom_call.1} parent=55 // pred_fallthru
          _
      $region56: #{tpu_custom_call.1} parent=5 // pred_fallthru
        _
      %p4068 = scmp.le.s32.totalorder 2, %s21
      // Predicated region
      $region81: #{tpu_custom_call.1} parent=5 // pred_check
        %p4069 = pneg %p4068
      $region82: #{tpu_custom_call.1} parent=5 // pred_check_branch
        %4071 = sbr.rel (%p4069) target = $region84
      $region83: #{tpu_custom_call.1} parent=5 // pred_region
        %s4072 = ssub.s32 %s21, 2
      $region84: #{tpu_custom_call.1} parent=5 // pred_fallthru
        _
    $region6: #{tpu_custom_call.1} parent=1 // loop_footer
      %s25 = sadd.s32 1, %s21
    $region7: #{tpu_custom_call.1} parent=1 // loop_footer_branch
      %20 = sbr.rel target = $region3
    $region8: #{tpu_custom_call.1} parent=1 // loop_exit
      _
    %4073 = vsyncpa [#allocation5], 1
    %s4074 = scalar_lea.sflag [#allocation5], 1
    %4075 = vsyncpa %s4074, 1
    %4076 = vsyncpa [#allocation7], 1

</llo_original>
